<compile_context>
chip_gen: v7x
topology: tpu7x:2x2x1
jax: 0.10.0
libtpu: 0.0.40
codegen_flags: <defaults>
</compile_context>

<pallas_src>
import functools

import jax
import jax.numpy as jnp
import numpy as np
from jax.experimental import pallas as pl
from jax.experimental.pallas import tpu as pltpu


def _gat_kernel(feat_ref, el_ref, er_ref, adj_ref, rst_ref, *maybe_att,
                negative_slope, num_heads, d_out):
    """One grid step == one dst strip; all heads processed (static unroll)."""
    att_ref = maybe_att[0] if maybe_att else None

    # 0/1 adjacency strip (int8) -> boolean edge mask, computed once and reused
    # for every head (no separate f32 adjacency temp).
    mask = adj_ref[...] != 0                                   # (T_DST, N_src)
    neg_inf = jnp.float32(-1e30)

    outs = []
    for h in range(num_heads):                                 # static unroll, H small
        el = el_ref[h:h + 1, :]                                # (1, N_src)  f32
        er = er_ref[:, h:h + 1]                                # (T_DST, 1)  f32

        # e[v,u] = leaky_relu(el[u] + er[v]) at edges, -1e30 elsewhere.
        e = el + er                                            # (T_DST, N_src)
        e = jnp.where(e >= 0, e, negative_slope * e)
        e = jnp.where(mask, e, neg_inf)

        # edge softmax over incoming edges of each dst node (src = lane axis).
        # Precondition: every dst row has >= 1 edge (self loops), else denom==0.
        e_max = jnp.max(e, axis=-1, keepdims=True)             # (T_DST, 1)
        p = jnp.exp(e - e_max)                                 # exactly 0 at non-edges
        denom = jnp.sum(p, axis=-1, keepdims=True)
        a = p * pl.reciprocal(denom, approx=True)              # (T_DST, N_src) f32

        if att_ref is not None:
            att_ref[h] = a.astype(att_ref.dtype)               # lane-dense store

        # rst_h[v,:] = sum_u a[v,u] * feat_src[u,h,:]  -> [T,N]x[N,D] MXU matmul
        # (bf16 operands, f32 accumulation).
        feat_h = feat_ref[:, h * d_out:(h + 1) * d_out]        # (N_src, D_out) bf16
        outs.append(jnp.dot(a.astype(jnp.bfloat16), feat_h,
                            preferred_element_type=jnp.float32))

    # Single lane-fused (T_DST, H*D_out) store per strip.
    rst_ref[...] = jnp.concatenate(outs, axis=-1)


def gat_conv_forward(feat, w, attn_l, attn_r, adj, *, negative_slope=0.2,
                     t_dst=128, att_dtype=jnp.bfloat16, return_att=True):
    """Pallas GATConv forward.

    feat   : (N, D_in) float32
    w      : (H, D_in, D_out)
    attn_l : (H, 1, D_out)
    attn_r : (H, 1, D_out)
    adj    : (N_dst, N_src) 0/1 mask (any numeric dtype), dst-major, with
             self loops (no zero in-degree).
    Returns (rst, att) if return_att else rst:
        rst (N, H, D_out) float32;  att (H, N_dst, N_src) att_dtype.

    t_dst caps VMEM to ~N*t_dst-sized strips; raise to 256 on v6e (256-wide
    MXU, 128 MiB VMEM), keep 128 on v5e, budget against 64 MiB on v7x.
    """
    N, d_in = feat.shape
    H, d_in2, d_out = w.shape
    assert d_in2 == d_in
    assert adj.shape == (N, N)

    t_dst = int(min(t_dst, N))
    assert N % t_dst == 0, "N must be divisible by the dst tile size"
    num_dst_tiles = N // t_dst
    hd = H * d_out

    # ---- hoisted projection + logits (XLA; removes in-kernel compute bubble) ----
    feat_src = jnp.einsum('nd,hdo->nho', feat, w)                     # (N,H,Do) f32
    al = attn_l.reshape(H, d_out)
    ar = attn_r.reshape(H, d_out)
    el = jnp.einsum('nho,ho->hn', feat_src, al).astype(jnp.float32)   # (H, N)
    er = jnp.einsum('nho,ho->nh', feat_src, ar).astype(jnp.float32)   # (N, H)
    feat_flat = feat_src.reshape(N, hd).astype(jnp.bfloat16)          # (N, H*Do)
    adj_i8 = adj.astype(jnp.int8)                                     # 1 B/elem mask

    # ---- outputs ----
    out_shape = [jax.ShapeDtypeStruct((N, hd), jnp.float32)]
    out_specs = [pl.BlockSpec((t_dst, hd), lambda j: (j, 0))]
    if return_att:
        out_shape.append(jax.ShapeDtypeStruct((H, N, N), att_dtype))
        out_specs.append(pl.BlockSpec((H, t_dst, N), lambda j: (0, j, 0)))

    # ---- VMEM budget: double-buffered streamed blocks + resident feat/el ----
    lanes = 128
    att_b = jnp.dtype(att_dtype).itemsize if return_att else 0
    blk_bytes = (2 * t_dst * N * 1                       # adj strip (int8)
                 + 2 * H * t_dst * N * att_b             # att strip out
                 + 2 * t_dst * max(hd, lanes) * 4        # rst strip out (lane-padded)
                 + 2 * t_dst * lanes * 4                 # er strip (lane-padded)
                 + 2 * N * max(hd, lanes) * 2            # feat (bf16, grid-invariant)
                 + 2 * 8 * N * 4)                        # el (sublane-padded)
    vmem_limit = int(min(max(blk_bytes + (4 << 20), 32 << 20), 64 << 20))

    kernel = functools.partial(_gat_kernel, negative_slope=negative_slope,
                               num_heads=H, d_out=d_out)

    result = pl.pallas_call(
        kernel,
        out_shape=tuple(out_shape) if return_att else out_shape[0],
        grid_spec=pltpu.PrefetchScalarGridSpec(
            num_scalar_prefetch=0,
            grid=(num_dst_tiles,),
            in_specs=[
                pl.BlockSpec((N, hd), lambda j: (0, 0)),      # feat_src (invariant)
                pl.BlockSpec((H, N), lambda j: (0, 0)),       # el       (invariant)
                pl.BlockSpec((t_dst, H), lambda j: (j, 0)),   # er strip
                pl.BlockSpec((t_dst, N), lambda j: (j, 0)),   # adj strip (int8)
            ],
            out_specs=out_specs if return_att else out_specs[0],
        ),
        compiler_params=pltpu.CompilerParams(
            # With the projection hoisted there is no cross-iteration scratch,
            # so dst strips are fully independent -> megacore-parallel.
            dimension_semantics=("parallel",),
            vmem_limit_bytes=vmem_limit),
    )(feat_flat, el, er, adj_i8)

    if return_att:
        rst_flat, att = result
    else:
        rst_flat, att = result, None

    rst = rst_flat.reshape(N, H, d_out)    # lane-fused -> module convention (free)
    return (rst, att) if return_att else rst


def gat_conv_reference(feat, w, attn_l, attn_r, adj, *, negative_slope=0.2):
    """Pure-JAX reference with identical dense-graph (dst-major) semantics."""
    adj = adj.astype(jnp.float32)
    feat_src = jnp.einsum('nd,hdo->nho', feat, w)                    # (N, H, D_out)
    al = attn_l[:, 0, :]                                             # (H, D_out)
    ar = attn_r[:, 0, :]
    el = jnp.einsum('uho,ho->hu', feat_src, al)                      # (H, N_src)
    er = jnp.einsum('vho,ho->hv', feat_src, ar)                      # (H, N_dst)
    e = el[:, None, :] + er[:, :, None]                              # (H, N_dst, N_src)
    e = jnp.where(e >= 0, e, negative_slope * e)
    mask = (adj > 0)[None, :, :]
    e = jnp.where(mask, e, -1e30)
    e = e - jnp.max(e, axis=-1, keepdims=True)
    p = jnp.where(mask, jnp.exp(e), 0.0)
    a = p / jnp.sum(p, axis=-1, keepdims=True)                       # (H, N_dst, N_src)
    rst = jnp.einsum('hvu,uho->vho', a, feat_src)                    # (N, H, D_out)
    return rst, a


if __name__ == "__main__":
    N, d_in, d_out, heads = 256, 32, 16, 4
    t_dst = 128
    negative_slope = 0.2
    gain = float(np.sqrt(2.0))  # nn.init.calculate_gain('relu')

    key = jax.random.PRNGKey(0)
    k_feat, k_w, k_al, k_ar, k_adj = jax.random.split(key, 5)

    # deterministic xavier-normal-style init (synthetic, no checkpoint)
    feat = jax.random.normal(k_feat, (N, d_in), dtype=jnp.float32)

    std_fc = gain * np.sqrt(2.0 / (d_in + heads * d_out))
    # fc.weight is (H*D_out, D_in) in torch; stored here per-head (H, D_in, D_out)
    w = (std_fc * jax.random.normal(k_w, (heads, d_in, d_out))).astype(jnp.float32)

    std_attn = gain * np.sqrt(2.0 / (heads * d_out + d_out))
    attn_l = (std_attn * jax.random.normal(k_al, (heads, 1, d_out))).astype(jnp.float32)
    attn_r = (std_attn * jax.random.normal(k_ar, (heads, 1, d_out))).astype(jnp.float32)

    # random directed graph, dst-major (adj[v,u]=1 iff edge u -> v) plus self
    # loops so no dst node has zero in-degree (DGL check equivalent).
    adj_f32 = (jax.random.uniform(k_adj, (N, N)) < 0.15).astype(jnp.float32)
    adj_f32 = jnp.maximum(adj_f32, jnp.eye(N, dtype=jnp.float32))

    rst, att = gat_conv_forward(feat, w, attn_l, attn_r, adj_f32,
                                negative_slope=negative_slope, t_dst=t_dst,
                                att_dtype=jnp.bfloat16, return_att=True)
    jax.block_until_ready((rst, att))

    rst_ref, att_ref = gat_conv_reference(feat, w, attn_l, attn_r, adj_f32,
                                          negative_slope=negative_slope)
    # bf16 MXU operands / bf16 att store / approx reciprocal -> loose tolerance
    np.testing.assert_allclose(np.asarray(rst), np.asarray(rst_ref),
                               atol=2e-2, rtol=2e-2)
    np.testing.assert_allclose(np.asarray(att.astype(jnp.float32)),
                               np.asarray(att_ref), atol=2e-2, rtol=2e-2)

    # TODO(synk): DGL returns sparse edge-list attention (E, H) and applies
    # feat_drop/attn_drop; the dense (H, N_dst, N_src) attention with dropout
    # p=0.0 is the dense-adjacency equivalent implemented here.  residual=False
    # and activation=None (module defaults) are assumed.
    # TODO(synk): a src-tiled online-softmax variant would remove the
    # full-src-extent VMEM requirement for very large graphs (v7x 64 MiB).
    print("KERNEL_OK")
</pallas_src>

<mosaic_0001>
module attributes {stable_mosaic.version = 11 : i64} {
  func.func @_gat_kernel(%arg0: i32, %arg1: memref<256x64xbf16, #tpu.memory_space<vmem>>, %arg2: memref<4x256xf32, #tpu.memory_space<vmem>>, %arg3: memref<128x4xf32, #tpu.memory_space<vmem>>, %arg4: memref<128x256xi8, #tpu.memory_space<vmem>>, %arg5: memref<128x64xf32, #tpu.memory_space<vmem>>, %arg6: memref<4x128x256xbf16, #tpu.memory_space<vmem>>) attributes {dimension_semantics = [#tpu.dimension_semantics<parallel>], iteration_bounds = array<i64: 2>, scalar_prefetch = 0 : i64, scratch_operands = 0 : i64, tpu.core_type = #tpu.core_type<tc>, window_params = [{pipeline_mode = #tpu.pipeline_mode<synchronous>, transform_indices = @transform_0, window_bounds = array<i64: 256, 64>}, {pipeline_mode = #tpu.pipeline_mode<synchronous>, transform_indices = @transform_1, window_bounds = array<i64: 4, 256>}, {transform_indices = @transform_2, window_bounds = array<i64: 128, 4>}, {transform_indices = @transform_3, window_bounds = array<i64: 128, 256>}, {transform_indices = @transform_4, window_bounds = array<i64: 128, 64>}, {transform_indices = @transform_5, window_bounds = array<i64: 4, 128, 256>}]} {
    %c0 = arith.constant 0 : index
    %c0_0 = arith.constant 0 : index
    %0 = vector.load %arg4[%c0, %c0_0] : memref<128x256xi8, #tpu.memory_space<vmem>>, vector<128x256xi8>
    %c0_i8 = arith.constant 0 : i8
    %1 = vector.broadcast %c0_i8 : i8 to vector<128x256xi8>
    %2 = arith.cmpi ne, %0, %1 : vector<128x256xi8>
    %c0_1 = arith.constant 0 : index
    %c0_2 = arith.constant 0 : index
    %3 = vector.load %arg2[%c0_1, %c0_2] : memref<4x256xf32, #tpu.memory_space<vmem>>, vector<1x256xf32>
    %c0_3 = arith.constant 0 : index
    %c0_4 = arith.constant 0 : index
    %4 = vector.load %arg3[%c0_3, %c0_4] : memref<128x4xf32, #tpu.memory_space<vmem>>, vector<128x1xf32>
    %5 = vector.broadcast %3 : vector<1x256xf32> to vector<128x256xf32>
    %6 = vector.broadcast %4 : vector<128x1xf32> to vector<128x256xf32>
    %7 = arith.addf %5, %6 : vector<128x256xf32>
    %cst = arith.constant 0.000000e+00 : f32
    %8 = vector.broadcast %cst : f32 to vector<128x256xf32>
    %9 = arith.cmpf oge, %7, %8 : vector<128x256xf32>
    %cst_5 = arith.constant 2.000000e-01 : f32
    %10 = vector.broadcast %cst_5 : f32 to vector<128x256xf32>
    %11 = arith.mulf %10, %7 : vector<128x256xf32>
    %12 = arith.select %9, %7, %11 : vector<128x256xi1>, vector<128x256xf32>
    %cst_6 = arith.constant -1.000000e+30 : f32
    %13 = vector.broadcast %cst_6 : f32 to vector<128x256xf32>
    %14 = arith.select %2, %12, %13 : vector<128x256xi1>, vector<128x256xf32>
    %cst_7 = arith.constant dense<0xFF800000> : vector<128xf32>
    %15 = vector.multi_reduction <maximumf>, %14, %cst_7 [1] : vector<128x256xf32> to vector<128xf32>
    %16 = vector.shape_cast %15 : vector<128xf32> to vector<128x1xf32>
    %17 = vector.broadcast %16 : vector<128x1xf32> to vector<128x256xf32>
    %18 = arith.subf %14, %17 : vector<128x256xf32>
    %19 = math.exp %18 : vector<128x256xf32>
    %cst_8 = arith.constant dense<0.000000e+00> : vector<128xf32>
    %20 = vector.multi_reduction <add>, %19, %cst_8 [1] : vector<128x256xf32> to vector<128xf32>
    %21 = vector.shape_cast %20 : vector<128xf32> to vector<128x1xf32>
    %22 = tpu.reciprocal %21 {approx = true} : vector<128x1xf32> -> vector<128x1xf32>
    %23 = vector.broadcast %22 : vector<128x1xf32> to vector<128x256xf32>
    %24 = arith.mulf %19, %23 : vector<128x256xf32>
    %25 = arith.truncf %24 : vector<128x256xf32> to vector<128x256xbf16>
    %c0_9 = arith.constant 0 : index
    %c0_10 = arith.constant 0 : index
    %c0_11 = arith.constant 0 : index
    %26 = vector.load %arg6[%c0_9, %c0_10, %c0_11] : memref<4x128x256xbf16, #tpu.memory_space<vmem>>, vector<1x128x256xbf16>
    %27 = vector.shape_cast %26 : vector<1x128x256xbf16> to vector<128x256xbf16>
    %28 = vector.shape_cast %25 : vector<128x256xbf16> to vector<1x128x256xbf16>
    tpu.vector_store %arg6[%c0_9, %c0_10, %c0_11], %28 {strides = array<i32>} : memref<4x128x256xbf16, #tpu.memory_space<vmem>>, vector<1x128x256xbf16>,
    %c0_12 = arith.constant 0 : index
    %c0_13 = arith.constant 0 : index
    %29 = vector.load %arg1[%c0_12, %c0_13] : memref<256x64xbf16, #tpu.memory_space<vmem>>, vector<256x16xbf16>
    %30 = arith.truncf %24 : vector<128x256xf32> to vector<128x256xbf16>
    %cst_14 = arith.constant dense<0.000000e+00> : vector<128x16xf32>
    %31 = tpu.matmul %30, %29, %cst_14 {dimension_numbers = #tpu.dot_dimension_numbers<[1], [0], [0], [1], [0, 0, 1, 1], [], []>} : vector<128x256xbf16>, vector<256x16xbf16>, vector<128x16xf32> -> vector<128x16xf32>
    %c1 = arith.constant 1 : index
    %c0_15 = arith.constant 0 : index
    %32 = vector.load %arg2[%c1, %c0_15] : memref<4x256xf32, #tpu.memory_space<vmem>>, vector<1x256xf32>
    %c0_16 = arith.constant 0 : index
    %c1_17 = arith.constant 1 : index
    %33 = vector.load %arg3[%c0_16, %c1_17] : memref<128x4xf32, #tpu.memory_space<vmem>>, vector<128x1xf32>
    %34 = vector.broadcast %32 : vector<1x256xf32> to vector<128x256xf32>
    %35 = vector.broadcast %33 : vector<128x1xf32> to vector<128x256xf32>
    %36 = arith.addf %34, %35 : vector<128x256xf32>
    %cst_18 = arith.constant 0.000000e+00 : f32
    %37 = vector.broadcast %cst_18 : f32 to vector<128x256xf32>
    %38 = arith.cmpf oge, %36, %37 : vector<128x256xf32>
    %cst_19 = arith.constant 2.000000e-01 : f32
    %39 = vector.broadcast %cst_19 : f32 to vector<128x256xf32>
    %40 = arith.mulf %39, %36 : vector<128x256xf32>
    %41 = arith.select %38, %36, %40 : vector<128x256xi1>, vector<128x256xf32>
    %cst_20 = arith.constant -1.000000e+30 : f32
    %42 = vector.broadcast %cst_20 : f32 to vector<128x256xf32>
    %43 = arith.select %2, %41, %42 : vector<128x256xi1>, vector<128x256xf32>
    %cst_21 = arith.constant dense<0xFF800000> : vector<128xf32>
    %44 = vector.multi_reduction <maximumf>, %43, %cst_21 [1] : vector<128x256xf32> to vector<128xf32>
    %45 = vector.shape_cast %44 : vector<128xf32> to vector<128x1xf32>
    %46 = vector.broadcast %45 : vector<128x1xf32> to vector<128x256xf32>
    %47 = arith.subf %43, %46 : vector<128x256xf32>
    %48 = math.exp %47 : vector<128x256xf32>
    %cst_22 = arith.constant dense<0.000000e+00> : vector<128xf32>
    %49 = vector.multi_reduction <add>, %48, %cst_22 [1] : vector<128x256xf32> to vector<128xf32>
    %50 = vector.shape_cast %49 : vector<128xf32> to vector<128x1xf32>
    %51 = tpu.reciprocal %50 {approx = true} : vector<128x1xf32> -> vector<128x1xf32>
    %52 = vector.broadcast %51 : vector<128x1xf32> to vector<128x256xf32>
    %53 = arith.mulf %48, %52 : vector<128x256xf32>
    %54 = arith.truncf %53 : vector<128x256xf32> to vector<128x256xbf16>
    %c1_23 = arith.constant 1 : index
    %c0_24 = arith.constant 0 : index
    %c0_25 = arith.constant 0 : index
    %55 = vector.load %arg6[%c1_23, %c0_24, %c0_25] : memref<4x128x256xbf16, #tpu.memory_space<vmem>>, vector<1x128x256xbf16>
    %56 = vector.shape_cast %55 : vector<1x128x256xbf16> to vector<128x256xbf16>
    %57 = vector.shape_cast %54 : vector<128x256xbf16> to vector<1x128x256xbf16>
    tpu.vector_store %arg6[%c1_23, %c0_24, %c0_25], %57 {strides = array<i32>} : memref<4x128x256xbf16, #tpu.memory_space<vmem>>, vector<1x128x256xbf16>,
    %c0_26 = arith.constant 0 : index
    %c16 = arith.constant 16 : index
    %58 = vector.load %arg1[%c0_26, %c16] : memref<256x64xbf16, #tpu.memory_space<vmem>>, vector<256x16xbf16>
    %59 = arith.truncf %53 : vector<128x256xf32> to vector<128x256xbf16>
    %cst_27 = arith.constant dense<0.000000e+00> : vector<128x16xf32>
    %60 = tpu.matmul %59, %58, %cst_27 {dimension_numbers = #tpu.dot_dimension_numbers<[1], [0], [0], [1], [0, 0, 1, 1], [], []>} : vector<128x256xbf16>, vector<256x16xbf16>, vector<128x16xf32> -> vector<128x16xf32>
    %c2 = arith.constant 2 : index
    %c0_28 = arith.constant 0 : index
    %61 = vector.load %arg2[%c2, %c0_28] : memref<4x256xf32, #tpu.memory_space<vmem>>, vector<1x256xf32>
    %c0_29 = arith.constant 0 : index
    %c2_30 = arith.constant 2 : index
    %62 = vector.load %arg3[%c0_29, %c2_30] : memref<128x4xf32, #tpu.memory_space<vmem>>, vector<128x1xf32>
    %63 = vector.broadcast %61 : vector<1x256xf32> to vector<128x256xf32>
    %64 = vector.broadcast %62 : vector<128x1xf32> to vector<128x256xf32>
    %65 = arith.addf %63, %64 : vector<128x256xf32>
    %cst_31 = arith.constant 0.000000e+00 : f32
    %66 = vector.broadcast %cst_31 : f32 to vector<128x256xf32>
    %67 = arith.cmpf oge, %65, %66 : vector<128x256xf32>
    %cst_32 = arith.constant 2.000000e-01 : f32
    %68 = vector.broadcast %cst_32 : f32 to vector<128x256xf32>
    %69 = arith.mulf %68, %65 : vector<128x256xf32>
    %70 = arith.select %67, %65, %69 : vector<128x256xi1>, vector<128x256xf32>
    %cst_33 = arith.constant -1.000000e+30 : f32
    %71 = vector.broadcast %cst_33 : f32 to vector<128x256xf32>
    %72 = arith.select %2, %70, %71 : vector<128x256xi1>, vector<128x256xf32>
    %cst_34 = arith.constant dense<0xFF800000> : vector<128xf32>
    %73 = vector.multi_reduction <maximumf>, %72, %cst_34 [1] : vector<128x256xf32> to vector<128xf32>
    %74 = vector.shape_cast %73 : vector<128xf32> to vector<128x1xf32>
    %75 = vector.broadcast %74 : vector<128x1xf32> to vector<128x256xf32>
    %76 = arith.subf %72, %75 : vector<128x256xf32>
    %77 = math.exp %76 : vector<128x256xf32>
    %cst_35 = arith.constant dense<0.000000e+00> : vector<128xf32>
    %78 = vector.multi_reduction <add>, %77, %cst_35 [1] : vector<128x256xf32> to vector<128xf32>
    %79 = vector.shape_cast %78 : vector<128xf32> to vector<128x1xf32>
    %80 = tpu.reciprocal %79 {approx = true} : vector<128x1xf32> -> vector<128x1xf32>
    %81 = vector.broadcast %80 : vector<128x1xf32> to vector<128x256xf32>
    %82 = arith.mulf %77, %81 : vector<128x256xf32>
    %83 = arith.truncf %82 : vector<128x256xf32> to vector<128x256xbf16>
    %c2_36 = arith.constant 2 : index
    %c0_37 = arith.constant 0 : index
    %c0_38 = arith.constant 0 : index
    %84 = vector.load %arg6[%c2_36, %c0_37, %c0_38] : memref<4x128x256xbf16, #tpu.memory_space<vmem>>, vector<1x128x256xbf16>
    %85 = vector.shape_cast %84 : vector<1x128x256xbf16> to vector<128x256xbf16>
    %86 = vector.shape_cast %83 : vector<128x256xbf16> to vector<1x128x256xbf16>
    tpu.vector_store %arg6[%c2_36, %c0_37, %c0_38], %86 {strides = array<i32>} : memref<4x128x256xbf16, #tpu.memory_space<vmem>>, vector<1x128x256xbf16>,
    %c0_39 = arith.constant 0 : index
    %c32 = arith.constant 32 : index
    %87 = vector.load %arg1[%c0_39, %c32] : memref<256x64xbf16, #tpu.memory_space<vmem>>, vector<256x16xbf16>
    %88 = arith.truncf %82 : vector<128x256xf32> to vector<128x256xbf16>
    %cst_40 = arith.constant dense<0.000000e+00> : vector<128x16xf32>
    %89 = tpu.matmul %88, %87, %cst_40 {dimension_numbers = #tpu.dot_dimension_numbers<[1], [0], [0], [1], [0, 0, 1, 1], [], []>} : vector<128x256xbf16>, vector<256x16xbf16>, vector<128x16xf32> -> vector<128x16xf32>
    %c3 = arith.constant 3 : index
    %c0_41 = arith.constant 0 : index
    %90 = vector.load %arg2[%c3, %c0_41] : memref<4x256xf32, #tpu.memory_space<vmem>>, vector<1x256xf32>
    %c0_42 = arith.constant 0 : index
    %c3_43 = arith.constant 3 : index
    %91 = vector.load %arg3[%c0_42, %c3_43] : memref<128x4xf32, #tpu.memory_space<vmem>>, vector<128x1xf32>
    %92 = vector.broadcast %90 : vector<1x256xf32> to vector<128x256xf32>
    %93 = vector.broadcast %91 : vector<128x1xf32> to vector<128x256xf32>
    %94 = arith.addf %92, %93 : vector<128x256xf32>
    %cst_44 = arith.constant 0.000000e+00 : f32
    %95 = vector.broadcast %cst_44 : f32 to vector<128x256xf32>
    %96 = arith.cmpf oge, %94, %95 : vector<128x256xf32>
    %cst_45 = arith.constant 2.000000e-01 : f32
    %97 = vector.broadcast %cst_45 : f32 to vector<128x256xf32>
    %98 = arith.mulf %97, %94 : vector<128x256xf32>
    %99 = arith.select %96, %94, %98 : vector<128x256xi1>, vector<128x256xf32>
    %cst_46 = arith.constant -1.000000e+30 : f32
    %100 = vector.broadcast %cst_46 : f32 to vector<128x256xf32>
    %101 = arith.select %2, %99, %100 : vector<128x256xi1>, vector<128x256xf32>
    %cst_47 = arith.constant dense<0xFF800000> : vector<128xf32>
    %102 = vector.multi_reduction <maximumf>, %101, %cst_47 [1] : vector<128x256xf32> to vector<128xf32>
    %103 = vector.shape_cast %102 : vector<128xf32> to vector<128x1xf32>
    %104 = vector.broadcast %103 : vector<128x1xf32> to vector<128x256xf32>
    %105 = arith.subf %101, %104 : vector<128x256xf32>
    %106 = math.exp %105 : vector<128x256xf32>
    %cst_48 = arith.constant dense<0.000000e+00> : vector<128xf32>
    %107 = vector.multi_reduction <add>, %106, %cst_48 [1] : vector<128x256xf32> to vector<128xf32>
    %108 = vector.shape_cast %107 : vector<128xf32> to vector<128x1xf32>
    %109 = tpu.reciprocal %108 {approx = true} : vector<128x1xf32> -> vector<128x1xf32>
    %110 = vector.broadcast %109 : vector<128x1xf32> to vector<128x256xf32>
    %111 = arith.mulf %106, %110 : vector<128x256xf32>
    %112 = arith.truncf %111 : vector<128x256xf32> to vector<128x256xbf16>
    %c3_49 = arith.constant 3 : index
    %c0_50 = arith.constant 0 : index
    %c0_51 = arith.constant 0 : index
    %113 = vector.load %arg6[%c3_49, %c0_50, %c0_51] : memref<4x128x256xbf16, #tpu.memory_space<vmem>>, vector<1x128x256xbf16>
    %114 = vector.shape_cast %113 : vector<1x128x256xbf16> to vector<128x256xbf16>
    %115 = vector.shape_cast %112 : vector<128x256xbf16> to vector<1x128x256xbf16>
    tpu.vector_store %arg6[%c3_49, %c0_50, %c0_51], %115 {strides = array<i32>} : memref<4x128x256xbf16, #tpu.memory_space<vmem>>, vector<1x128x256xbf16>,
    %c0_52 = arith.constant 0 : index
    %c48 = arith.constant 48 : index
    %116 = vector.load %arg1[%c0_52, %c48] : memref<256x64xbf16, #tpu.memory_space<vmem>>, vector<256x16xbf16>
    %117 = arith.truncf %111 : vector<128x256xf32> to vector<128x256xbf16>
    %cst_53 = arith.constant dense<0.000000e+00> : vector<128x16xf32>
    %118 = tpu.matmul %117, %116, %cst_53 {dimension_numbers = #tpu.dot_dimension_numbers<[1], [0], [0], [1], [0, 0, 1, 1], [], []>} : vector<128x256xbf16>, vector<256x16xbf16>, vector<128x16xf32> -> vector<128x16xf32>
    %119 = tpu.concatenate %31, %60, %89, %118 in 1 : vector<128x16xf32>, vector<128x16xf32>, vector<128x16xf32>, vector<128x16xf32> -> vector<128x64xf32>
    %c0_54 = arith.constant 0 : index
    %c0_55 = arith.constant 0 : index
    %120 = vector.load %arg5[%c0_54, %c0_55] : memref<128x64xf32, #tpu.memory_space<vmem>>, vector<128x64xf32>
    tpu.vector_store %arg5[%c0_54, %c0_55], %119 {strides = array<i32>} : memref<128x64xf32, #tpu.memory_space<vmem>>, vector<128x64xf32>,
    return
  }
  func.func @transform_0(%arg0: i32) -> (i32, i32) {
    %c0_i32 = arith.constant 0 : i32
    %c0_i32_0 = arith.constant 0 : i32
    %c0_i32_1 = arith.constant 0 : i32
    return %c0_i32, %c0_i32_0 : i32, i32
  }
  func.func @transform_1(%arg0: i32) -> (i32, i32) {
    %c0_i32 = arith.constant 0 : i32
    %c0_i32_0 = arith.constant 0 : i32
    %c0_i32_1 = arith.constant 0 : i32
    return %c0_i32, %c0_i32_0 : i32, i32
  }
  func.func @transform_2(%arg0: i32) -> (i32, i32) {
    %c0_i32 = arith.constant 0 : i32
    %c0_i32_0 = arith.constant 0 : i32
    return %arg0, %c0_i32 : i32, i32
  }
  func.func @transform_3(%arg0: i32) -> (i32, i32) {
    %c0_i32 = arith.constant 0 : i32
    %c0_i32_0 = arith.constant 0 : i32
    return %arg0, %c0_i32 : i32, i32
  }
  func.func @transform_4(%arg0: i32) -> (i32, i32) {
    %c0_i32 = arith.constant 0 : i32
    %c0_i32_0 = arith.constant 0 : i32
    return %arg0, %c0_i32 : i32, i32
  }
  func.func @transform_5(%arg0: i32) -> (i32, i32, i32) {
    %c0_i32 = arith.constant 0 : i32
    %c0_i32_0 = arith.constant 0 : i32
    %c0_i32_1 = arith.constant 0 : i32
    return %c0_i32, %arg0, %c0_i32_0 : i32, i32, i32
  }
}

</mosaic_0001>

<llo_original>
// kernel: tpu_custom_call.1
$region0: #{tpu_custom_call.1}
  #allocation0 [shape = 'u32[]', space=smem, size = 0x4, offset = 0x4, fixed_abs, tag = 'smem constant byte address 0x4 - core index']
  #allocation1 [shape = 'u32[144,128]{1,0:T(1,128)}', space=vmem, size = 0x12000, scoped, tag = 'internal scratch']
  #allocation4 [shape = 's32[]', space=sflag, size = 0x4, offset = 0, fixed_abs, tag = 'sflag constant byte address 0x0 - dummy sync flag']
  %s0 = inlined_call_operand.vmem [shape: bf16[256,64], index: 0, kind: input, shape index: {}]
  %s1 = inlined_call_operand.vmem [shape: f32[4,256], index: 1, kind: input, shape index: {}]
  %s2 = inlined_call_operand.vmem [shape: f32[256,4], index: 2, kind: input, shape index: {}]
  %s3 = inlined_call_operand.vmem [shape: s8[256,256], index: 3, kind: input, shape index: {}]
  %s4 = inlined_call_operand.vmem [shape: f32[256,64], index: 4, kind: output, shape index: {0}]
  %s5 = inlined_call_operand.hbm [shape: bf16[4,256,256], index: 5, kind: output, shape index: {1}]
  %6 = xla_tuple %s4, %s5
  %s7 = sld [smem:[#allocation0]]
  $region57: #{tpu_custom_call.1} parent=0
    _
  %s9 = ssub.s32 1, %s7
  %s10 = scalar_select 0, %s9, %s7
  $region1: #{tpu_custom_call.1} parent=0
    #allocation2 [shape = 'u8[524288]{0}', space=vmem, size = 0x80000, scoped, tag = 'output window, operand 1']
    #allocation3 [shape = 's32[2]{0}', space=sflag, size = 0x8, scoped, tag = 'scoped memory for tpu_custom_call.1']
    %11 = vsyncpa [#allocation3], 0
    %s12 = scalar_lea.sflag [#allocation3], 1
    %13 = vsyncpa %s12, 0
    loop: start=0, step=1, limit=4
    $region2: #{tpu_custom_call.1} parent=1 // loop_pre_header
      _
    $region3: #{tpu_custom_call.1} parent=1 // loop_header
      %s15 = sphi 0, %s19
      %p16 = scmp.ge.s32.totalorder %s15, 4
      %s23 = sphi 0, %s23
      %s25 = sphi 0, %s23
      %s26 = sphi 0, %s25
      %s40 = sphi 0, %s26
      %s44 = sphi 0, %s44
      %s46 = sphi 0, %s44
      %s47 = sphi 0, %s46
      %s61 = sphi 0, %s47
      %s67 = sphi 0, %s69
      %s70 = sphi 0, %s67
      %s71 = sphi 0, %s70
      %s87 = sphi 0, %s71
      %s93 = sphi 0, %s95
      %s96 = sphi 0, %s93
      %s97 = sphi 0, %s96
      %s113 = sphi 0, %s97
      %s119 = sphi 0, %s121
      %s122 = sphi 0, %s119
      %s123 = sphi 0, %s122
      %s139 = sphi 0, %s123
      %s145 = sphi 0, %s147
      %s148 = sphi 0, %s145
      %s149 = sphi 0, %s148
      %s165 = sphi 0, %s149
    $region4: #{tpu_custom_call.1} parent=1 // loop_header_branch
      %18 = sbr.rel (%p16) target = $region8
    $region5: #{tpu_custom_call.1} parent=1 // loop_body
      %s20 = ssub.s32 %s15, 1
      %s21 = ssub.s32 %s15, 2
      %s22 = sadd.s32 %s15, 1
      %s24 = sadd.s32 %s23, 1
      %p27 = scmp.eq.s32.totalorder %s15, 1
      %p28 = scmp.ne.s32.totalorder %s23, %s25
      %p29 = scmp.eq.s32.totalorder %s15, 0
      %p30 = por %p28, %p29
      %p31 = scmp.ne.s32.totalorder %s23, %s25
      %p32 = scmp.eq.s32.totalorder %s20, 1
      %p33 = por %p31, %p32
      %p34 = scmp.ne.s32.totalorder %s25, %s26
      %p35 = scmp.eq.s32.totalorder %s20, 0
      %p36 = por %p34, %p35
      %p37 = scmp.ne.s32.totalorder %s25, %s26
      %p38 = scmp.eq.s32.totalorder %s21, 1
      %p39 = por %p37, %p38
      %p41 = scmp.ne.s32.totalorder %s26, %s40
      %p42 = scmp.eq.s32.totalorder %s21, 0
      %p43 = por %p41, %p42
      %s45 = sadd.s32 %s44, 1
      %p48 = scmp.eq.s32.totalorder %s15, 1
      %p49 = scmp.ne.s32.totalorder %s44, %s46
      %p50 = scmp.eq.s32.totalorder %s15, 0
      %p51 = por %p49, %p50
      %p52 = scmp.ne.s32.totalorder %s44, %s46
      %p53 = scmp.eq.s32.totalorder %s20, 1
      %p54 = por %p52, %p53
      %p55 = scmp.ne.s32.totalorder %s46, %s47
      %p56 = scmp.eq.s32.totalorder %s20, 0
      %p57 = por %p55, %p56
      %p58 = scmp.ne.s32.totalorder %s46, %s47
      %p59 = scmp.eq.s32.totalorder %s21, 1
      %p60 = por %p58, %p59
      %p62 = scmp.ne.s32.totalorder %s47, %s61
      %p63 = scmp.eq.s32.totalorder %s21, 0
      %p64 = por %p62, %p63
      %s65 = ssub.s32 %s15, %s22
      %p66 = scmp.eq.s32.totalorder %s65, 0
      %s68 = sadd.s32 %s67, 1
      %s69 = scalar_select %p66, %s67, %s68
      %p72 = pneg %p66
      %p73 = scmp.eq.s32.totalorder %s15, 1
      %p74 = por %p72, %p73
      %p75 = scmp.ne.s32.totalorder %s67, %s70
      %p76 = scmp.eq.s32.totalorder %s15, 0
      %p77 = por %p75, %p76
      %p78 = scmp.ne.s32.totalorder %s67, %s70
      %p79 = scmp.eq.s32.totalorder %s20, 1
      %p80 = por %p78, %p79
      %p81 = scmp.ne.s32.totalorder %s70, %s71
      %p82 = scmp.eq.s32.totalorder %s20, 0
      %p83 = por %p81, %p82
      %p84 = scmp.ne.s32.totalorder %s70, %s71
      %p85 = scmp.eq.s32.totalorder %s21, 1
      %p86 = por %p84, %p85
      %p88 = scmp.ne.s32.totalorder %s71, %s87
      %p89 = scmp.eq.s32.totalorder %s21, 0
      %p90 = por %p88, %p89
      %s91 = ssub.s32 %s15, %s22
      %p92 = scmp.eq.s32.totalorder %s91, 0
      %s94 = sadd.s32 %s93, 1
      %s95 = scalar_select %p92, %s93, %s94
      %p98 = pneg %p92
      %p99 = scmp.eq.s32.totalorder %s15, 1
      %p100 = por %p98, %p99
      %p101 = scmp.ne.s32.totalorder %s93, %s96
      %p102 = scmp.eq.s32.totalorder %s15, 0
      %p103 = por %p101, %p102
      %p104 = scmp.ne.s32.totalorder %s93, %s96
      %p105 = scmp.eq.s32.totalorder %s20, 1
      %p106 = por %p104, %p105
      %p107 = scmp.ne.s32.totalorder %s96, %s97
      %p108 = scmp.eq.s32.totalorder %s20, 0
      %p109 = por %p107, %p108
      %p110 = scmp.ne.s32.totalorder %s96, %s97
      %p111 = scmp.eq.s32.totalorder %s21, 1
      %p112 = por %p110, %p111
      %p114 = scmp.ne.s32.totalorder %s97, %s113
      %p115 = scmp.eq.s32.totalorder %s21, 0
      %p116 = por %p114, %p115
      %s117 = ssub.s32 %s15, %s22
      %p118 = scmp.eq.s32.totalorder %s117, 0
      %s120 = sadd.s32 %s119, 1
      %s121 = scalar_select %p118, %s119, %s120
      %p124 = pneg %p118
      %p125 = scmp.eq.s32.totalorder %s15, 1
      %p126 = por %p124, %p125
      %p127 = scmp.ne.s32.totalorder %s119, %s122
      %p128 = scmp.eq.s32.totalorder %s15, 0
      %p129 = por %p127, %p128
      %p130 = scmp.ne.s32.totalorder %s119, %s122
      %p131 = scmp.eq.s32.totalorder %s20, 1
      %p132 = por %p130, %p131
      %p133 = scmp.ne.s32.totalorder %s122, %s123
      %p134 = scmp.eq.s32.totalorder %s20, 0
      %p135 = por %p133, %p134
      %p136 = scmp.ne.s32.totalorder %s122, %s123
      %p137 = scmp.eq.s32.totalorder %s21, 1
      %p138 = por %p136, %p137
      %p140 = scmp.ne.s32.totalorder %s123, %s139
      %p141 = scmp.eq.s32.totalorder %s21, 0
      %p142 = por %p140, %p141
      %s143 = ssub.s32 %s15, %s22
      %p144 = scmp.eq.s32.totalorder %s143, 0
      %s146 = sadd.s32 %s145, 1
      %s147 = scalar_select %p144, %s145, %s146
      %p150 = pneg %p144
      %p151 = scmp.eq.s32.totalorder %s15, 1
      %p152 = por %p150, %p151
      %p153 = scmp.ne.s32.totalorder %s145, %s148
      %p154 = scmp.eq.s32.totalorder %s15, 0
      %p155 = por %p153, %p154
      %p156 = scmp.ne.s32.totalorder %s145, %s148
      %p157 = scmp.eq.s32.totalorder %s20, 1
      %p158 = por %p156, %p157
      %p159 = scmp.ne.s32.totalorder %s148, %s149
      %p160 = scmp.eq.s32.totalorder %s20, 0
      %p161 = por %p159, %p160
      %p162 = scmp.ne.s32.totalorder %s148, %s149
      %p163 = scmp.eq.s32.totalorder %s21, 1
      %p164 = por %p162, %p163
      %p166 = scmp.ne.s32.totalorder %s149, %s165
      %p167 = scmp.eq.s32.totalorder %s21, 0
      %p168 = por %p166, %p167
      %p169 = scmp.le.s32.totalorder 1, %s15
      %p170 = scmp.lt.s32.totalorder %s15, 3
      %p171 = pnand %p169, %p170
      %p172 = pneg %p171
      // Predicated region
      $region9: #{tpu_custom_call.1} parent=5 // pred_check
        _
      $region10: #{tpu_custom_call.1} parent=5 // pred_check_branch
        %174 = sbr.rel (%p171) target = $region12
      $region11: #{tpu_custom_call.1} parent=5 // pred_region
        %s175 = ssub.s32 %s15, 1
        // Predicated region
        $region13: #{tpu_custom_call.1} parent=11 // pred_check
          %p176 = pneg %p36
        $region14: #{tpu_custom_call.1} parent=11 // pred_check_branch
          %178 = sbr.rel (%p176) target = $region16
        $region15: #{tpu_custom_call.1} parent=11 // pred_region
          _
        $region16: #{tpu_custom_call.1} parent=11 // pred_fallthru
          _
        // Predicated region
        $region17: #{tpu_custom_call.1} parent=11 // pred_check
          %p179 = pneg %p57
        $region18: #{tpu_custom_call.1} parent=11 // pred_check_branch
          %181 = sbr.rel (%p179) target = $region20
        $region19: #{tpu_custom_call.1} parent=11 // pred_region
          _
        $region20: #{tpu_custom_call.1} parent=11 // pred_fallthru
          _
      $region12: #{tpu_custom_call.1} parent=5 // pred_fallthru
        _
      %p182 = scmp.lt.s32.totalorder %s15, 2
      // Predicated region
      $region21: #{tpu_custom_call.1} parent=5 // pred_check
        %p183 = pneg %p182
      $region22: #{tpu_custom_call.1} parent=5 // pred_check_branch
        %185 = sbr.rel (%p183) target = $region24
      $region23: #{tpu_custom_call.1} parent=5 // pred_region
        // Predicated region
        $region25: #{tpu_custom_call.1} parent=23 // pred_check
          %p186 = pneg %p77
        $region26: #{tpu_custom_call.1} parent=23 // pred_check_branch
          %188 = sbr.rel (%p186) target = $region28
        $region27: #{tpu_custom_call.1} parent=23 // pred_region
          %s189 = smul.u32 16, %s15
          %p190 = scmp.lt.s32.totalorder %s189, 31
          %s191 = scalar_select %p190, %s189, 31
          %s192 = smul.addr %s191, 8
          %s193 = scalar_lea.vmem %s2, %s192
          %s194 = smul.u32 16, %s15
        $region28: #{tpu_custom_call.1} parent=23 // pred_fallthru
          _
        // Predicated region
        $region29: #{tpu_custom_call.1} parent=23 // pred_check
          %p195 = pneg %p103
        $region30: #{tpu_custom_call.1} parent=23 // pred_check_branch
          %197 = sbr.rel (%p195) target = $region32
        $region31: #{tpu_custom_call.1} parent=23 // pred_region
          %s198 = smul.u32 4, %s15
          %p199 = scmp.lt.s32.totalorder %s198, 7
          %s200 = scalar_select %p199, %s198, 7
          %s201 = smul.addr %s200, 2
          %s202 = smul.addr %s201, 8
          %s203 = scalar_lea.vmem %s3, %s202
          %s204 = smul.u32 4, %s15
        $region32: #{tpu_custom_call.1} parent=23 // pred_fallthru
          _
      $region24: #{tpu_custom_call.1} parent=5 // pred_fallthru
        _
      %p205 = scmp.le.s32.totalorder 1, %s15
      %p206 = scmp.lt.s32.totalorder %s15, 3
      %p207 = pnand %p205, %p206
      %p208 = pneg %p207
      // Predicated region
      $region33: #{tpu_custom_call.1} parent=5 // pred_check
        _
      $region34: #{tpu_custom_call.1} parent=5 // pred_check_branch
        %210 = sbr.rel (%p207) target = $region36
      $region35: #{tpu_custom_call.1} parent=5 // pred_region
        %s211 = ssub.s32 %s15, 1
        %p212 = pneg %p36
        %p213 = pneg %p33
        %p214 = pneg %p57
        %p215 = pneg %p54
        %s216 = smul.u32 16, %s20
        %p217 = scmp.lt.s32.totalorder %s216, 31
        %s218 = scalar_select %p217, %s216, 31
        %s219 = smul.addr %s218, 8
        %s220 = scalar_lea.vmem %s2, %s219
        %p221 = pneg %p83
        %p222 = pneg %p80
        %s223 = smul.u32 4, %s20
        %p224 = scmp.lt.s32.totalorder %s223, 7
        %s225 = scalar_select %p224, %s223, 7
        %s226 = smul.addr %s225, 2
        %s227 = smul.addr %s226, 8
        %s228 = scalar_lea.vmem %s3, %s227
        %p229 = pneg %p109
        %p230 = pneg %p106
        %p231 = pneg %p135
        %p232 = pneg %p132
        %s233 = smul.u32 16, %s20
        %p234 = scmp.lt.s32.totalorder %s233, 31
        %s235 = scalar_select %p234, %s233, 31
        %s236 = smul.addr %s235, 8
        %s237 = scalar_lea.vmem %s4, %s236
        %p238 = pneg %p161
        %p239 = pneg %p158
        %s240 = sand.u32 %s148, 1
        %s241 = scalar_lea.sflag [#allocation3], %s240
        %s242 = sand.u32 %s148, 1
        %s243 = smul.addr %s242, 512
        %s244 = scalar_lea.vmem [#allocation2], %s243
        %s245 = smul.u32 16, %s20
        %p246 = scmp.lt.s32.totalorder %s245, 31
        %s247 = scalar_select %p246, %s245, 31
        %s248 = smul.addr %s247, 8
        %s249 = scalar_lea.vmem %s2, %s248
        %s250 = smul.u32 16, %s20
        %s251 = smul.u32 4, %s20
        %p252 = scmp.lt.s32.totalorder %s251, 7
        %s253 = scalar_select %p252, %s251, 7
        %s254 = smul.addr %s253, 2
        %s255 = smul.addr %s254, 8
        %s256 = scalar_lea.vmem %s3, %s255
        %s257 = smul.u32 4, %s20
        %s258 = smul.u32 16, %s20
        %p259 = scmp.lt.s32.totalorder %s258, 31
        %s260 = scalar_select %p259, %s258, 31
        %s261 = smul.addr %s260, 8
        %s262 = scalar_lea.vmem %s4, %s261
        %s263 = smul.u32 16, %s20
        %s264 = smul.u32 16, %s20
        %v268 = vld [vmem:[%s256] sm:$0xff]
        %v269 = vld [vmem:[%s256 + $0x8] sm:$0xff]
        %v270 = vld [vmem:[%s256 + $0x10] sm:$0xff]
        %v271 = vld [vmem:[%s256 + $0x18] sm:$0xff]
        %v272 = vld [vmem:[%s256 + $0x20] sm:$0xff]
        %v273 = vld [vmem:[%s256 + $0x28] sm:$0xff]
        %v274 = vld [vmem:[%s256 + $0x30] sm:$0xff]
        %v275 = vld [vmem:[%s256 + $0x38] sm:$0xff]
        %vm276 = vnez %v268
        %vm277 = vnez %v269
        %vm278 = vnez %v270
        %vm279 = vnez %v271
        %vm280 = vnez %v272
        %vm281 = vnez %v273
        %vm282 = vnez %v274
        %vm283 = vnez %v275
        %v284 = vld [vmem:[%s1] ss:$4 sm:$0x3]
        %v285 = vld [vmem:[%s249] sm:$0xff]
        %v286 = vld [vmem:[%s249 + $0x8] sm:$0xff]
        %v287 = vld [vmem:[%s249 + $0x10] sm:$0xff]
        %v288 = vld [vmem:[%s249 + $0x18] sm:$0xff]
        %v289 = vld [vmem:[%s249 + $0x20] sm:$0xff]
        %v290 = vld [vmem:[%s249 + $0x28] sm:$0xff]
        %v291 = vld [vmem:[%s249 + $0x30] sm:$0xff]
        %v292 = vld [vmem:[%s249 + $0x38] sm:$0xff]
        %v293 = vld [vmem:[%s249 + $0x40] sm:$0xff]
        %v294 = vld [vmem:[%s249 + $0x48] sm:$0xff]
        %v295 = vld [vmem:[%s249 + $0x50] sm:$0xff]
        %v296 = vld [vmem:[%s249 + $0x58] sm:$0xff]
        %v297 = vld [vmem:[%s249 + $0x60] sm:$0xff]
        %v298 = vld [vmem:[%s249 + $0x68] sm:$0xff]
        %v299 = vld [vmem:[%s249 + $0x70] sm:$0xff]
        %v300 = vld [vmem:[%s249 + $0x78] sm:$0xff]
        %v302 = vlaneseq
        %v303 = vshrl.u32 %v302, 7
        %v304 = vsub.s32 0, %v303
        %v305 = vrot.slane %v284, %v304
        %v306 = vlaneseq
        %v307 = vshrl.u32 %v306, 7
        %v308 = vsub.s32 1, %v307
        %v309 = vrot.slane %v284, %v308
        %313 = vset.pattern.permute.xlu0 0
        %314 = vperm.xlu0 %313, %v285
        %v315 = vpop.permute.xlu0 %314
        %318 = vset.pattern.permute.xlu0 0
        %319 = vperm.xlu0 %318, %v286
        %v320 = vpop.permute.xlu0 %319
        %323 = vset.pattern.permute.xlu0 0
        %324 = vperm.xlu0 %323, %v287
        %v325 = vpop.permute.xlu0 %324
        %328 = vset.pattern.permute.xlu0 0
        %329 = vperm.xlu0 %328, %v288
        %v330 = vpop.permute.xlu0 %329
        %333 = vset.pattern.permute.xlu0 0
        %334 = vperm.xlu0 %333, %v289
        %v335 = vpop.permute.xlu0 %334
        %338 = vset.pattern.permute.xlu0 0
        %339 = vperm.xlu0 %338, %v290
        %v340 = vpop.permute.xlu0 %339
        %343 = vset.pattern.permute.xlu0 0
        %344 = vperm.xlu0 %343, %v291
        %v345 = vpop.permute.xlu0 %344
        %348 = vset.pattern.permute.xlu0 0
        %349 = vperm.xlu0 %348, %v292
        %v350 = vpop.permute.xlu0 %349
        %353 = vset.pattern.permute.xlu0 0
        %354 = vperm.xlu0 %353, %v293
        %v355 = vpop.permute.xlu0 %354
        %358 = vset.pattern.permute.xlu0 0
        %359 = vperm.xlu0 %358, %v294
        %v360 = vpop.permute.xlu0 %359
        %363 = vset.pattern.permute.xlu0 0
        %364 = vperm.xlu0 %363, %v295
        %v365 = vpop.permute.xlu0 %364
        %368 = vset.pattern.permute.xlu0 0
        %369 = vperm.xlu0 %368, %v296
        %v370 = vpop.permute.xlu0 %369
        %373 = vset.pattern.permute.xlu0 0
        %374 = vperm.xlu0 %373, %v297
        %v375 = vpop.permute.xlu0 %374
        %378 = vset.pattern.permute.xlu0 0
        %379 = vperm.xlu0 %378, %v298
        %v380 = vpop.permute.xlu0 %379
        %383 = vset.pattern.permute.xlu0 0
        %384 = vperm.xlu0 %383, %v299
        %v385 = vpop.permute.xlu0 %384
        %388 = vset.pattern.permute.xlu0 0
        %389 = vperm.xlu0 %388, %v300
        %v390 = vpop.permute.xlu0 %389
        %v392 = vadd.f32 %v305, %v315
        %v393 = vadd.f32 %v309, %v315
        %v394 = vadd.f32 %v305, %v320
        %v395 = vadd.f32 %v309, %v320
        %v396 = vadd.f32 %v305, %v325
        %v397 = vadd.f32 %v309, %v325
        %v398 = vadd.f32 %v305, %v330
        %v399 = vadd.f32 %v309, %v330
        %v400 = vadd.f32 %v305, %v335
        %v401 = vadd.f32 %v309, %v335
        %v402 = vadd.f32 %v305, %v340
        %v403 = vadd.f32 %v309, %v340
        %v404 = vadd.f32 %v305, %v345
        %v405 = vadd.f32 %v309, %v345
        %v406 = vadd.f32 %v305, %v350
        %v407 = vadd.f32 %v309, %v350
        %v408 = vadd.f32 %v305, %v355
        %v409 = vadd.f32 %v309, %v355
        %v410 = vadd.f32 %v305, %v360
        %v411 = vadd.f32 %v309, %v360
        %v412 = vadd.f32 %v305, %v365
        %v413 = vadd.f32 %v309, %v365
        %v414 = vadd.f32 %v305, %v370
        %v415 = vadd.f32 %v309, %v370
        %v416 = vadd.f32 %v305, %v375
        %v417 = vadd.f32 %v309, %v375
        %v418 = vadd.f32 %v305, %v380
        %v419 = vadd.f32 %v309, %v380
        %v420 = vadd.f32 %v305, %v385
        %v421 = vadd.f32 %v309, %v385
        %v422 = vadd.f32 %v305, %v390
        %v423 = vadd.f32 %v309, %v390
        %vm424 = vcmp.ge.f32.partialorder %v392, 0.0
        %vm425 = vcmp.ge.f32.partialorder %v393, 0.0
        %vm426 = vcmp.ge.f32.partialorder %v394, 0.0
        %vm427 = vcmp.ge.f32.partialorder %v395, 0.0
        %vm428 = vcmp.ge.f32.partialorder %v396, 0.0
        %vm429 = vcmp.ge.f32.partialorder %v397, 0.0
        %vm430 = vcmp.ge.f32.partialorder %v398, 0.0
        %vm431 = vcmp.ge.f32.partialorder %v399, 0.0
        %vm432 = vcmp.ge.f32.partialorder %v400, 0.0
        %vm433 = vcmp.ge.f32.partialorder %v401, 0.0
        %vm434 = vcmp.ge.f32.partialorder %v402, 0.0
        %vm435 = vcmp.ge.f32.partialorder %v403, 0.0
        %vm436 = vcmp.ge.f32.partialorder %v404, 0.0
        %vm437 = vcmp.ge.f32.partialorder %v405, 0.0
        %vm438 = vcmp.ge.f32.partialorder %v406, 0.0
        %vm439 = vcmp.ge.f32.partialorder %v407, 0.0
        %vm440 = vcmp.ge.f32.partialorder %v408, 0.0
        %vm441 = vcmp.ge.f32.partialorder %v409, 0.0
        %vm442 = vcmp.ge.f32.partialorder %v410, 0.0
        %vm443 = vcmp.ge.f32.partialorder %v411, 0.0
        %vm444 = vcmp.ge.f32.partialorder %v412, 0.0
        %vm445 = vcmp.ge.f32.partialorder %v413, 0.0
        %vm446 = vcmp.ge.f32.partialorder %v414, 0.0
        %vm447 = vcmp.ge.f32.partialorder %v415, 0.0
        %vm448 = vcmp.ge.f32.partialorder %v416, 0.0
        %vm449 = vcmp.ge.f32.partialorder %v417, 0.0
        %vm450 = vcmp.ge.f32.partialorder %v418, 0.0
        %vm451 = vcmp.ge.f32.partialorder %v419, 0.0
        %vm452 = vcmp.ge.f32.partialorder %v420, 0.0
        %vm453 = vcmp.ge.f32.partialorder %v421, 0.0
        %vm454 = vcmp.ge.f32.partialorder %v422, 0.0
        %vm455 = vcmp.ge.f32.partialorder %v423, 0.0
        %v456 = vmul.f32 %v392, 0.2
        %v457 = vmul.f32 %v393, 0.2
        %v458 = vmul.f32 %v394, 0.2
        %v459 = vmul.f32 %v395, 0.2
        %v460 = vmul.f32 %v396, 0.2
        %v461 = vmul.f32 %v397, 0.2
        %v462 = vmul.f32 %v398, 0.2
        %v463 = vmul.f32 %v399, 0.2
        %v464 = vmul.f32 %v400, 0.2
        %v465 = vmul.f32 %v401, 0.2
        %v466 = vmul.f32 %v402, 0.2
        %v467 = vmul.f32 %v403, 0.2
        %v468 = vmul.f32 %v404, 0.2
        %v469 = vmul.f32 %v405, 0.2
        %v470 = vmul.f32 %v406, 0.2
        %v471 = vmul.f32 %v407, 0.2
        %v472 = vmul.f32 %v408, 0.2
        %v473 = vmul.f32 %v409, 0.2
        %v474 = vmul.f32 %v410, 0.2
        %v475 = vmul.f32 %v411, 0.2
        %v476 = vmul.f32 %v412, 0.2
        %v477 = vmul.f32 %v413, 0.2
        %v478 = vmul.f32 %v414, 0.2
        %v479 = vmul.f32 %v415, 0.2
        %v480 = vmul.f32 %v416, 0.2
        %v481 = vmul.f32 %v417, 0.2
        %v482 = vmul.f32 %v418, 0.2
        %v483 = vmul.f32 %v419, 0.2
        %v484 = vmul.f32 %v420, 0.2
        %v485 = vmul.f32 %v421, 0.2
        %v486 = vmul.f32 %v422, 0.2
        %v487 = vmul.f32 %v423, 0.2
        %v488 = vsel %vm424, %v392, %v456
        %v489 = vsel %vm425, %v393, %v457
        %v490 = vsel %vm426, %v394, %v458
        %v491 = vsel %vm427, %v395, %v459
        %v492 = vsel %vm428, %v396, %v460
        %v493 = vsel %vm429, %v397, %v461
        %v494 = vsel %vm430, %v398, %v462
        %v495 = vsel %vm431, %v399, %v463
        %v496 = vsel %vm432, %v400, %v464
        %v497 = vsel %vm433, %v401, %v465
        %v498 = vsel %vm434, %v402, %v466
        %v499 = vsel %vm435, %v403, %v467
        %v500 = vsel %vm436, %v404, %v468
        %v501 = vsel %vm437, %v405, %v469
        %v502 = vsel %vm438, %v406, %v470
        %v503 = vsel %vm439, %v407, %v471
        %v504 = vsel %vm440, %v408, %v472
        %v505 = vsel %vm441, %v409, %v473
        %v506 = vsel %vm442, %v410, %v474
        %v507 = vsel %vm443, %v411, %v475
        %v508 = vsel %vm444, %v412, %v476
        %v509 = vsel %vm445, %v413, %v477
        %v510 = vsel %vm446, %v414, %v478
        %v511 = vsel %vm447, %v415, %v479
        %v512 = vsel %vm448, %v416, %v480
        %v513 = vsel %vm449, %v417, %v481
        %v514 = vsel %vm450, %v418, %v482
        %v515 = vsel %vm451, %v419, %v483
        %v516 = vsel %vm452, %v420, %v484
        %v517 = vsel %vm453, %v421, %v485
        %v518 = vsel %vm454, %v422, %v486
        %v519 = vsel %vm455, %v423, %v487
        %v520 = vsel %vm276, 16843009, 0
        %v521 = vsel %vm277, 16843009, 0
        %v522 = vsel %vm278, 16843009, 0
        %v523 = vsel %vm279, 16843009, 0
        %v524 = vsel %vm280, 16843009, 0
        %v525 = vsel %vm281, 16843009, 0
        %v526 = vsel %vm282, 16843009, 0
        %v527 = vsel %vm283, 16843009, 0
        %v528 = vunpack.c.0.s8 %v520
        %v529 = vunpack.c.0.s8 %v521
        %v530 = vunpack.c.1.s8 %v520
        %v531 = vunpack.c.1.s8 %v521
        %v532 = vunpack.c.2.s8 %v520
        %v533 = vunpack.c.2.s8 %v521
        %v534 = vunpack.c.3.s8 %v520
        %v535 = vunpack.c.3.s8 %v521
        %v536 = vunpack.c.0.s8 %v522
        %v537 = vunpack.c.0.s8 %v523
        %v538 = vunpack.c.1.s8 %v522
        %v539 = vunpack.c.1.s8 %v523
        %v540 = vunpack.c.2.s8 %v522
        %v541 = vunpack.c.2.s8 %v523
        %v542 = vunpack.c.3.s8 %v522
        %v543 = vunpack.c.3.s8 %v523
        %v544 = vunpack.c.0.s8 %v524
        %v545 = vunpack.c.0.s8 %v525
        %v546 = vunpack.c.1.s8 %v524
        %v547 = vunpack.c.1.s8 %v525
        %v548 = vunpack.c.2.s8 %v524
        %v549 = vunpack.c.2.s8 %v525
        %v550 = vunpack.c.3.s8 %v524
        %v551 = vunpack.c.3.s8 %v525
        %v552 = vunpack.c.0.s8 %v526
        %v553 = vunpack.c.0.s8 %v527
        %v554 = vunpack.c.1.s8 %v526
        %v555 = vunpack.c.1.s8 %v527
        %v556 = vunpack.c.2.s8 %v526
        %v557 = vunpack.c.2.s8 %v527
        %v558 = vunpack.c.3.s8 %v526
        %v559 = vunpack.c.3.s8 %v527
        %v560 = vpack.c.b16 %v529, %v528
        %v561 = vpack.c.b8 %v560, %v560
        %v562 = vpack.c.b16 %v531, %v530
        %v563 = vpack.c.b8 %v562, %v562
        %v564 = vpack.c.b16 %v533, %v532
        %v565 = vpack.c.b8 %v564, %v564
        %v566 = vpack.c.b16 %v535, %v534
        %v567 = vpack.c.b8 %v566, %v566
        %v568 = vpack.c.b16 %v537, %v536
        %v569 = vpack.c.b8 %v568, %v568
        %v570 = vpack.c.b16 %v539, %v538
        %v571 = vpack.c.b8 %v570, %v570
        %v572 = vpack.c.b16 %v541, %v540
        %v573 = vpack.c.b8 %v572, %v572
        %v574 = vpack.c.b16 %v543, %v542
        %v575 = vpack.c.b8 %v574, %v574
        %v576 = vpack.c.b16 %v545, %v544
        %v577 = vpack.c.b8 %v576, %v576
        %v578 = vpack.c.b16 %v547, %v546
        %v579 = vpack.c.b8 %v578, %v578
        %v580 = vpack.c.b16 %v549, %v548
        %v581 = vpack.c.b8 %v580, %v580
        %v582 = vpack.c.b16 %v551, %v550
        %v583 = vpack.c.b8 %v582, %v582
        %v584 = vpack.c.b16 %v553, %v552
        %v585 = vpack.c.b8 %v584, %v584
        %v586 = vpack.c.b16 %v555, %v554
        %v587 = vpack.c.b8 %v586, %v586
        %v588 = vpack.c.b16 %v557, %v556
        %v589 = vpack.c.b8 %v588, %v588
        %v590 = vpack.c.b16 %v559, %v558
        %v591 = vpack.c.b8 %v590, %v590
        %vm592 = vnez %v561
        %vm593 = vnez %v563
        %vm594 = vnez %v565
        %vm595 = vnez %v567
        %vm596 = vnez %v569
        %vm597 = vnez %v571
        %vm598 = vnez %v573
        %vm599 = vnez %v575
        %vm600 = vnez %v577
        %vm601 = vnez %v579
        %vm602 = vnez %v581
        %vm603 = vnez %v583
        %vm604 = vnez %v585
        %vm605 = vnez %v587
        %vm606 = vnez %v589
        %vm607 = vnez %v591
        %v608 = vsel %vm592, 16843009, 0
        %v609 = vsel %vm593, 16843009, 0
        %v610 = vsel %vm594, 16843009, 0
        %v611 = vsel %vm595, 16843009, 0
        %v612 = vsel %vm596, 16843009, 0
        %v613 = vsel %vm597, 16843009, 0
        %v614 = vsel %vm598, 16843009, 0
        %v615 = vsel %vm599, 16843009, 0
        %v616 = vsel %vm600, 16843009, 0
        %v617 = vsel %vm601, 16843009, 0
        %v618 = vsel %vm602, 16843009, 0
        %v619 = vsel %vm603, 16843009, 0
        %v620 = vsel %vm604, 16843009, 0
        %v621 = vsel %vm605, 16843009, 0
        %v622 = vsel %vm606, 16843009, 0
        %v623 = vsel %vm607, 16843009, 0
        %v624 = vunpack.c.0.s8 %v608
        %v625 = vunpack.c.1.s8 %v608
        %v626 = vunpack.c.0.s8 %v609
        %v627 = vunpack.c.1.s8 %v609
        %v628 = vunpack.c.0.s8 %v610
        %v629 = vunpack.c.1.s8 %v610
        %v630 = vunpack.c.0.s8 %v611
        %v631 = vunpack.c.1.s8 %v611
        %v632 = vunpack.c.0.s8 %v612
        %v633 = vunpack.c.1.s8 %v612
        %v634 = vunpack.c.0.s8 %v613
        %v635 = vunpack.c.1.s8 %v613
        %v636 = vunpack.c.0.s8 %v614
        %v637 = vunpack.c.1.s8 %v614
        %v638 = vunpack.c.0.s8 %v615
        %v639 = vunpack.c.1.s8 %v615
        %v640 = vunpack.c.0.s8 %v616
        %v641 = vunpack.c.1.s8 %v616
        %v642 = vunpack.c.0.s8 %v617
        %v643 = vunpack.c.1.s8 %v617
        %v644 = vunpack.c.0.s8 %v618
        %v645 = vunpack.c.1.s8 %v618
        %v646 = vunpack.c.0.s8 %v619
        %v647 = vunpack.c.1.s8 %v619
        %v648 = vunpack.c.0.s8 %v620
        %v649 = vunpack.c.1.s8 %v620
        %v650 = vunpack.c.0.s8 %v621
        %v651 = vunpack.c.1.s8 %v621
        %v652 = vunpack.c.0.s8 %v622
        %v653 = vunpack.c.1.s8 %v622
        %v654 = vunpack.c.0.s8 %v623
        %v655 = vunpack.c.1.s8 %v623
        %vm656 = vcmp.ne.s32.totalorder %v624, 0
        %vm657 = vcmp.ne.s32.totalorder %v625, 0
        %vm658 = vcmp.ne.s32.totalorder %v626, 0
        %vm659 = vcmp.ne.s32.totalorder %v627, 0
        %vm660 = vcmp.ne.s32.totalorder %v628, 0
        %vm661 = vcmp.ne.s32.totalorder %v629, 0
        %vm662 = vcmp.ne.s32.totalorder %v630, 0
        %vm663 = vcmp.ne.s32.totalorder %v631, 0
        %vm664 = vcmp.ne.s32.totalorder %v632, 0
        %vm665 = vcmp.ne.s32.totalorder %v633, 0
        %vm666 = vcmp.ne.s32.totalorder %v634, 0
        %vm667 = vcmp.ne.s32.totalorder %v635, 0
        %vm668 = vcmp.ne.s32.totalorder %v636, 0
        %vm669 = vcmp.ne.s32.totalorder %v637, 0
        %vm670 = vcmp.ne.s32.totalorder %v638, 0
        %vm671 = vcmp.ne.s32.totalorder %v639, 0
        %vm672 = vcmp.ne.s32.totalorder %v640, 0
        %vm673 = vcmp.ne.s32.totalorder %v641, 0
        %vm674 = vcmp.ne.s32.totalorder %v642, 0
        %vm675 = vcmp.ne.s32.totalorder %v643, 0
        %vm676 = vcmp.ne.s32.totalorder %v644, 0
        %vm677 = vcmp.ne.s32.totalorder %v645, 0
        %vm678 = vcmp.ne.s32.totalorder %v646, 0
        %vm679 = vcmp.ne.s32.totalorder %v647, 0
        %vm680 = vcmp.ne.s32.totalorder %v648, 0
        %vm681 = vcmp.ne.s32.totalorder %v649, 0
        %vm682 = vcmp.ne.s32.totalorder %v650, 0
        %vm683 = vcmp.ne.s32.totalorder %v651, 0
        %vm684 = vcmp.ne.s32.totalorder %v652, 0
        %vm685 = vcmp.ne.s32.totalorder %v653, 0
        %vm686 = vcmp.ne.s32.totalorder %v654, 0
        %vm687 = vcmp.ne.s32.totalorder %v655, 0
        %v688 = vsel %vm656, %v488, -1e+30
        %v689 = vsel %vm657, %v489, -1e+30
        %v690 = vsel %vm658, %v490, -1e+30
        %v691 = vsel %vm659, %v491, -1e+30
        %v692 = vsel %vm660, %v492, -1e+30
        %v693 = vsel %vm661, %v493, -1e+30
        %v694 = vsel %vm662, %v494, -1e+30
        %v695 = vsel %vm663, %v495, -1e+30
        %v696 = vsel %vm664, %v496, -1e+30
        %v697 = vsel %vm665, %v497, -1e+30
        %v698 = vsel %vm666, %v498, -1e+30
        %v699 = vsel %vm667, %v499, -1e+30
        %v700 = vsel %vm668, %v500, -1e+30
        %v701 = vsel %vm669, %v501, -1e+30
        %v702 = vsel %vm670, %v502, -1e+30
        %v703 = vsel %vm671, %v503, -1e+30
        %v704 = vsel %vm672, %v504, -1e+30
        %v705 = vsel %vm673, %v505, -1e+30
        %v706 = vsel %vm674, %v506, -1e+30
        %v707 = vsel %vm675, %v507, -1e+30
        %v708 = vsel %vm676, %v508, -1e+30
        %v709 = vsel %vm677, %v509, -1e+30
        %v710 = vsel %vm678, %v510, -1e+30
        %v711 = vsel %vm679, %v511, -1e+30
        %v712 = vsel %vm680, %v512, -1e+30
        %v713 = vsel %vm681, %v513, -1e+30
        %v714 = vsel %vm682, %v514, -1e+30
        %v715 = vsel %vm683, %v515, -1e+30
        %v716 = vsel %vm684, %v516, -1e+30
        %v717 = vsel %vm685, %v517, -1e+30
        %v718 = vsel %vm686, %v518, -1e+30
        %v719 = vsel %vm687, %v519, -1e+30
        %v720 = vmax.f32 %v688, %v689
        %721 = vmax.xlane.f32.xlu0 %v720
        %v722 = vpop.xlane.xlu0 %721
        %v723 = vmax.f32 %v690, %v691
        %724 = vmax.xlane.f32.xlu0 %v723
        %v725 = vpop.xlane.xlu0 %724
        %v726 = vmax.f32 %v692, %v693
        %727 = vmax.xlane.f32.xlu0 %v726
        %v728 = vpop.xlane.xlu0 %727
        %v729 = vmax.f32 %v694, %v695
        %730 = vmax.xlane.f32.xlu0 %v729
        %v731 = vpop.xlane.xlu0 %730
        %v732 = vmax.f32 %v696, %v697
        %733 = vmax.xlane.f32.xlu0 %v732
        %v734 = vpop.xlane.xlu0 %733
        %v735 = vmax.f32 %v698, %v699
        %736 = vmax.xlane.f32.xlu0 %v735
        %v737 = vpop.xlane.xlu0 %736
        %v738 = vmax.f32 %v700, %v701
        %739 = vmax.xlane.f32.xlu0 %v738
        %v740 = vpop.xlane.xlu0 %739
        %v741 = vmax.f32 %v702, %v703
        %742 = vmax.xlane.f32.xlu0 %v741
        %v743 = vpop.xlane.xlu0 %742
        %v744 = vmax.f32 %v704, %v705
        %745 = vmax.xlane.f32.xlu0 %v744
        %v746 = vpop.xlane.xlu0 %745
        %v747 = vmax.f32 %v706, %v707
        %748 = vmax.xlane.f32.xlu0 %v747
        %v749 = vpop.xlane.xlu0 %748
        %v750 = vmax.f32 %v708, %v709
        %751 = vmax.xlane.f32.xlu0 %v750
        %v752 = vpop.xlane.xlu0 %751
        %v753 = vmax.f32 %v710, %v711
        %754 = vmax.xlane.f32.xlu0 %v753
        %v755 = vpop.xlane.xlu0 %754
        %v756 = vmax.f32 %v712, %v713
        %757 = vmax.xlane.f32.xlu0 %v756
        %v758 = vpop.xlane.xlu0 %757
        %v759 = vmax.f32 %v714, %v715
        %760 = vmax.xlane.f32.xlu0 %v759
        %v761 = vpop.xlane.xlu0 %760
        %v762 = vmax.f32 %v716, %v717
        %763 = vmax.xlane.f32.xlu0 %v762
        %v764 = vpop.xlane.xlu0 %763
        %v765 = vmax.f32 %v718, %v719
        %766 = vmax.xlane.f32.xlu0 %v765
        %v767 = vpop.xlane.xlu0 %766
        %v768 = vsub.f32 %v688, %v722
        %v769 = vsub.f32 %v689, %v722
        %v770 = vsub.f32 %v690, %v725
        %v771 = vsub.f32 %v691, %v725
        %v772 = vsub.f32 %v692, %v728
        %v773 = vsub.f32 %v693, %v728
        %v774 = vsub.f32 %v694, %v731
        %v775 = vsub.f32 %v695, %v731
        %v776 = vsub.f32 %v696, %v734
        %v777 = vsub.f32 %v697, %v734
        %v778 = vsub.f32 %v698, %v737
        %v779 = vsub.f32 %v699, %v737
        %v780 = vsub.f32 %v700, %v740
        %v781 = vsub.f32 %v701, %v740
        %v782 = vsub.f32 %v702, %v743
        %v783 = vsub.f32 %v703, %v743
        %v784 = vsub.f32 %v704, %v746
        %v785 = vsub.f32 %v705, %v746
        %v786 = vsub.f32 %v706, %v749
        %v787 = vsub.f32 %v707, %v749
        %v788 = vsub.f32 %v708, %v752
        %v789 = vsub.f32 %v709, %v752
        %v790 = vsub.f32 %v710, %v755
        %v791 = vsub.f32 %v711, %v755
        %v792 = vsub.f32 %v712, %v758
        %v793 = vsub.f32 %v713, %v758
        %v794 = vsub.f32 %v714, %v761
        %v795 = vsub.f32 %v715, %v761
        %v796 = vsub.f32 %v716, %v764
        %v797 = vsub.f32 %v717, %v764
        %v798 = vsub.f32 %v718, %v767
        %v799 = vsub.f32 %v719, %v767
        %v800 = vmul.f32 %v768, 1.442695
        %v801 = vpow.pop %v800
        %v802 = vmul.f32 %v769, 1.442695
        %v803 = vpow.pop %v802
        %v804 = vmul.f32 %v770, 1.442695
        %v805 = vpow.pop %v804
        %v806 = vmul.f32 %v771, 1.442695
        %v807 = vpow.pop %v806
        %v808 = vmul.f32 %v772, 1.442695
        %v809 = vpow.pop %v808
        %v810 = vmul.f32 %v773, 1.442695
        %v811 = vpow.pop %v810
        %v812 = vmul.f32 %v774, 1.442695
        %v813 = vpow.pop %v812
        %v814 = vmul.f32 %v775, 1.442695
        %v815 = vpow.pop %v814
        %v816 = vmul.f32 %v776, 1.442695
        %v817 = vpow.pop %v816
        %v818 = vmul.f32 %v777, 1.442695
        %v819 = vpow.pop %v818
        %v820 = vmul.f32 %v778, 1.442695
        %v821 = vpow.pop %v820
        %v822 = vmul.f32 %v779, 1.442695
        %v823 = vpow.pop %v822
        %v824 = vmul.f32 %v780, 1.442695
        %v825 = vpow.pop %v824
        %v826 = vmul.f32 %v781, 1.442695
        %v827 = vpow.pop %v826
        %v828 = vmul.f32 %v782, 1.442695
        %v829 = vpow.pop %v828
        %v830 = vmul.f32 %v783, 1.442695
        %v831 = vpow.pop %v830
        %v832 = vmul.f32 %v784, 1.442695
        %v833 = vpow.pop %v832
        %v834 = vmul.f32 %v785, 1.442695
        %v835 = vpow.pop %v834
        %v836 = vmul.f32 %v786, 1.442695
        %v837 = vpow.pop %v836
        %v838 = vmul.f32 %v787, 1.442695
        %v839 = vpow.pop %v838
        %v840 = vmul.f32 %v788, 1.442695
        %v841 = vpow.pop %v840
        %v842 = vmul.f32 %v789, 1.442695
        %v843 = vpow.pop %v842
        %v844 = vmul.f32 %v790, 1.442695
        %v845 = vpow.pop %v844
        %v846 = vmul.f32 %v791, 1.442695
        %v847 = vpow.pop %v846
        %v848 = vmul.f32 %v792, 1.442695
        %v849 = vpow.pop %v848
        %v850 = vmul.f32 %v793, 1.442695
        %v851 = vpow.pop %v850
        %v852 = vmul.f32 %v794, 1.442695
        %v853 = vpow.pop %v852
        %v854 = vmul.f32 %v795, 1.442695
        %v855 = vpow.pop %v854
        %v856 = vmul.f32 %v796, 1.442695
        %v857 = vpow.pop %v856
        %v858 = vmul.f32 %v797, 1.442695
        %v859 = vpow.pop %v858
        %v860 = vmul.f32 %v798, 1.442695
        %v861 = vpow.pop %v860
        %v862 = vmul.f32 %v799, 1.442695
        %v863 = vpow.pop %v862
        %v864 = vadd.f32 %v801, %v803
        %865 = vadd.xlane.f32.xlu0 %v864
        %v866 = vpop.xlane.xlu0 %865
        %v867 = vadd.f32 %v805, %v807
        %868 = vadd.xlane.f32.xlu0 %v867
        %v869 = vpop.xlane.xlu0 %868
        %v870 = vadd.f32 %v809, %v811
        %871 = vadd.xlane.f32.xlu0 %v870
        %v872 = vpop.xlane.xlu0 %871
        %v873 = vadd.f32 %v813, %v815
        %874 = vadd.xlane.f32.xlu0 %v873
        %v875 = vpop.xlane.xlu0 %874
        %v876 = vadd.f32 %v817, %v819
        %877 = vadd.xlane.f32.xlu0 %v876
        %v878 = vpop.xlane.xlu0 %877
        %v879 = vadd.f32 %v821, %v823
        %880 = vadd.xlane.f32.xlu0 %v879
        %v881 = vpop.xlane.xlu0 %880
        %v882 = vadd.f32 %v825, %v827
        %883 = vadd.xlane.f32.xlu0 %v882
        %v884 = vpop.xlane.xlu0 %883
        %v885 = vadd.f32 %v829, %v831
        %886 = vadd.xlane.f32.xlu0 %v885
        %v887 = vpop.xlane.xlu0 %886
        %v888 = vadd.f32 %v833, %v835
        %889 = vadd.xlane.f32.xlu0 %v888
        %v890 = vpop.xlane.xlu0 %889
        %v891 = vadd.f32 %v837, %v839
        %892 = vadd.xlane.f32.xlu0 %v891
        %v893 = vpop.xlane.xlu0 %892
        %v894 = vadd.f32 %v841, %v843
        %895 = vadd.xlane.f32.xlu0 %v894
        %v896 = vpop.xlane.xlu0 %895
        %v897 = vadd.f32 %v845, %v847
        %898 = vadd.xlane.f32.xlu0 %v897
        %v899 = vpop.xlane.xlu0 %898
        %v900 = vadd.f32 %v849, %v851
        %901 = vadd.xlane.f32.xlu0 %v900
        %v902 = vpop.xlane.xlu0 %901
        %v903 = vadd.f32 %v853, %v855
        %904 = vadd.xlane.f32.xlu0 %v903
        %v905 = vpop.xlane.xlu0 %904
        %v906 = vadd.f32 %v857, %v859
        %907 = vadd.xlane.f32.xlu0 %v906
        %v908 = vpop.xlane.xlu0 %907
        %v909 = vadd.f32 %v861, %v863
        %910 = vadd.xlane.f32.xlu0 %v909
        %v911 = vpop.xlane.xlu0 %910
        %v912 = vrcp.pop %v866
        %v913 = vrcp.pop %v869
        %v914 = vrcp.pop %v872
        %v915 = vrcp.pop %v875
        %v916 = vrcp.pop %v878
        %v917 = vrcp.pop %v881
        %v918 = vrcp.pop %v884
        %v919 = vrcp.pop %v887
        %v920 = vrcp.pop %v890
        %v921 = vrcp.pop %v893
        %v922 = vrcp.pop %v896
        %v923 = vrcp.pop %v899
        %v924 = vrcp.pop %v902
        %v925 = vrcp.pop %v905
        %v926 = vrcp.pop %v908
        %v927 = vrcp.pop %v911
        %v928 = vmul.f32 %v801, %v912
        %v929 = vmul.f32 %v803, %v912
        %v930 = vmul.f32 %v805, %v913
        %v931 = vmul.f32 %v807, %v913
        %v932 = vmul.f32 %v809, %v914
        %v933 = vmul.f32 %v811, %v914
        %v934 = vmul.f32 %v813, %v915
        %v935 = vmul.f32 %v815, %v915
        %v936 = vmul.f32 %v817, %v916
        %v937 = vmul.f32 %v819, %v916
        %v938 = vmul.f32 %v821, %v917
        %v939 = vmul.f32 %v823, %v917
        %v940 = vmul.f32 %v825, %v918
        %v941 = vmul.f32 %v827, %v918
        %v942 = vmul.f32 %v829, %v919
        %v943 = vmul.f32 %v831, %v919
        %v944 = vmul.f32 %v833, %v920
        %v945 = vmul.f32 %v835, %v920
        %v946 = vmul.f32 %v837, %v921
        %v947 = vmul.f32 %v839, %v921
        %v948 = vmul.f32 %v841, %v922
        %v949 = vmul.f32 %v843, %v922
        %v950 = vmul.f32 %v845, %v923
        %v951 = vmul.f32 %v847, %v923
        %v952 = vmul.f32 %v849, %v924
        %v953 = vmul.f32 %v851, %v924
        %v954 = vmul.f32 %v853, %v925
        %v955 = vmul.f32 %v855, %v925
        %v956 = vmul.f32 %v857, %v926
        %v957 = vmul.f32 %v859, %v926
        %v958 = vmul.f32 %v861, %v927
        %v959 = vmul.f32 %v863, %v927
        %v960 = vpack.c.bf16 %v930, %v928
        %v961 = vpack.c.bf16 %v931, %v929
        %v962 = vpack.c.bf16 %v934, %v932
        %v963 = vpack.c.bf16 %v935, %v933
        %v964 = vpack.c.bf16 %v938, %v936
        %v965 = vpack.c.bf16 %v939, %v937
        %v966 = vpack.c.bf16 %v942, %v940
        %v967 = vpack.c.bf16 %v943, %v941
        %v968 = vpack.c.bf16 %v946, %v944
        %v969 = vpack.c.bf16 %v947, %v945
        %v970 = vpack.c.bf16 %v950, %v948
        %v971 = vpack.c.bf16 %v951, %v949
        %v972 = vpack.c.bf16 %v954, %v952
        %v973 = vpack.c.bf16 %v955, %v953
        %v974 = vpack.c.bf16 %v958, %v956
        %v975 = vpack.c.bf16 %v959, %v957
        %v992 = vunpack.c.l.b16 %v960
        %v993 = vunpack.c.l.b16 %v961
        %v994 = vunpack.c.h.b16 %v960
        %v995 = vunpack.c.h.b16 %v961
        %v996 = vunpack.c.l.b16 %v962
        %v997 = vunpack.c.l.b16 %v963
        %v998 = vunpack.c.h.b16 %v962
        %v999 = vunpack.c.h.b16 %v963
        %v1000 = vunpack.c.l.b16 %v964
        %v1001 = vunpack.c.l.b16 %v965
        %v1002 = vunpack.c.h.b16 %v964
        %v1003 = vunpack.c.h.b16 %v965
        %v1004 = vunpack.c.l.b16 %v966
        %v1005 = vunpack.c.l.b16 %v967
        %v1006 = vunpack.c.h.b16 %v966
        %v1007 = vunpack.c.h.b16 %v967
        %v1008 = vunpack.c.l.b16 %v968
        %v1009 = vunpack.c.l.b16 %v969
        %v1010 = vunpack.c.h.b16 %v968
        %v1011 = vunpack.c.h.b16 %v969
        %v1012 = vunpack.c.l.b16 %v970
        %v1013 = vunpack.c.l.b16 %v971
        %v1014 = vunpack.c.h.b16 %v970
        %v1015 = vunpack.c.h.b16 %v971
        %v1016 = vunpack.c.l.b16 %v972
        %v1017 = vunpack.c.l.b16 %v973
        %v1018 = vunpack.c.h.b16 %v972
        %v1019 = vunpack.c.h.b16 %v973
        %v1020 = vunpack.c.l.b16 %v974
        %v1021 = vunpack.c.l.b16 %v975
        %v1022 = vunpack.c.h.b16 %v974
        %v1023 = vunpack.c.h.b16 %v975
        %v1024 = vpack.c.b16 %v993, %v992
        %v1025 = vpack.c.b16 %v995, %v994
        %v1026 = vpack.c.b16 %v997, %v996
        %v1027 = vpack.c.b16 %v999, %v998
        %v1028 = vpack.c.b16 %v1001, %v1000
        %v1029 = vpack.c.b16 %v1003, %v1002
        %v1030 = vpack.c.b16 %v1005, %v1004
        %v1031 = vpack.c.b16 %v1007, %v1006
        %v1032 = vpack.c.b16 %v1009, %v1008
        %v1033 = vpack.c.b16 %v1011, %v1010
        %v1034 = vpack.c.b16 %v1013, %v1012
        %v1035 = vpack.c.b16 %v1015, %v1014
        %v1036 = vpack.c.b16 %v1017, %v1016
        %v1037 = vpack.c.b16 %v1019, %v1018
        %v1038 = vpack.c.b16 %v1021, %v1020
        %v1039 = vpack.c.b16 %v1023, %v1022
        %1056 = vst [vmem:[%s244] sm:$0xff] %v1024
        %1057 = vst [vmem:[%s244 + $0x8] sm:$0xff] %v1025
        %1058 = vst [vmem:[%s244 + $0x10] sm:$0xff] %v1026
        %1059 = vst [vmem:[%s244 + $0x18] sm:$0xff] %v1027
        %1060 = vst [vmem:[%s244 + $0x20] sm:$0xff] %v1028
        %1061 = vst [vmem:[%s244 + $0x28] sm:$0xff] %v1029
        %1062 = vst [vmem:[%s244 + $0x30] sm:$0xff] %v1030
        %1063 = vst [vmem:[%s244 + $0x38] sm:$0xff] %v1031
        %1064 = vst [vmem:[%s244 + $0x40] sm:$0xff] %v1032
        %1065 = vst [vmem:[%s244 + $0x48] sm:$0xff] %v1033
        %1066 = vst [vmem:[%s244 + $0x50] sm:$0xff] %v1034
        %1067 = vst [vmem:[%s244 + $0x58] sm:$0xff] %v1035
        %1068 = vst [vmem:[%s244 + $0x60] sm:$0xff] %v1036
        %1069 = vst [vmem:[%s244 + $0x68] sm:$0xff] %v1037
        %1070 = vst [vmem:[%s244 + $0x70] sm:$0xff] %v1038
        %1071 = vst [vmem:[%s244 + $0x78] sm:$0xff] %v1039
        %v1072 = vld [vmem:[%s0] sm:$0xf]
        %v1073 = vld [vmem:[%s0 + $0x4] sm:$0xf]
        %v1074 = vld [vmem:[%s0 + $0x8] sm:$0xf]
        %v1075 = vld [vmem:[%s0 + $0xc] sm:$0xf]
        %v1076 = vld [vmem:[%s0 + $0x10] sm:$0xf]
        %v1077 = vld [vmem:[%s0 + $0x14] sm:$0xf]
        %v1078 = vld [vmem:[%s0 + $0x18] sm:$0xf]
        %v1079 = vld [vmem:[%s0 + $0x1c] sm:$0xf]
        %v1080 = vld [vmem:[%s0 + $0x20] sm:$0xf]
        %v1081 = vld [vmem:[%s0 + $0x24] sm:$0xf]
        %v1082 = vld [vmem:[%s0 + $0x28] sm:$0xf]
        %v1083 = vld [vmem:[%s0 + $0x2c] sm:$0xf]
        %v1084 = vld [vmem:[%s0 + $0x30] sm:$0xf]
        %v1085 = vld [vmem:[%s0 + $0x34] sm:$0xf]
        %v1086 = vld [vmem:[%s0 + $0x38] sm:$0xf]
        %v1087 = vld [vmem:[%s0 + $0x3c] sm:$0xf]
        %v1088 = vld [vmem:[%s0 + $0x40] sm:$0xf]
        %v1089 = vld [vmem:[%s0 + $0x44] sm:$0xf]
        %v1090 = vld [vmem:[%s0 + $0x48] sm:$0xf]
        %v1091 = vld [vmem:[%s0 + $0x4c] sm:$0xf]
        %v1092 = vld [vmem:[%s0 + $0x50] sm:$0xf]
        %v1093 = vld [vmem:[%s0 + $0x54] sm:$0xf]
        %v1094 = vld [vmem:[%s0 + $0x58] sm:$0xf]
        %v1095 = vld [vmem:[%s0 + $0x5c] sm:$0xf]
        %v1096 = vld [vmem:[%s0 + $0x60] sm:$0xf]
        %v1097 = vld [vmem:[%s0 + $0x64] sm:$0xf]
        %v1098 = vld [vmem:[%s0 + $0x68] sm:$0xf]
        %v1099 = vld [vmem:[%s0 + $0x6c] sm:$0xf]
        %v1100 = vld [vmem:[%s0 + $0x70] sm:$0xf]
        %v1101 = vld [vmem:[%s0 + $0x74] sm:$0xf]
        %v1102 = vld [vmem:[%s0 + $0x78] sm:$0xf]
        %v1103 = vld [vmem:[%s0 + $0x7c] sm:$0xf]
        %v1136 = vunpack.c.l.b16 %v1072
        %v1137 = vunpack.c.l.b16 %v1073
        %v1138 = vunpack.c.l.b16 %v1074
        %v1139 = vunpack.c.l.b16 %v1075
        %v1140 = vunpack.c.l.b16 %v1076
        %v1141 = vunpack.c.l.b16 %v1077
        %v1142 = vunpack.c.l.b16 %v1078
        %v1143 = vunpack.c.l.b16 %v1079
        %v1144 = vunpack.c.l.b16 %v1080
        %v1145 = vunpack.c.l.b16 %v1081
        %v1146 = vunpack.c.l.b16 %v1082
        %v1147 = vunpack.c.l.b16 %v1083
        %v1148 = vunpack.c.l.b16 %v1084
        %v1149 = vunpack.c.l.b16 %v1085
        %v1150 = vunpack.c.l.b16 %v1086
        %v1151 = vunpack.c.l.b16 %v1087
        %v1152 = vunpack.c.l.b16 %v1088
        %v1153 = vunpack.c.l.b16 %v1089
        %v1154 = vunpack.c.l.b16 %v1090
        %v1155 = vunpack.c.l.b16 %v1091
        %v1156 = vunpack.c.l.b16 %v1092
        %v1157 = vunpack.c.l.b16 %v1093
        %v1158 = vunpack.c.l.b16 %v1094
        %v1159 = vunpack.c.l.b16 %v1095
        %v1160 = vunpack.c.l.b16 %v1096
        %v1161 = vunpack.c.l.b16 %v1097
        %v1162 = vunpack.c.l.b16 %v1098
        %v1163 = vunpack.c.l.b16 %v1099
        %v1164 = vunpack.c.l.b16 %v1100
        %v1165 = vunpack.c.l.b16 %v1101
        %v1166 = vunpack.c.l.b16 %v1102
        %v1167 = vunpack.c.l.b16 %v1103
        %v1168 = vpack.c.b16 %v1137, %v1136
        %v1169 = vpack.c.b16 %v1139, %v1138
        %v1170 = vpack.c.b16 %v1141, %v1140
        %v1171 = vpack.c.b16 %v1143, %v1142
        %v1172 = vpack.c.b16 %v1145, %v1144
        %v1173 = vpack.c.b16 %v1147, %v1146
        %v1174 = vpack.c.b16 %v1149, %v1148
        %v1175 = vpack.c.b16 %v1151, %v1150
        %v1176 = vpack.c.b16 %v1153, %v1152
        %v1177 = vpack.c.b16 %v1155, %v1154
        %v1178 = vpack.c.b16 %v1157, %v1156
        %v1179 = vpack.c.b16 %v1159, %v1158
        %v1180 = vpack.c.b16 %v1161, %v1160
        %v1181 = vpack.c.b16 %v1163, %v1162
        %v1182 = vpack.c.b16 %v1165, %v1164
        %v1183 = vpack.c.b16 %v1167, %v1166
        %1200 = vmatprep.subr.bf16.mxu0 0
        %1201 = vmatpush1.bf16.msra.mxu0 %v1168
        %1202 = vmatprep.subr.bf16.mxu0 0
        %1203 = vmatpush1.bf16.msra.mxu0 %v1169
        %1204 = vmatprep.subr.bf16.mxu0 0
        %1205 = vmatpush1.bf16.msra.mxu0 %v1170
        %1206 = vmatprep.subr.bf16.mxu0 0
        %1207 = vmatpush1.bf16.msra.mxu0 %v1171
        %1208 = vmatprep.subr.bf16.mxu0 0
        %1209 = vmatpush1.bf16.msra.mxu0 %v1172
        %1210 = vmatprep.subr.bf16.mxu0 0
        %1211 = vmatpush1.bf16.msra.mxu0 %v1173
        %1212 = vmatprep.subr.bf16.mxu0 0
        %1213 = vmatpush1.bf16.msra.mxu0 %v1174
        %1214 = vmatprep.subr.bf16.mxu0 0
        %1215 = vmatpush1.bf16.msra.mxu0 %v1175
        %1216 = vmatprep.subr.bf16.mxu0 0
        %1217 = vmatpush1.bf16.msra.mxu0 %v1176
        %1218 = vmatprep.subr.bf16.mxu0 0
        %1219 = vmatpush1.bf16.msra.mxu0 %v1177
        %1220 = vmatprep.subr.bf16.mxu0 0
        %1221 = vmatpush1.bf16.msra.mxu0 %v1178
        %1222 = vmatprep.subr.bf16.mxu0 0
        %1223 = vmatpush1.bf16.msra.mxu0 %v1179
        %1224 = vmatprep.subr.bf16.mxu0 0
        %1225 = vmatpush1.bf16.msra.mxu0 %v1180
        %1226 = vmatprep.subr.bf16.mxu0 0
        %1227 = vmatpush1.bf16.msra.mxu0 %v1181
        %1228 = vmatprep.subr.bf16.mxu0 0
        %1229 = vmatpush1.bf16.msra.mxu0 %v1182
        %1230 = vmatprep.subr.bf16.mxu0 0
        %1231 = vmatpush1.bf16.msra.mxu0 %v1183
        %1232 = vmatprep.mubr.bf16.mxu0 %v961
        %1233 = vmatmul.mubr.bf16.gmra.mrb[0].mxu0 %v960
        %v1234 = vpop.f32.mrb[0].mxu0
        %v1235 = vadd.f32 0.0, %v1234
        %v1236 = vpop.f32.mrb[0].mxu0
        %v1237 = vpop.f32.mrb[0].mxu0
        %v1238 = vadd.f32 0.0, %v1237
        %v1239 = vpop.f32.mrb[0].mxu0
        %1240 = vmatprep.mubr.bf16.mxu0 %v963
        %1241 = vmatmul.mubr.bf16.gmra.mrb[0].mxu0 %v962
        %v1242 = vpop.f32.mrb[0].mxu0
        %v1243 = vadd.f32 0.0, %v1242
        %v1244 = vpop.f32.mrb[0].mxu0
        %v1245 = vpop.f32.mrb[0].mxu0
        %v1246 = vadd.f32 0.0, %v1245
        %v1247 = vpop.f32.mrb[0].mxu0
        %1248 = vmatprep.mubr.bf16.mxu0 %v965
        %1249 = vmatmul.mubr.bf16.gmra.mrb[0].mxu0 %v964
        %v1250 = vpop.f32.mrb[0].mxu0
        %v1251 = vadd.f32 0.0, %v1250
        %v1252 = vpop.f32.mrb[0].mxu0
        %v1253 = vpop.f32.mrb[0].mxu0
        %v1254 = vadd.f32 0.0, %v1253
        %v1255 = vpop.f32.mrb[0].mxu0
        %1256 = vmatprep.mubr.bf16.mxu0 %v967
        %1257 = vmatmul.mubr.bf16.gmra.mrb[0].mxu0 %v966
        %v1258 = vpop.f32.mrb[0].mxu0
        %v1259 = vadd.f32 0.0, %v1258
        %v1260 = vpop.f32.mrb[0].mxu0
        %v1261 = vpop.f32.mrb[0].mxu0
        %v1262 = vadd.f32 0.0, %v1261
        %v1263 = vpop.f32.mrb[0].mxu0
        %1264 = vmatprep.mubr.bf16.mxu0 %v969
        %1265 = vmatmul.mubr.bf16.gmra.mrb[0].mxu0 %v968
        %v1266 = vpop.f32.mrb[0].mxu0
        %v1267 = vadd.f32 0.0, %v1266
        %v1268 = vpop.f32.mrb[0].mxu0
        %v1269 = vpop.f32.mrb[0].mxu0
        %v1270 = vadd.f32 0.0, %v1269
        %v1271 = vpop.f32.mrb[0].mxu0
        %1272 = vmatprep.mubr.bf16.mxu0 %v971
        %1273 = vmatmul.mubr.bf16.gmra.mrb[0].mxu0 %v970
        %v1274 = vpop.f32.mrb[0].mxu0
        %v1275 = vadd.f32 0.0, %v1274
        %v1276 = vpop.f32.mrb[0].mxu0
        %v1277 = vpop.f32.mrb[0].mxu0
        %v1278 = vadd.f32 0.0, %v1277
        %v1279 = vpop.f32.mrb[0].mxu0
        %1280 = vmatprep.mubr.bf16.mxu0 %v973
        %1281 = vmatmul.mubr.bf16.gmra.mrb[0].mxu0 %v972
        %v1282 = vpop.f32.mrb[0].mxu0
        %v1283 = vadd.f32 0.0, %v1282
        %v1284 = vpop.f32.mrb[0].mxu0
        %v1285 = vpop.f32.mrb[0].mxu0
        %v1286 = vadd.f32 0.0, %v1285
        %v1287 = vpop.f32.mrb[0].mxu0
        %1288 = vmatprep.mubr.bf16.mxu0 %v975
        %1289 = vmatmul.mubr.bf16.gmra.mrb[0].mxu0 %v974
        %v1290 = vpop.f32.mrb[0].mxu0
        %v1291 = vadd.f32 0.0, %v1290
        %v1292 = vpop.f32.mrb[0].mxu0
        %v1293 = vpop.f32.mrb[0].mxu0
        %v1294 = vadd.f32 0.0, %v1293
        %v1295 = vpop.f32.mrb[0].mxu0
        %1296 = vdwg.mxu0
        %s1297 = scalar_lea.vmem %s1, 1
        %v1298 = vld [vmem:[%s1297] ss:$4 sm:$0x3]
        %v1299 = vld [vmem:[%s249] sm:$0xff]
        %v1300 = vld [vmem:[%s249 + $0x8] sm:$0xff]
        %v1301 = vld [vmem:[%s249 + $0x10] sm:$0xff]
        %v1302 = vld [vmem:[%s249 + $0x18] sm:$0xff]
        %v1303 = vld [vmem:[%s249 + $0x20] sm:$0xff]
        %v1304 = vld [vmem:[%s249 + $0x28] sm:$0xff]
        %v1305 = vld [vmem:[%s249 + $0x30] sm:$0xff]
        %v1306 = vld [vmem:[%s249 + $0x38] sm:$0xff]
        %v1307 = vld [vmem:[%s249 + $0x40] sm:$0xff]
        %v1308 = vld [vmem:[%s249 + $0x48] sm:$0xff]
        %v1309 = vld [vmem:[%s249 + $0x50] sm:$0xff]
        %v1310 = vld [vmem:[%s249 + $0x58] sm:$0xff]
        %v1311 = vld [vmem:[%s249 + $0x60] sm:$0xff]
        %v1312 = vld [vmem:[%s249 + $0x68] sm:$0xff]
        %v1313 = vld [vmem:[%s249 + $0x70] sm:$0xff]
        %v1314 = vld [vmem:[%s249 + $0x78] sm:$0xff]
        %v1316 = vlaneseq
        %v1317 = vshrl.u32 %v1316, 7
        %v1318 = vsub.s32 0, %v1317
        %v1319 = vrot.slane %v1298, %v1318
        %v1320 = vlaneseq
        %v1321 = vshrl.u32 %v1320, 7
        %v1322 = vsub.s32 1, %v1321
        %v1323 = vrot.slane %v1298, %v1322
        %1327 = vset.pattern.permute.xlu0 1
        %1328 = vperm.xlu0 %1327, %v1299
        %v1329 = vpop.permute.xlu0 %1328
        %1332 = vset.pattern.permute.xlu0 1
        %1333 = vperm.xlu0 %1332, %v1300
        %v1334 = vpop.permute.xlu0 %1333
        %1337 = vset.pattern.permute.xlu0 1
        %1338 = vperm.xlu0 %1337, %v1301
        %v1339 = vpop.permute.xlu0 %1338
        %1342 = vset.pattern.permute.xlu0 1
        %1343 = vperm.xlu0 %1342, %v1302
        %v1344 = vpop.permute.xlu0 %1343
        %1347 = vset.pattern.permute.xlu0 1
        %1348 = vperm.xlu0 %1347, %v1303
        %v1349 = vpop.permute.xlu0 %1348
        %1352 = vset.pattern.permute.xlu0 1
        %1353 = vperm.xlu0 %1352, %v1304
        %v1354 = vpop.permute.xlu0 %1353
        %1357 = vset.pattern.permute.xlu0 1
        %1358 = vperm.xlu0 %1357, %v1305
        %v1359 = vpop.permute.xlu0 %1358
        %1362 = vset.pattern.permute.xlu0 1
        %1363 = vperm.xlu0 %1362, %v1306
        %v1364 = vpop.permute.xlu0 %1363
        %1367 = vset.pattern.permute.xlu0 1
        %1368 = vperm.xlu0 %1367, %v1307
        %v1369 = vpop.permute.xlu0 %1368
        %1372 = vset.pattern.permute.xlu0 1
        %1373 = vperm.xlu0 %1372, %v1308
        %v1374 = vpop.permute.xlu0 %1373
        %1377 = vset.pattern.permute.xlu0 1
        %1378 = vperm.xlu0 %1377, %v1309
        %v1379 = vpop.permute.xlu0 %1378
        %1382 = vset.pattern.permute.xlu0 1
        %1383 = vperm.xlu0 %1382, %v1310
        %v1384 = vpop.permute.xlu0 %1383
        %1387 = vset.pattern.permute.xlu0 1
        %1388 = vperm.xlu0 %1387, %v1311
        %v1389 = vpop.permute.xlu0 %1388
        %1392 = vset.pattern.permute.xlu0 1
        %1393 = vperm.xlu0 %1392, %v1312
        %v1394 = vpop.permute.xlu0 %1393
        %1397 = vset.pattern.permute.xlu0 1
        %1398 = vperm.xlu0 %1397, %v1313
        %v1399 = vpop.permute.xlu0 %1398
        %1402 = vset.pattern.permute.xlu0 1
        %1403 = vperm.xlu0 %1402, %v1314
        %v1404 = vpop.permute.xlu0 %1403
        %v1406 = vadd.f32 %v1319, %v1329
        %v1407 = vadd.f32 %v1323, %v1329
        %v1408 = vadd.f32 %v1319, %v1334
        %v1409 = vadd.f32 %v1323, %v1334
        %v1410 = vadd.f32 %v1319, %v1339
        %v1411 = vadd.f32 %v1323, %v1339
        %v1412 = vadd.f32 %v1319, %v1344
        %v1413 = vadd.f32 %v1323, %v1344
        %v1414 = vadd.f32 %v1319, %v1349
        %v1415 = vadd.f32 %v1323, %v1349
        %v1416 = vadd.f32 %v1319, %v1354
        %v1417 = vadd.f32 %v1323, %v1354
        %v1418 = vadd.f32 %v1319, %v1359
        %v1419 = vadd.f32 %v1323, %v1359
        %v1420 = vadd.f32 %v1319, %v1364
        %v1421 = vadd.f32 %v1323, %v1364
        %v1422 = vadd.f32 %v1319, %v1369
        %v1423 = vadd.f32 %v1323, %v1369
        %v1424 = vadd.f32 %v1319, %v1374
        %v1425 = vadd.f32 %v1323, %v1374
        %v1426 = vadd.f32 %v1319, %v1379
        %v1427 = vadd.f32 %v1323, %v1379
        %v1428 = vadd.f32 %v1319, %v1384
        %v1429 = vadd.f32 %v1323, %v1384
        %v1430 = vadd.f32 %v1319, %v1389
        %v1431 = vadd.f32 %v1323, %v1389
        %v1432 = vadd.f32 %v1319, %v1394
        %v1433 = vadd.f32 %v1323, %v1394
        %v1434 = vadd.f32 %v1319, %v1399
        %v1435 = vadd.f32 %v1323, %v1399
        %v1436 = vadd.f32 %v1319, %v1404
        %v1437 = vadd.f32 %v1323, %v1404
        %vm1438 = vcmp.ge.f32.partialorder %v1406, 0.0
        %vm1439 = vcmp.ge.f32.partialorder %v1407, 0.0
        %vm1440 = vcmp.ge.f32.partialorder %v1408, 0.0
        %vm1441 = vcmp.ge.f32.partialorder %v1409, 0.0
        %vm1442 = vcmp.ge.f32.partialorder %v1410, 0.0
        %vm1443 = vcmp.ge.f32.partialorder %v1411, 0.0
        %vm1444 = vcmp.ge.f32.partialorder %v1412, 0.0
        %vm1445 = vcmp.ge.f32.partialorder %v1413, 0.0
        %vm1446 = vcmp.ge.f32.partialorder %v1414, 0.0
        %vm1447 = vcmp.ge.f32.partialorder %v1415, 0.0
        %vm1448 = vcmp.ge.f32.partialorder %v1416, 0.0
        %vm1449 = vcmp.ge.f32.partialorder %v1417, 0.0
        %vm1450 = vcmp.ge.f32.partialorder %v1418, 0.0
        %vm1451 = vcmp.ge.f32.partialorder %v1419, 0.0
        %vm1452 = vcmp.ge.f32.partialorder %v1420, 0.0
        %vm1453 = vcmp.ge.f32.partialorder %v1421, 0.0
        %vm1454 = vcmp.ge.f32.partialorder %v1422, 0.0
        %vm1455 = vcmp.ge.f32.partialorder %v1423, 0.0
        %vm1456 = vcmp.ge.f32.partialorder %v1424, 0.0
        %vm1457 = vcmp.ge.f32.partialorder %v1425, 0.0
        %vm1458 = vcmp.ge.f32.partialorder %v1426, 0.0
        %vm1459 = vcmp.ge.f32.partialorder %v1427, 0.0
        %vm1460 = vcmp.ge.f32.partialorder %v1428, 0.0
        %vm1461 = vcmp.ge.f32.partialorder %v1429, 0.0
        %vm1462 = vcmp.ge.f32.partialorder %v1430, 0.0
        %vm1463 = vcmp.ge.f32.partialorder %v1431, 0.0
        %vm1464 = vcmp.ge.f32.partialorder %v1432, 0.0
        %vm1465 = vcmp.ge.f32.partialorder %v1433, 0.0
        %vm1466 = vcmp.ge.f32.partialorder %v1434, 0.0
        %vm1467 = vcmp.ge.f32.partialorder %v1435, 0.0
        %vm1468 = vcmp.ge.f32.partialorder %v1436, 0.0
        %vm1469 = vcmp.ge.f32.partialorder %v1437, 0.0
        %v1470 = vmul.f32 %v1406, 0.2
        %v1471 = vmul.f32 %v1407, 0.2
        %v1472 = vmul.f32 %v1408, 0.2
        %v1473 = vmul.f32 %v1409, 0.2
        %v1474 = vmul.f32 %v1410, 0.2
        %v1475 = vmul.f32 %v1411, 0.2
        %v1476 = vmul.f32 %v1412, 0.2
        %v1477 = vmul.f32 %v1413, 0.2
        %v1478 = vmul.f32 %v1414, 0.2
        %v1479 = vmul.f32 %v1415, 0.2
        %v1480 = vmul.f32 %v1416, 0.2
        %v1481 = vmul.f32 %v1417, 0.2
        %v1482 = vmul.f32 %v1418, 0.2
        %v1483 = vmul.f32 %v1419, 0.2
        %v1484 = vmul.f32 %v1420, 0.2
        %v1485 = vmul.f32 %v1421, 0.2
        %v1486 = vmul.f32 %v1422, 0.2
        %v1487 = vmul.f32 %v1423, 0.2
        %v1488 = vmul.f32 %v1424, 0.2
        %v1489 = vmul.f32 %v1425, 0.2
        %v1490 = vmul.f32 %v1426, 0.2
        %v1491 = vmul.f32 %v1427, 0.2
        %v1492 = vmul.f32 %v1428, 0.2
        %v1493 = vmul.f32 %v1429, 0.2
        %v1494 = vmul.f32 %v1430, 0.2
        %v1495 = vmul.f32 %v1431, 0.2
        %v1496 = vmul.f32 %v1432, 0.2
        %v1497 = vmul.f32 %v1433, 0.2
        %v1498 = vmul.f32 %v1434, 0.2
        %v1499 = vmul.f32 %v1435, 0.2
        %v1500 = vmul.f32 %v1436, 0.2
        %v1501 = vmul.f32 %v1437, 0.2
        %v1502 = vsel %vm1438, %v1406, %v1470
        %v1503 = vsel %vm1439, %v1407, %v1471
        %v1504 = vsel %vm1440, %v1408, %v1472
        %v1505 = vsel %vm1441, %v1409, %v1473
        %v1506 = vsel %vm1442, %v1410, %v1474
        %v1507 = vsel %vm1443, %v1411, %v1475
        %v1508 = vsel %vm1444, %v1412, %v1476
        %v1509 = vsel %vm1445, %v1413, %v1477
        %v1510 = vsel %vm1446, %v1414, %v1478
        %v1511 = vsel %vm1447, %v1415, %v1479
        %v1512 = vsel %vm1448, %v1416, %v1480
        %v1513 = vsel %vm1449, %v1417, %v1481
        %v1514 = vsel %vm1450, %v1418, %v1482
        %v1515 = vsel %vm1451, %v1419, %v1483
        %v1516 = vsel %vm1452, %v1420, %v1484
        %v1517 = vsel %vm1453, %v1421, %v1485
        %v1518 = vsel %vm1454, %v1422, %v1486
        %v1519 = vsel %vm1455, %v1423, %v1487
        %v1520 = vsel %vm1456, %v1424, %v1488
        %v1521 = vsel %vm1457, %v1425, %v1489
        %v1522 = vsel %vm1458, %v1426, %v1490
        %v1523 = vsel %vm1459, %v1427, %v1491
        %v1524 = vsel %vm1460, %v1428, %v1492
        %v1525 = vsel %vm1461, %v1429, %v1493
        %v1526 = vsel %vm1462, %v1430, %v1494
        %v1527 = vsel %vm1463, %v1431, %v1495
        %v1528 = vsel %vm1464, %v1432, %v1496
        %v1529 = vsel %vm1465, %v1433, %v1497
        %v1530 = vsel %vm1466, %v1434, %v1498
        %v1531 = vsel %vm1467, %v1435, %v1499
        %v1532 = vsel %vm1468, %v1436, %v1500
        %v1533 = vsel %vm1469, %v1437, %v1501
        %v1534 = vsel %vm656, %v1502, -1e+30
        %v1535 = vsel %vm657, %v1503, -1e+30
        %v1536 = vsel %vm658, %v1504, -1e+30
        %v1537 = vsel %vm659, %v1505, -1e+30
        %v1538 = vsel %vm660, %v1506, -1e+30
        %v1539 = vsel %vm661, %v1507, -1e+30
        %v1540 = vsel %vm662, %v1508, -1e+30
        %v1541 = vsel %vm663, %v1509, -1e+30
        %v1542 = vsel %vm664, %v1510, -1e+30
        %v1543 = vsel %vm665, %v1511, -1e+30
        %v1544 = vsel %vm666, %v1512, -1e+30
        %v1545 = vsel %vm667, %v1513, -1e+30
        %v1546 = vsel %vm668, %v1514, -1e+30
        %v1547 = vsel %vm669, %v1515, -1e+30
        %v1548 = vsel %vm670, %v1516, -1e+30
        %v1549 = vsel %vm671, %v1517, -1e+30
        %v1550 = vsel %vm672, %v1518, -1e+30
        %v1551 = vsel %vm673, %v1519, -1e+30
        %v1552 = vsel %vm674, %v1520, -1e+30
        %v1553 = vsel %vm675, %v1521, -1e+30
        %v1554 = vsel %vm676, %v1522, -1e+30
        %v1555 = vsel %vm677, %v1523, -1e+30
        %v1556 = vsel %vm678, %v1524, -1e+30
        %v1557 = vsel %vm679, %v1525, -1e+30
        %v1558 = vsel %vm680, %v1526, -1e+30
        %v1559 = vsel %vm681, %v1527, -1e+30
        %v1560 = vsel %vm682, %v1528, -1e+30
        %v1561 = vsel %vm683, %v1529, -1e+30
        %v1562 = vsel %vm684, %v1530, -1e+30
        %v1563 = vsel %vm685, %v1531, -1e+30
        %v1564 = vsel %vm686, %v1532, -1e+30
        %v1565 = vsel %vm687, %v1533, -1e+30
        %v1566 = vmax.f32 %v1534, %v1535
        %1567 = vmax.xlane.f32.xlu0 %v1566
        %v1568 = vpop.xlane.xlu0 %1567
        %v1569 = vmax.f32 %v1536, %v1537
        %1570 = vmax.xlane.f32.xlu0 %v1569
        %v1571 = vpop.xlane.xlu0 %1570
        %v1572 = vmax.f32 %v1538, %v1539
        %1573 = vmax.xlane.f32.xlu0 %v1572
        %v1574 = vpop.xlane.xlu0 %1573
        %v1575 = vmax.f32 %v1540, %v1541
        %1576 = vmax.xlane.f32.xlu0 %v1575
        %v1577 = vpop.xlane.xlu0 %1576
        %v1578 = vmax.f32 %v1542, %v1543
        %1579 = vmax.xlane.f32.xlu0 %v1578
        %v1580 = vpop.xlane.xlu0 %1579
        %v1581 = vmax.f32 %v1544, %v1545
        %1582 = vmax.xlane.f32.xlu0 %v1581
        %v1583 = vpop.xlane.xlu0 %1582
        %v1584 = vmax.f32 %v1546, %v1547
        %1585 = vmax.xlane.f32.xlu0 %v1584
        %v1586 = vpop.xlane.xlu0 %1585
        %v1587 = vmax.f32 %v1548, %v1549
        %1588 = vmax.xlane.f32.xlu0 %v1587
        %v1589 = vpop.xlane.xlu0 %1588
        %v1590 = vmax.f32 %v1550, %v1551
        %1591 = vmax.xlane.f32.xlu0 %v1590
        %v1592 = vpop.xlane.xlu0 %1591
        %v1593 = vmax.f32 %v1552, %v1553
        %1594 = vmax.xlane.f32.xlu0 %v1593
        %v1595 = vpop.xlane.xlu0 %1594
        %v1596 = vmax.f32 %v1554, %v1555
        %1597 = vmax.xlane.f32.xlu0 %v1596
        %v1598 = vpop.xlane.xlu0 %1597
        %v1599 = vmax.f32 %v1556, %v1557
        %1600 = vmax.xlane.f32.xlu0 %v1599
        %v1601 = vpop.xlane.xlu0 %1600
        %v1602 = vmax.f32 %v1558, %v1559
        %1603 = vmax.xlane.f32.xlu0 %v1602
        %v1604 = vpop.xlane.xlu0 %1603
        %v1605 = vmax.f32 %v1560, %v1561
        %1606 = vmax.xlane.f32.xlu0 %v1605
        %v1607 = vpop.xlane.xlu0 %1606
        %v1608 = vmax.f32 %v1562, %v1563
        %1609 = vmax.xlane.f32.xlu0 %v1608
        %v1610 = vpop.xlane.xlu0 %1609
        %v1611 = vmax.f32 %v1564, %v1565
        %1612 = vmax.xlane.f32.xlu0 %v1611
        %v1613 = vpop.xlane.xlu0 %1612
        %v1614 = vsub.f32 %v1534, %v1568
        %v1615 = vsub.f32 %v1535, %v1568
        %v1616 = vsub.f32 %v1536, %v1571
        %v1617 = vsub.f32 %v1537, %v1571
        %v1618 = vsub.f32 %v1538, %v1574
        %v1619 = vsub.f32 %v1539, %v1574
        %v1620 = vsub.f32 %v1540, %v1577
        %v1621 = vsub.f32 %v1541, %v1577
        %v1622 = vsub.f32 %v1542, %v1580
        %v1623 = vsub.f32 %v1543, %v1580
        %v1624 = vsub.f32 %v1544, %v1583
        %v1625 = vsub.f32 %v1545, %v1583
        %v1626 = vsub.f32 %v1546, %v1586
        %v1627 = vsub.f32 %v1547, %v1586
        %v1628 = vsub.f32 %v1548, %v1589
        %v1629 = vsub.f32 %v1549, %v1589
        %v1630 = vsub.f32 %v1550, %v1592
        %v1631 = vsub.f32 %v1551, %v1592
        %v1632 = vsub.f32 %v1552, %v1595
        %v1633 = vsub.f32 %v1553, %v1595
        %v1634 = vsub.f32 %v1554, %v1598
        %v1635 = vsub.f32 %v1555, %v1598
        %v1636 = vsub.f32 %v1556, %v1601
        %v1637 = vsub.f32 %v1557, %v1601
        %v1638 = vsub.f32 %v1558, %v1604
        %v1639 = vsub.f32 %v1559, %v1604
        %v1640 = vsub.f32 %v1560, %v1607
        %v1641 = vsub.f32 %v1561, %v1607
        %v1642 = vsub.f32 %v1562, %v1610
        %v1643 = vsub.f32 %v1563, %v1610
        %v1644 = vsub.f32 %v1564, %v1613
        %v1645 = vsub.f32 %v1565, %v1613
        %v1646 = vmul.f32 %v1614, 1.442695
        %v1647 = vpow.pop %v1646
        %v1648 = vmul.f32 %v1615, 1.442695
        %v1649 = vpow.pop %v1648
        %v1650 = vmul.f32 %v1616, 1.442695
        %v1651 = vpow.pop %v1650
        %v1652 = vmul.f32 %v1617, 1.442695
        %v1653 = vpow.pop %v1652
        %v1654 = vmul.f32 %v1618, 1.442695
        %v1655 = vpow.pop %v1654
        %v1656 = vmul.f32 %v1619, 1.442695
        %v1657 = vpow.pop %v1656
        %v1658 = vmul.f32 %v1620, 1.442695
        %v1659 = vpow.pop %v1658
        %v1660 = vmul.f32 %v1621, 1.442695
        %v1661 = vpow.pop %v1660
        %v1662 = vmul.f32 %v1622, 1.442695
        %v1663 = vpow.pop %v1662
        %v1664 = vmul.f32 %v1623, 1.442695
        %v1665 = vpow.pop %v1664
        %v1666 = vmul.f32 %v1624, 1.442695
        %v1667 = vpow.pop %v1666
        %v1668 = vmul.f32 %v1625, 1.442695
        %v1669 = vpow.pop %v1668
        %v1670 = vmul.f32 %v1626, 1.442695
        %v1671 = vpow.pop %v1670
        %v1672 = vmul.f32 %v1627, 1.442695
        %v1673 = vpow.pop %v1672
        %v1674 = vmul.f32 %v1628, 1.442695
        %v1675 = vpow.pop %v1674
        %v1676 = vmul.f32 %v1629, 1.442695
        %v1677 = vpow.pop %v1676
        %v1678 = vmul.f32 %v1630, 1.442695
        %v1679 = vpow.pop %v1678
        %v1680 = vmul.f32 %v1631, 1.442695
        %v1681 = vpow.pop %v1680
        %v1682 = vmul.f32 %v1632, 1.442695
        %v1683 = vpow.pop %v1682
        %v1684 = vmul.f32 %v1633, 1.442695
        %v1685 = vpow.pop %v1684
        %v1686 = vmul.f32 %v1634, 1.442695
        %v1687 = vpow.pop %v1686
        %v1688 = vmul.f32 %v1635, 1.442695
        %v1689 = vpow.pop %v1688
        %v1690 = vmul.f32 %v1636, 1.442695
        %v1691 = vpow.pop %v1690
        %v1692 = vmul.f32 %v1637, 1.442695
        %v1693 = vpow.pop %v1692
        %v1694 = vmul.f32 %v1638, 1.442695
        %v1695 = vpow.pop %v1694
        %v1696 = vmul.f32 %v1639, 1.442695
        %v1697 = vpow.pop %v1696
        %v1698 = vmul.f32 %v1640, 1.442695
        %v1699 = vpow.pop %v1698
        %v1700 = vmul.f32 %v1641, 1.442695
        %v1701 = vpow.pop %v1700
        %v1702 = vmul.f32 %v1642, 1.442695
        %v1703 = vpow.pop %v1702
        %v1704 = vmul.f32 %v1643, 1.442695
        %v1705 = vpow.pop %v1704
        %v1706 = vmul.f32 %v1644, 1.442695
        %v1707 = vpow.pop %v1706
        %v1708 = vmul.f32 %v1645, 1.442695
        %v1709 = vpow.pop %v1708
        %v1710 = vadd.f32 %v1647, %v1649
        %1711 = vadd.xlane.f32.xlu0 %v1710
        %v1712 = vpop.xlane.xlu0 %1711
        %v1713 = vadd.f32 %v1651, %v1653
        %1714 = vadd.xlane.f32.xlu0 %v1713
        %v1715 = vpop.xlane.xlu0 %1714
        %v1716 = vadd.f32 %v1655, %v1657
        %1717 = vadd.xlane.f32.xlu0 %v1716
        %v1718 = vpop.xlane.xlu0 %1717
        %v1719 = vadd.f32 %v1659, %v1661
        %1720 = vadd.xlane.f32.xlu0 %v1719
        %v1721 = vpop.xlane.xlu0 %1720
        %v1722 = vadd.f32 %v1663, %v1665
        %1723 = vadd.xlane.f32.xlu0 %v1722
        %v1724 = vpop.xlane.xlu0 %1723
        %v1725 = vadd.f32 %v1667, %v1669
        %1726 = vadd.xlane.f32.xlu0 %v1725
        %v1727 = vpop.xlane.xlu0 %1726
        %v1728 = vadd.f32 %v1671, %v1673
        %1729 = vadd.xlane.f32.xlu0 %v1728
        %v1730 = vpop.xlane.xlu0 %1729
        %v1731 = vadd.f32 %v1675, %v1677
        %1732 = vadd.xlane.f32.xlu0 %v1731
        %v1733 = vpop.xlane.xlu0 %1732
        %v1734 = vadd.f32 %v1679, %v1681
        %1735 = vadd.xlane.f32.xlu0 %v1734
        %v1736 = vpop.xlane.xlu0 %1735
        %v1737 = vadd.f32 %v1683, %v1685
        %1738 = vadd.xlane.f32.xlu0 %v1737
        %v1739 = vpop.xlane.xlu0 %1738
        %v1740 = vadd.f32 %v1687, %v1689
        %1741 = vadd.xlane.f32.xlu0 %v1740
        %v1742 = vpop.xlane.xlu0 %1741
        %v1743 = vadd.f32 %v1691, %v1693
        %1744 = vadd.xlane.f32.xlu0 %v1743
        %v1745 = vpop.xlane.xlu0 %1744
        %v1746 = vadd.f32 %v1695, %v1697
        %1747 = vadd.xlane.f32.xlu0 %v1746
        %v1748 = vpop.xlane.xlu0 %1747
        %v1749 = vadd.f32 %v1699, %v1701
        %1750 = vadd.xlane.f32.xlu0 %v1749
        %v1751 = vpop.xlane.xlu0 %1750
        %v1752 = vadd.f32 %v1703, %v1705
        %1753 = vadd.xlane.f32.xlu0 %v1752
        %v1754 = vpop.xlane.xlu0 %1753
        %v1755 = vadd.f32 %v1707, %v1709
        %1756 = vadd.xlane.f32.xlu0 %v1755
        %v1757 = vpop.xlane.xlu0 %1756
        %v1758 = vrcp.pop %v1712
        %v1759 = vrcp.pop %v1715
        %v1760 = vrcp.pop %v1718
        %v1761 = vrcp.pop %v1721
        %v1762 = vrcp.pop %v1724
        %v1763 = vrcp.pop %v1727
        %v1764 = vrcp.pop %v1730
        %v1765 = vrcp.pop %v1733
        %v1766 = vrcp.pop %v1736
        %v1767 = vrcp.pop %v1739
        %v1768 = vrcp.pop %v1742
        %v1769 = vrcp.pop %v1745
        %v1770 = vrcp.pop %v1748
        %v1771 = vrcp.pop %v1751
        %v1772 = vrcp.pop %v1754
        %v1773 = vrcp.pop %v1757
        %v1774 = vmul.f32 %v1647, %v1758
        %v1775 = vmul.f32 %v1649, %v1758
        %v1776 = vmul.f32 %v1651, %v1759
        %v1777 = vmul.f32 %v1653, %v1759
        %v1778 = vmul.f32 %v1655, %v1760
        %v1779 = vmul.f32 %v1657, %v1760
        %v1780 = vmul.f32 %v1659, %v1761
        %v1781 = vmul.f32 %v1661, %v1761
        %v1782 = vmul.f32 %v1663, %v1762
        %v1783 = vmul.f32 %v1665, %v1762
        %v1784 = vmul.f32 %v1667, %v1763
        %v1785 = vmul.f32 %v1669, %v1763
        %v1786 = vmul.f32 %v1671, %v1764
        %v1787 = vmul.f32 %v1673, %v1764
        %v1788 = vmul.f32 %v1675, %v1765
        %v1789 = vmul.f32 %v1677, %v1765
        %v1790 = vmul.f32 %v1679, %v1766
        %v1791 = vmul.f32 %v1681, %v1766
        %v1792 = vmul.f32 %v1683, %v1767
        %v1793 = vmul.f32 %v1685, %v1767
        %v1794 = vmul.f32 %v1687, %v1768
        %v1795 = vmul.f32 %v1689, %v1768
        %v1796 = vmul.f32 %v1691, %v1769
        %v1797 = vmul.f32 %v1693, %v1769
        %v1798 = vmul.f32 %v1695, %v1770
        %v1799 = vmul.f32 %v1697, %v1770
        %v1800 = vmul.f32 %v1699, %v1771
        %v1801 = vmul.f32 %v1701, %v1771
        %v1802 = vmul.f32 %v1703, %v1772
        %v1803 = vmul.f32 %v1705, %v1772
        %v1804 = vmul.f32 %v1707, %v1773
        %v1805 = vmul.f32 %v1709, %v1773
        %v1806 = vpack.c.bf16 %v1776, %v1774
        %v1807 = vpack.c.bf16 %v1777, %v1775
        %v1808 = vpack.c.bf16 %v1780, %v1778
        %v1809 = vpack.c.bf16 %v1781, %v1779
        %v1810 = vpack.c.bf16 %v1784, %v1782
        %v1811 = vpack.c.bf16 %v1785, %v1783
        %v1812 = vpack.c.bf16 %v1788, %v1786
        %v1813 = vpack.c.bf16 %v1789, %v1787
        %v1814 = vpack.c.bf16 %v1792, %v1790
        %v1815 = vpack.c.bf16 %v1793, %v1791
        %v1816 = vpack.c.bf16 %v1796, %v1794
        %v1817 = vpack.c.bf16 %v1797, %v1795
        %v1818 = vpack.c.bf16 %v1800, %v1798
        %v1819 = vpack.c.bf16 %v1801, %v1799
        %v1820 = vpack.c.bf16 %v1804, %v1802
        %v1821 = vpack.c.bf16 %v1805, %v1803
        %v1838 = vunpack.c.l.b16 %v1806
        %v1839 = vunpack.c.l.b16 %v1807
        %v1840 = vunpack.c.h.b16 %v1806
        %v1841 = vunpack.c.h.b16 %v1807
        %v1842 = vunpack.c.l.b16 %v1808
        %v1843 = vunpack.c.l.b16 %v1809
        %v1844 = vunpack.c.h.b16 %v1808
        %v1845 = vunpack.c.h.b16 %v1809
        %v1846 = vunpack.c.l.b16 %v1810
        %v1847 = vunpack.c.l.b16 %v1811
        %v1848 = vunpack.c.h.b16 %v1810
        %v1849 = vunpack.c.h.b16 %v1811
        %v1850 = vunpack.c.l.b16 %v1812
        %v1851 = vunpack.c.l.b16 %v1813
        %v1852 = vunpack.c.h.b16 %v1812
        %v1853 = vunpack.c.h.b16 %v1813
        %v1854 = vunpack.c.l.b16 %v1814
        %v1855 = vunpack.c.l.b16 %v1815
        %v1856 = vunpack.c.h.b16 %v1814
        %v1857 = vunpack.c.h.b16 %v1815
        %v1858 = vunpack.c.l.b16 %v1816
        %v1859 = vunpack.c.l.b16 %v1817
        %v1860 = vunpack.c.h.b16 %v1816
        %v1861 = vunpack.c.h.b16 %v1817
        %v1862 = vunpack.c.l.b16 %v1818
        %v1863 = vunpack.c.l.b16 %v1819
        %v1864 = vunpack.c.h.b16 %v1818
        %v1865 = vunpack.c.h.b16 %v1819
        %v1866 = vunpack.c.l.b16 %v1820
        %v1867 = vunpack.c.l.b16 %v1821
        %v1868 = vunpack.c.h.b16 %v1820
        %v1869 = vunpack.c.h.b16 %v1821
        %v1870 = vpack.c.b16 %v1839, %v1838
        %v1871 = vpack.c.b16 %v1841, %v1840
        %v1872 = vpack.c.b16 %v1843, %v1842
        %v1873 = vpack.c.b16 %v1845, %v1844
        %v1874 = vpack.c.b16 %v1847, %v1846
        %v1875 = vpack.c.b16 %v1849, %v1848
        %v1876 = vpack.c.b16 %v1851, %v1850
        %v1877 = vpack.c.b16 %v1853, %v1852
        %v1878 = vpack.c.b16 %v1855, %v1854
        %v1879 = vpack.c.b16 %v1857, %v1856
        %v1880 = vpack.c.b16 %v1859, %v1858
        %v1881 = vpack.c.b16 %v1861, %v1860
        %v1882 = vpack.c.b16 %v1863, %v1862
        %v1883 = vpack.c.b16 %v1865, %v1864
        %v1884 = vpack.c.b16 %v1867, %v1866
        %v1885 = vpack.c.b16 %v1869, %v1868
        %s1902 = scalar_lea.vmem %s244, 128 [#allocation2]
        %1903 = vst [vmem:[%s1902] sm:$0xff] %v1870
        %1904 = vst [vmem:[%s1902 + $0x8] sm:$0xff] %v1871
        %1905 = vst [vmem:[%s1902 + $0x10] sm:$0xff] %v1872
        %1906 = vst [vmem:[%s1902 + $0x18] sm:$0xff] %v1873
        %1907 = vst [vmem:[%s1902 + $0x20] sm:$0xff] %v1874
        %1908 = vst [vmem:[%s1902 + $0x28] sm:$0xff] %v1875
        %1909 = vst [vmem:[%s1902 + $0x30] sm:$0xff] %v1876
        %1910 = vst [vmem:[%s1902 + $0x38] sm:$0xff] %v1877
        %1911 = vst [vmem:[%s1902 + $0x40] sm:$0xff] %v1878
        %1912 = vst [vmem:[%s1902 + $0x48] sm:$0xff] %v1879
        %1913 = vst [vmem:[%s1902 + $0x50] sm:$0xff] %v1880
        %1914 = vst [vmem:[%s1902 + $0x58] sm:$0xff] %v1881
        %1915 = vst [vmem:[%s1902 + $0x60] sm:$0xff] %v1882
        %1916 = vst [vmem:[%s1902 + $0x68] sm:$0xff] %v1883
        %1917 = vst [vmem:[%s1902 + $0x70] sm:$0xff] %v1884
        %1918 = vst [vmem:[%s1902 + $0x78] sm:$0xff] %v1885
        %v1919 = vld [vmem:[%s0] sm:$0xf]
        %v1920 = vld [vmem:[%s0 + $0x4] sm:$0xf]
        %v1921 = vld [vmem:[%s0 + $0x8] sm:$0xf]
        %v1922 = vld [vmem:[%s0 + $0xc] sm:$0xf]
        %v1923 = vld [vmem:[%s0 + $0x10] sm:$0xf]
        %v1924 = vld [vmem:[%s0 + $0x14] sm:$0xf]
        %v1925 = vld [vmem:[%s0 + $0x18] sm:$0xf]
        %v1926 = vld [vmem:[%s0 + $0x1c] sm:$0xf]
        %v1927 = vld [vmem:[%s0 + $0x20] sm:$0xf]
        %v1928 = vld [vmem:[%s0 + $0x24] sm:$0xf]
        %v1929 = vld [vmem:[%s0 + $0x28] sm:$0xf]
        %v1930 = vld [vmem:[%s0 + $0x2c] sm:$0xf]
        %v1931 = vld [vmem:[%s0 + $0x30] sm:$0xf]
        %v1932 = vld [vmem:[%s0 + $0x34] sm:$0xf]
        %v1933 = vld [vmem:[%s0 + $0x38] sm:$0xf]
        %v1934 = vld [vmem:[%s0 + $0x3c] sm:$0xf]
        %v1935 = vld [vmem:[%s0 + $0x40] sm:$0xf]
        %v1936 = vld [vmem:[%s0 + $0x44] sm:$0xf]
        %v1937 = vld [vmem:[%s0 + $0x48] sm:$0xf]
        %v1938 = vld [vmem:[%s0 + $0x4c] sm:$0xf]
        %v1939 = vld [vmem:[%s0 + $0x50] sm:$0xf]
        %v1940 = vld [vmem:[%s0 + $0x54] sm:$0xf]
        %v1941 = vld [vmem:[%s0 + $0x58] sm:$0xf]
        %v1942 = vld [vmem:[%s0 + $0x5c] sm:$0xf]
        %v1943 = vld [vmem:[%s0 + $0x60] sm:$0xf]
        %v1944 = vld [vmem:[%s0 + $0x64] sm:$0xf]
        %v1945 = vld [vmem:[%s0 + $0x68] sm:$0xf]
        %v1946 = vld [vmem:[%s0 + $0x6c] sm:$0xf]
        %v1947 = vld [vmem:[%s0 + $0x70] sm:$0xf]
        %v1948 = vld [vmem:[%s0 + $0x74] sm:$0xf]
        %v1949 = vld [vmem:[%s0 + $0x78] sm:$0xf]
        %v1950 = vld [vmem:[%s0 + $0x7c] sm:$0xf]
        %v1983 = vunpack.c.l.b16 %v1919
        %v1984 = vunpack.c.l.b16 %v1920
        %v1985 = vunpack.c.l.b16 %v1921
        %v1986 = vunpack.c.l.b16 %v1922
        %v1987 = vunpack.c.l.b16 %v1923
        %v1988 = vunpack.c.l.b16 %v1924
        %v1989 = vunpack.c.l.b16 %v1925
        %v1990 = vunpack.c.l.b16 %v1926
        %v1991 = vunpack.c.l.b16 %v1927
        %v1992 = vunpack.c.l.b16 %v1928
        %v1993 = vunpack.c.l.b16 %v1929
        %v1994 = vunpack.c.l.b16 %v1930
        %v1995 = vunpack.c.l.b16 %v1931
        %v1996 = vunpack.c.l.b16 %v1932
        %v1997 = vunpack.c.l.b16 %v1933
        %v1998 = vunpack.c.l.b16 %v1934
        %v1999 = vunpack.c.l.b16 %v1935
        %v2000 = vunpack.c.l.b16 %v1936
        %v2001 = vunpack.c.l.b16 %v1937
        %v2002 = vunpack.c.l.b16 %v1938
        %v2003 = vunpack.c.l.b16 %v1939
        %v2004 = vunpack.c.l.b16 %v1940
        %v2005 = vunpack.c.l.b16 %v1941
        %v2006 = vunpack.c.l.b16 %v1942
        %v2007 = vunpack.c.l.b16 %v1943
        %v2008 = vunpack.c.l.b16 %v1944
        %v2009 = vunpack.c.l.b16 %v1945
        %v2010 = vunpack.c.l.b16 %v1946
        %v2011 = vunpack.c.l.b16 %v1947
        %v2012 = vunpack.c.l.b16 %v1948
        %v2013 = vunpack.c.l.b16 %v1949
        %v2014 = vunpack.c.l.b16 %v1950
        %v2015 = vpack.c.b16 %v1984, %v1983
        %v2016 = vpack.c.b16 %v1986, %v1985
        %v2017 = vpack.c.b16 %v1988, %v1987
        %v2018 = vpack.c.b16 %v1990, %v1989
        %v2019 = vpack.c.b16 %v1992, %v1991
        %v2020 = vpack.c.b16 %v1994, %v1993
        %v2021 = vpack.c.b16 %v1996, %v1995
        %v2022 = vpack.c.b16 %v1998, %v1997
        %v2023 = vpack.c.b16 %v2000, %v1999
        %v2024 = vpack.c.b16 %v2002, %v2001
        %v2025 = vpack.c.b16 %v2004, %v2003
        %v2026 = vpack.c.b16 %v2006, %v2005
        %v2027 = vpack.c.b16 %v2008, %v2007
        %v2028 = vpack.c.b16 %v2010, %v2009
        %v2029 = vpack.c.b16 %v2012, %v2011
        %v2030 = vpack.c.b16 %v2014, %v2013
        %2031 = vrot.lane.b32.xlu0 %v2015, 112
        %v2032 = vpop.permute.xlu0 %2031
        %2033 = vrot.lane.b32.xlu0 %v2016, 112
        %v2034 = vpop.permute.xlu0 %2033
        %2035 = vrot.lane.b32.xlu0 %v2017, 112
        %v2036 = vpop.permute.xlu0 %2035
        %2037 = vrot.lane.b32.xlu0 %v2018, 112
        %v2038 = vpop.permute.xlu0 %2037
        %2039 = vrot.lane.b32.xlu0 %v2019, 112
        %v2040 = vpop.permute.xlu0 %2039
        %2041 = vrot.lane.b32.xlu0 %v2020, 112
        %v2042 = vpop.permute.xlu0 %2041
        %2043 = vrot.lane.b32.xlu0 %v2021, 112
        %v2044 = vpop.permute.xlu0 %2043
        %2045 = vrot.lane.b32.xlu0 %v2022, 112
        %v2046 = vpop.permute.xlu0 %2045
        %2047 = vrot.lane.b32.xlu0 %v2023, 112
        %v2048 = vpop.permute.xlu0 %2047
        %2049 = vrot.lane.b32.xlu0 %v2024, 112
        %v2050 = vpop.permute.xlu0 %2049
        %2051 = vrot.lane.b32.xlu0 %v2025, 112
        %v2052 = vpop.permute.xlu0 %2051
        %2053 = vrot.lane.b32.xlu0 %v2026, 112
        %v2054 = vpop.permute.xlu0 %2053
        %2055 = vrot.lane.b32.xlu0 %v2027, 112
        %v2056 = vpop.permute.xlu0 %2055
        %2057 = vrot.lane.b32.xlu0 %v2028, 112
        %v2058 = vpop.permute.xlu0 %2057
        %2059 = vrot.lane.b32.xlu0 %v2029, 112
        %v2060 = vpop.permute.xlu0 %2059
        %2061 = vrot.lane.b32.xlu0 %v2030, 112
        %v2062 = vpop.permute.xlu0 %2061
        %2079 = vmatprep.subr.bf16.mxu0 0
        %2080 = vmatpush1.bf16.msra.mxu0 %v2032
        %2081 = vmatprep.subr.bf16.mxu0 0
        %2082 = vmatpush1.bf16.msra.mxu0 %v2034
        %2083 = vmatprep.subr.bf16.mxu0 0
        %2084 = vmatpush1.bf16.msra.mxu0 %v2036
        %2085 = vmatprep.subr.bf16.mxu0 0
        %2086 = vmatpush1.bf16.msra.mxu0 %v2038
        %2087 = vmatprep.subr.bf16.mxu0 0
        %2088 = vmatpush1.bf16.msra.mxu0 %v2040
        %2089 = vmatprep.subr.bf16.mxu0 0
        %2090 = vmatpush1.bf16.msra.mxu0 %v2042
        %2091 = vmatprep.subr.bf16.mxu0 0
        %2092 = vmatpush1.bf16.msra.mxu0 %v2044
        %2093 = vmatprep.subr.bf16.mxu0 0
        %2094 = vmatpush1.bf16.msra.mxu0 %v2046
        %2095 = vmatprep.subr.bf16.mxu0 0
        %2096 = vmatpush1.bf16.msra.mxu0 %v2048
        %2097 = vmatprep.subr.bf16.mxu0 0
        %2098 = vmatpush1.bf16.msra.mxu0 %v2050
        %2099 = vmatprep.subr.bf16.mxu0 0
        %2100 = vmatpush1.bf16.msra.mxu0 %v2052
        %2101 = vmatprep.subr.bf16.mxu0 0
        %2102 = vmatpush1.bf16.msra.mxu0 %v2054
        %2103 = vmatprep.subr.bf16.mxu0 0
        %2104 = vmatpush1.bf16.msra.mxu0 %v2056
        %2105 = vmatprep.subr.bf16.mxu0 0
        %2106 = vmatpush1.bf16.msra.mxu0 %v2058
        %2107 = vmatprep.subr.bf16.mxu0 0
        %2108 = vmatpush1.bf16.msra.mxu0 %v2060
        %2109 = vmatprep.subr.bf16.mxu0 0
        %2110 = vmatpush1.bf16.msra.mxu0 %v2062
        %2111 = vmatprep.mubr.bf16.mxu0 %v1807
        %2112 = vmatmul.mubr.bf16.gmra.mrb[0].mxu0 %v1806
        %v2113 = vpop.f32.mrb[0].mxu0
        %v2114 = vadd.f32 0.0, %v2113
        %v2115 = vpop.f32.mrb[0].mxu0
        %v2116 = vpop.f32.mrb[0].mxu0
        %v2117 = vadd.f32 0.0, %v2116
        %v2118 = vpop.f32.mrb[0].mxu0
        %2119 = vmatprep.mubr.bf16.mxu0 %v1809
        %2120 = vmatmul.mubr.bf16.gmra.mrb[0].mxu0 %v1808
        %v2121 = vpop.f32.mrb[0].mxu0
        %v2122 = vadd.f32 0.0, %v2121
        %v2123 = vpop.f32.mrb[0].mxu0
        %v2124 = vpop.f32.mrb[0].mxu0
        %v2125 = vadd.f32 0.0, %v2124
        %v2126 = vpop.f32.mrb[0].mxu0
        %2127 = vmatprep.mubr.bf16.mxu0 %v1811
        %2128 = vmatmul.mubr.bf16.gmra.mrb[0].mxu0 %v1810
        %v2129 = vpop.f32.mrb[0].mxu0
        %v2130 = vadd.f32 0.0, %v2129
        %v2131 = vpop.f32.mrb[0].mxu0
        %v2132 = vpop.f32.mrb[0].mxu0
        %v2133 = vadd.f32 0.0, %v2132
        %v2134 = vpop.f32.mrb[0].mxu0
        %2135 = vmatprep.mubr.bf16.mxu0 %v1813
        %2136 = vmatmul.mubr.bf16.gmra.mrb[0].mxu0 %v1812
        %v2137 = vpop.f32.mrb[0].mxu0
        %v2138 = vadd.f32 0.0, %v2137
        %v2139 = vpop.f32.mrb[0].mxu0
        %v2140 = vpop.f32.mrb[0].mxu0
        %v2141 = vadd.f32 0.0, %v2140
        %v2142 = vpop.f32.mrb[0].mxu0
        %2143 = vmatprep.mubr.bf16.mxu0 %v1815
        %2144 = vmatmul.mubr.bf16.gmra.mrb[0].mxu0 %v1814
        %v2145 = vpop.f32.mrb[0].mxu0
        %v2146 = vadd.f32 0.0, %v2145
        %v2147 = vpop.f32.mrb[0].mxu0
        %v2148 = vpop.f32.mrb[0].mxu0
        %v2149 = vadd.f32 0.0, %v2148
        %v2150 = vpop.f32.mrb[0].mxu0
        %2151 = vmatprep.mubr.bf16.mxu0 %v1817
        %2152 = vmatmul.mubr.bf16.gmra.mrb[0].mxu0 %v1816
        %v2153 = vpop.f32.mrb[0].mxu0
        %v2154 = vadd.f32 0.0, %v2153
        %v2155 = vpop.f32.mrb[0].mxu0
        %v2156 = vpop.f32.mrb[0].mxu0
        %v2157 = vadd.f32 0.0, %v2156
        %v2158 = vpop.f32.mrb[0].mxu0
        %2159 = vmatprep.mubr.bf16.mxu0 %v1819
        %2160 = vmatmul.mubr.bf16.gmra.mrb[0].mxu0 %v1818
        %v2161 = vpop.f32.mrb[0].mxu0
        %v2162 = vadd.f32 0.0, %v2161
        %v2163 = vpop.f32.mrb[0].mxu0
        %v2164 = vpop.f32.mrb[0].mxu0
        %v2165 = vadd.f32 0.0, %v2164
        %v2166 = vpop.f32.mrb[0].mxu0
        %2167 = vmatprep.mubr.bf16.mxu0 %v1821
        %2168 = vmatmul.mubr.bf16.gmra.mrb[0].mxu0 %v1820
        %v2169 = vpop.f32.mrb[0].mxu0
        %v2170 = vadd.f32 0.0, %v2169
        %v2171 = vpop.f32.mrb[0].mxu0
        %v2172 = vpop.f32.mrb[0].mxu0
        %v2173 = vadd.f32 0.0, %v2172
        %v2174 = vpop.f32.mrb[0].mxu0
        %2175 = vdwg.mxu0
        %s2176 = scalar_lea.vmem %s1, 2
        %v2177 = vld [vmem:[%s2176] ss:$4 sm:$0x3]
        %v2178 = vld [vmem:[%s249] sm:$0xff]
        %v2179 = vld [vmem:[%s249 + $0x8] sm:$0xff]
        %v2180 = vld [vmem:[%s249 + $0x10] sm:$0xff]
        %v2181 = vld [vmem:[%s249 + $0x18] sm:$0xff]
        %v2182 = vld [vmem:[%s249 + $0x20] sm:$0xff]
        %v2183 = vld [vmem:[%s249 + $0x28] sm:$0xff]
        %v2184 = vld [vmem:[%s249 + $0x30] sm:$0xff]
        %v2185 = vld [vmem:[%s249 + $0x38] sm:$0xff]
        %v2186 = vld [vmem:[%s249 + $0x40] sm:$0xff]
        %v2187 = vld [vmem:[%s249 + $0x48] sm:$0xff]
        %v2188 = vld [vmem:[%s249 + $0x50] sm:$0xff]
        %v2189 = vld [vmem:[%s249 + $0x58] sm:$0xff]
        %v2190 = vld [vmem:[%s249 + $0x60] sm:$0xff]
        %v2191 = vld [vmem:[%s249 + $0x68] sm:$0xff]
        %v2192 = vld [vmem:[%s249 + $0x70] sm:$0xff]
        %v2193 = vld [vmem:[%s249 + $0x78] sm:$0xff]
        %v2195 = vlaneseq
        %v2196 = vshrl.u32 %v2195, 7
        %v2197 = vsub.s32 0, %v2196
        %v2198 = vrot.slane %v2177, %v2197
        %v2199 = vlaneseq
        %v2200 = vshrl.u32 %v2199, 7
        %v2201 = vsub.s32 1, %v2200
        %v2202 = vrot.slane %v2177, %v2201
        %2206 = vset.pattern.permute.xlu0 2
        %2207 = vperm.xlu0 %2206, %v2178
        %v2208 = vpop.permute.xlu0 %2207
        %2211 = vset.pattern.permute.xlu0 2
        %2212 = vperm.xlu0 %2211, %v2179
        %v2213 = vpop.permute.xlu0 %2212
        %2216 = vset.pattern.permute.xlu0 2
        %2217 = vperm.xlu0 %2216, %v2180
        %v2218 = vpop.permute.xlu0 %2217
        %2221 = vset.pattern.permute.xlu0 2
        %2222 = vperm.xlu0 %2221, %v2181
        %v2223 = vpop.permute.xlu0 %2222
        %2226 = vset.pattern.permute.xlu0 2
        %2227 = vperm.xlu0 %2226, %v2182
        %v2228 = vpop.permute.xlu0 %2227
        %2231 = vset.pattern.permute.xlu0 2
        %2232 = vperm.xlu0 %2231, %v2183
        %v2233 = vpop.permute.xlu0 %2232
        %2236 = vset.pattern.permute.xlu0 2
        %2237 = vperm.xlu0 %2236, %v2184
        %v2238 = vpop.permute.xlu0 %2237
        %2241 = vset.pattern.permute.xlu0 2
        %2242 = vperm.xlu0 %2241, %v2185
        %v2243 = vpop.permute.xlu0 %2242
        %2246 = vset.pattern.permute.xlu0 2
        %2247 = vperm.xlu0 %2246, %v2186
        %v2248 = vpop.permute.xlu0 %2247
        %2251 = vset.pattern.permute.xlu0 2
        %2252 = vperm.xlu0 %2251, %v2187
        %v2253 = vpop.permute.xlu0 %2252
        %2256 = vset.pattern.permute.xlu0 2
        %2257 = vperm.xlu0 %2256, %v2188
        %v2258 = vpop.permute.xlu0 %2257
        %2261 = vset.pattern.permute.xlu0 2
        %2262 = vperm.xlu0 %2261, %v2189
        %v2263 = vpop.permute.xlu0 %2262
        %2266 = vset.pattern.permute.xlu0 2
        %2267 = vperm.xlu0 %2266, %v2190
        %v2268 = vpop.permute.xlu0 %2267
        %2271 = vset.pattern.permute.xlu0 2
        %2272 = vperm.xlu0 %2271, %v2191
        %v2273 = vpop.permute.xlu0 %2272
        %2276 = vset.pattern.permute.xlu0 2
        %2277 = vperm.xlu0 %2276, %v2192
        %v2278 = vpop.permute.xlu0 %2277
        %2281 = vset.pattern.permute.xlu0 2
        %2282 = vperm.xlu0 %2281, %v2193
        %v2283 = vpop.permute.xlu0 %2282
        %v2285 = vadd.f32 %v2198, %v2208
        %v2286 = vadd.f32 %v2202, %v2208
        %v2287 = vadd.f32 %v2198, %v2213
        %v2288 = vadd.f32 %v2202, %v2213
        %v2289 = vadd.f32 %v2198, %v2218
        %v2290 = vadd.f32 %v2202, %v2218
        %v2291 = vadd.f32 %v2198, %v2223
        %v2292 = vadd.f32 %v2202, %v2223
        %v2293 = vadd.f32 %v2198, %v2228
        %v2294 = vadd.f32 %v2202, %v2228
        %v2295 = vadd.f32 %v2198, %v2233
        %v2296 = vadd.f32 %v2202, %v2233
        %v2297 = vadd.f32 %v2198, %v2238
        %v2298 = vadd.f32 %v2202, %v2238
        %v2299 = vadd.f32 %v2198, %v2243
        %v2300 = vadd.f32 %v2202, %v2243
        %v2301 = vadd.f32 %v2198, %v2248
        %v2302 = vadd.f32 %v2202, %v2248
        %v2303 = vadd.f32 %v2198, %v2253
        %v2304 = vadd.f32 %v2202, %v2253
        %v2305 = vadd.f32 %v2198, %v2258
        %v2306 = vadd.f32 %v2202, %v2258
        %v2307 = vadd.f32 %v2198, %v2263
        %v2308 = vadd.f32 %v2202, %v2263
        %v2309 = vadd.f32 %v2198, %v2268
        %v2310 = vadd.f32 %v2202, %v2268
        %v2311 = vadd.f32 %v2198, %v2273
        %v2312 = vadd.f32 %v2202, %v2273
        %v2313 = vadd.f32 %v2198, %v2278
        %v2314 = vadd.f32 %v2202, %v2278
        %v2315 = vadd.f32 %v2198, %v2283
        %v2316 = vadd.f32 %v2202, %v2283
        %vm2317 = vcmp.ge.f32.partialorder %v2285, 0.0
        %vm2318 = vcmp.ge.f32.partialorder %v2286, 0.0
        %vm2319 = vcmp.ge.f32.partialorder %v2287, 0.0
        %vm2320 = vcmp.ge.f32.partialorder %v2288, 0.0
        %vm2321 = vcmp.ge.f32.partialorder %v2289, 0.0
        %vm2322 = vcmp.ge.f32.partialorder %v2290, 0.0
        %vm2323 = vcmp.ge.f32.partialorder %v2291, 0.0
        %vm2324 = vcmp.ge.f32.partialorder %v2292, 0.0
        %vm2325 = vcmp.ge.f32.partialorder %v2293, 0.0
        %vm2326 = vcmp.ge.f32.partialorder %v2294, 0.0
        %vm2327 = vcmp.ge.f32.partialorder %v2295, 0.0
        %vm2328 = vcmp.ge.f32.partialorder %v2296, 0.0
        %vm2329 = vcmp.ge.f32.partialorder %v2297, 0.0
        %vm2330 = vcmp.ge.f32.partialorder %v2298, 0.0
        %vm2331 = vcmp.ge.f32.partialorder %v2299, 0.0
        %vm2332 = vcmp.ge.f32.partialorder %v2300, 0.0
        %vm2333 = vcmp.ge.f32.partialorder %v2301, 0.0
        %vm2334 = vcmp.ge.f32.partialorder %v2302, 0.0
        %vm2335 = vcmp.ge.f32.partialorder %v2303, 0.0
        %vm2336 = vcmp.ge.f32.partialorder %v2304, 0.0
        %vm2337 = vcmp.ge.f32.partialorder %v2305, 0.0
        %vm2338 = vcmp.ge.f32.partialorder %v2306, 0.0
        %vm2339 = vcmp.ge.f32.partialorder %v2307, 0.0
        %vm2340 = vcmp.ge.f32.partialorder %v2308, 0.0
        %vm2341 = vcmp.ge.f32.partialorder %v2309, 0.0
        %vm2342 = vcmp.ge.f32.partialorder %v2310, 0.0
        %vm2343 = vcmp.ge.f32.partialorder %v2311, 0.0
        %vm2344 = vcmp.ge.f32.partialorder %v2312, 0.0
        %vm2345 = vcmp.ge.f32.partialorder %v2313, 0.0
        %vm2346 = vcmp.ge.f32.partialorder %v2314, 0.0
        %vm2347 = vcmp.ge.f32.partialorder %v2315, 0.0
        %vm2348 = vcmp.ge.f32.partialorder %v2316, 0.0
        %v2349 = vmul.f32 %v2285, 0.2
        %v2350 = vmul.f32 %v2286, 0.2
        %v2351 = vmul.f32 %v2287, 0.2
        %v2352 = vmul.f32 %v2288, 0.2
        %v2353 = vmul.f32 %v2289, 0.2
        %v2354 = vmul.f32 %v2290, 0.2
        %v2355 = vmul.f32 %v2291, 0.2
        %v2356 = vmul.f32 %v2292, 0.2
        %v2357 = vmul.f32 %v2293, 0.2
        %v2358 = vmul.f32 %v2294, 0.2
        %v2359 = vmul.f32 %v2295, 0.2
        %v2360 = vmul.f32 %v2296, 0.2
        %v2361 = vmul.f32 %v2297, 0.2
        %v2362 = vmul.f32 %v2298, 0.2
        %v2363 = vmul.f32 %v2299, 0.2
        %v2364 = vmul.f32 %v2300, 0.2
        %v2365 = vmul.f32 %v2301, 0.2
        %v2366 = vmul.f32 %v2302, 0.2
        %v2367 = vmul.f32 %v2303, 0.2
        %v2368 = vmul.f32 %v2304, 0.2
        %v2369 = vmul.f32 %v2305, 0.2
        %v2370 = vmul.f32 %v2306, 0.2
        %v2371 = vmul.f32 %v2307, 0.2
        %v2372 = vmul.f32 %v2308, 0.2
        %v2373 = vmul.f32 %v2309, 0.2
        %v2374 = vmul.f32 %v2310, 0.2
        %v2375 = vmul.f32 %v2311, 0.2
        %v2376 = vmul.f32 %v2312, 0.2
        %v2377 = vmul.f32 %v2313, 0.2
        %v2378 = vmul.f32 %v2314, 0.2
        %v2379 = vmul.f32 %v2315, 0.2
        %v2380 = vmul.f32 %v2316, 0.2
        %v2381 = vsel %vm2317, %v2285, %v2349
        %v2382 = vsel %vm2318, %v2286, %v2350
        %v2383 = vsel %vm2319, %v2287, %v2351
        %v2384 = vsel %vm2320, %v2288, %v2352
        %v2385 = vsel %vm2321, %v2289, %v2353
        %v2386 = vsel %vm2322, %v2290, %v2354
        %v2387 = vsel %vm2323, %v2291, %v2355
        %v2388 = vsel %vm2324, %v2292, %v2356
        %v2389 = vsel %vm2325, %v2293, %v2357
        %v2390 = vsel %vm2326, %v2294, %v2358
        %v2391 = vsel %vm2327, %v2295, %v2359
        %v2392 = vsel %vm2328, %v2296, %v2360
        %v2393 = vsel %vm2329, %v2297, %v2361
        %v2394 = vsel %vm2330, %v2298, %v2362
        %v2395 = vsel %vm2331, %v2299, %v2363
        %v2396 = vsel %vm2332, %v2300, %v2364
        %v2397 = vsel %vm2333, %v2301, %v2365
        %v2398 = vsel %vm2334, %v2302, %v2366
        %v2399 = vsel %vm2335, %v2303, %v2367
        %v2400 = vsel %vm2336, %v2304, %v2368
        %v2401 = vsel %vm2337, %v2305, %v2369
        %v2402 = vsel %vm2338, %v2306, %v2370
        %v2403 = vsel %vm2339, %v2307, %v2371
        %v2404 = vsel %vm2340, %v2308, %v2372
        %v2405 = vsel %vm2341, %v2309, %v2373
        %v2406 = vsel %vm2342, %v2310, %v2374
        %v2407 = vsel %vm2343, %v2311, %v2375
        %v2408 = vsel %vm2344, %v2312, %v2376
        %v2409 = vsel %vm2345, %v2313, %v2377
        %v2410 = vsel %vm2346, %v2314, %v2378
        %v2411 = vsel %vm2347, %v2315, %v2379
        %v2412 = vsel %vm2348, %v2316, %v2380
        %v2413 = vsel %vm656, %v2381, -1e+30
        %v2414 = vsel %vm657, %v2382, -1e+30
        %v2415 = vsel %vm658, %v2383, -1e+30
        %v2416 = vsel %vm659, %v2384, -1e+30
        %v2417 = vsel %vm660, %v2385, -1e+30
        %v2418 = vsel %vm661, %v2386, -1e+30
        %v2419 = vsel %vm662, %v2387, -1e+30
        %v2420 = vsel %vm663, %v2388, -1e+30
        %v2421 = vsel %vm664, %v2389, -1e+30
        %v2422 = vsel %vm665, %v2390, -1e+30
        %v2423 = vsel %vm666, %v2391, -1e+30
        %v2424 = vsel %vm667, %v2392, -1e+30
        %v2425 = vsel %vm668, %v2393, -1e+30
        %v2426 = vsel %vm669, %v2394, -1e+30
        %v2427 = vsel %vm670, %v2395, -1e+30
        %v2428 = vsel %vm671, %v2396, -1e+30
        %v2429 = vsel %vm672, %v2397, -1e+30
        %v2430 = vsel %vm673, %v2398, -1e+30
        %v2431 = vsel %vm674, %v2399, -1e+30
        %v2432 = vsel %vm675, %v2400, -1e+30
        %v2433 = vsel %vm676, %v2401, -1e+30
        %v2434 = vsel %vm677, %v2402, -1e+30
        %v2435 = vsel %vm678, %v2403, -1e+30
        %v2436 = vsel %vm679, %v2404, -1e+30
        %v2437 = vsel %vm680, %v2405, -1e+30
        %v2438 = vsel %vm681, %v2406, -1e+30
        %v2439 = vsel %vm682, %v2407, -1e+30
        %v2440 = vsel %vm683, %v2408, -1e+30
        %v2441 = vsel %vm684, %v2409, -1e+30
        %v2442 = vsel %vm685, %v2410, -1e+30
        %v2443 = vsel %vm686, %v2411, -1e+30
        %v2444 = vsel %vm687, %v2412, -1e+30
        %v2445 = vmax.f32 %v2413, %v2414
        %2446 = vmax.xlane.f32.xlu0 %v2445
        %v2447 = vpop.xlane.xlu0 %2446
        %v2448 = vmax.f32 %v2415, %v2416
        %2449 = vmax.xlane.f32.xlu0 %v2448
        %v2450 = vpop.xlane.xlu0 %2449
        %v2451 = vmax.f32 %v2417, %v2418
        %2452 = vmax.xlane.f32.xlu0 %v2451
        %v2453 = vpop.xlane.xlu0 %2452
        %v2454 = vmax.f32 %v2419, %v2420
        %2455 = vmax.xlane.f32.xlu0 %v2454
        %v2456 = vpop.xlane.xlu0 %2455
        %v2457 = vmax.f32 %v2421, %v2422
        %2458 = vmax.xlane.f32.xlu0 %v2457
        %v2459 = vpop.xlane.xlu0 %2458
        %v2460 = vmax.f32 %v2423, %v2424
        %2461 = vmax.xlane.f32.xlu0 %v2460
        %v2462 = vpop.xlane.xlu0 %2461
        %v2463 = vmax.f32 %v2425, %v2426
        %2464 = vmax.xlane.f32.xlu0 %v2463
        %v2465 = vpop.xlane.xlu0 %2464
        %v2466 = vmax.f32 %v2427, %v2428
        %2467 = vmax.xlane.f32.xlu0 %v2466
        %v2468 = vpop.xlane.xlu0 %2467
        %v2469 = vmax.f32 %v2429, %v2430
        %2470 = vmax.xlane.f32.xlu0 %v2469
        %v2471 = vpop.xlane.xlu0 %2470
        %v2472 = vmax.f32 %v2431, %v2432
        %2473 = vmax.xlane.f32.xlu0 %v2472
        %v2474 = vpop.xlane.xlu0 %2473
        %v2475 = vmax.f32 %v2433, %v2434
        %2476 = vmax.xlane.f32.xlu0 %v2475
        %v2477 = vpop.xlane.xlu0 %2476
        %v2478 = vmax.f32 %v2435, %v2436
        %2479 = vmax.xlane.f32.xlu0 %v2478
        %v2480 = vpop.xlane.xlu0 %2479
        %v2481 = vmax.f32 %v2437, %v2438
        %2482 = vmax.xlane.f32.xlu0 %v2481
        %v2483 = vpop.xlane.xlu0 %2482
        %v2484 = vmax.f32 %v2439, %v2440
        %2485 = vmax.xlane.f32.xlu0 %v2484
        %v2486 = vpop.xlane.xlu0 %2485
        %v2487 = vmax.f32 %v2441, %v2442
        %2488 = vmax.xlane.f32.xlu0 %v2487
        %v2489 = vpop.xlane.xlu0 %2488
        %v2490 = vmax.f32 %v2443, %v2444
        %2491 = vmax.xlane.f32.xlu0 %v2490
        %v2492 = vpop.xlane.xlu0 %2491
        %v2493 = vsub.f32 %v2413, %v2447
        %v2494 = vsub.f32 %v2414, %v2447
        %v2495 = vsub.f32 %v2415, %v2450
        %v2496 = vsub.f32 %v2416, %v2450
        %v2497 = vsub.f32 %v2417, %v2453
        %v2498 = vsub.f32 %v2418, %v2453
        %v2499 = vsub.f32 %v2419, %v2456
        %v2500 = vsub.f32 %v2420, %v2456
        %v2501 = vsub.f32 %v2421, %v2459
        %v2502 = vsub.f32 %v2422, %v2459
        %v2503 = vsub.f32 %v2423, %v2462
        %v2504 = vsub.f32 %v2424, %v2462
        %v2505 = vsub.f32 %v2425, %v2465
        %v2506 = vsub.f32 %v2426, %v2465
        %v2507 = vsub.f32 %v2427, %v2468
        %v2508 = vsub.f32 %v2428, %v2468
        %v2509 = vsub.f32 %v2429, %v2471
        %v2510 = vsub.f32 %v2430, %v2471
        %v2511 = vsub.f32 %v2431, %v2474
        %v2512 = vsub.f32 %v2432, %v2474
        %v2513 = vsub.f32 %v2433, %v2477
        %v2514 = vsub.f32 %v2434, %v2477
        %v2515 = vsub.f32 %v2435, %v2480
        %v2516 = vsub.f32 %v2436, %v2480
        %v2517 = vsub.f32 %v2437, %v2483
        %v2518 = vsub.f32 %v2438, %v2483
        %v2519 = vsub.f32 %v2439, %v2486
        %v2520 = vsub.f32 %v2440, %v2486
        %v2521 = vsub.f32 %v2441, %v2489
        %v2522 = vsub.f32 %v2442, %v2489
        %v2523 = vsub.f32 %v2443, %v2492
        %v2524 = vsub.f32 %v2444, %v2492
        %v2525 = vmul.f32 %v2493, 1.442695
        %v2526 = vpow.pop %v2525
        %v2527 = vmul.f32 %v2494, 1.442695
        %v2528 = vpow.pop %v2527
        %v2529 = vmul.f32 %v2495, 1.442695
        %v2530 = vpow.pop %v2529
        %v2531 = vmul.f32 %v2496, 1.442695
        %v2532 = vpow.pop %v2531
        %v2533 = vmul.f32 %v2497, 1.442695
        %v2534 = vpow.pop %v2533
        %v2535 = vmul.f32 %v2498, 1.442695
        %v2536 = vpow.pop %v2535
        %v2537 = vmul.f32 %v2499, 1.442695
        %v2538 = vpow.pop %v2537
        %v2539 = vmul.f32 %v2500, 1.442695
        %v2540 = vpow.pop %v2539
        %v2541 = vmul.f32 %v2501, 1.442695
        %v2542 = vpow.pop %v2541
        %v2543 = vmul.f32 %v2502, 1.442695
        %v2544 = vpow.pop %v2543
        %v2545 = vmul.f32 %v2503, 1.442695
        %v2546 = vpow.pop %v2545
        %v2547 = vmul.f32 %v2504, 1.442695
        %v2548 = vpow.pop %v2547
        %v2549 = vmul.f32 %v2505, 1.442695
        %v2550 = vpow.pop %v2549
        %v2551 = vmul.f32 %v2506, 1.442695
        %v2552 = vpow.pop %v2551
        %v2553 = vmul.f32 %v2507, 1.442695
        %v2554 = vpow.pop %v2553
        %v2555 = vmul.f32 %v2508, 1.442695
        %v2556 = vpow.pop %v2555
        %v2557 = vmul.f32 %v2509, 1.442695
        %v2558 = vpow.pop %v2557
        %v2559 = vmul.f32 %v2510, 1.442695
        %v2560 = vpow.pop %v2559
        %v2561 = vmul.f32 %v2511, 1.442695
        %v2562 = vpow.pop %v2561
        %v2563 = vmul.f32 %v2512, 1.442695
        %v2564 = vpow.pop %v2563
        %v2565 = vmul.f32 %v2513, 1.442695
        %v2566 = vpow.pop %v2565
        %v2567 = vmul.f32 %v2514, 1.442695
        %v2568 = vpow.pop %v2567
        %v2569 = vmul.f32 %v2515, 1.442695
        %v2570 = vpow.pop %v2569
        %v2571 = vmul.f32 %v2516, 1.442695
        %v2572 = vpow.pop %v2571
        %v2573 = vmul.f32 %v2517, 1.442695
        %v2574 = vpow.pop %v2573
        %v2575 = vmul.f32 %v2518, 1.442695
        %v2576 = vpow.pop %v2575
        %v2577 = vmul.f32 %v2519, 1.442695
        %v2578 = vpow.pop %v2577
        %v2579 = vmul.f32 %v2520, 1.442695
        %v2580 = vpow.pop %v2579
        %v2581 = vmul.f32 %v2521, 1.442695
        %v2582 = vpow.pop %v2581
        %v2583 = vmul.f32 %v2522, 1.442695
        %v2584 = vpow.pop %v2583
        %v2585 = vmul.f32 %v2523, 1.442695
        %v2586 = vpow.pop %v2585
        %v2587 = vmul.f32 %v2524, 1.442695
        %v2588 = vpow.pop %v2587
        %v2589 = vadd.f32 %v2526, %v2528
        %2590 = vadd.xlane.f32.xlu0 %v2589
        %v2591 = vpop.xlane.xlu0 %2590
        %v2592 = vadd.f32 %v2530, %v2532
        %2593 = vadd.xlane.f32.xlu0 %v2592
        %v2594 = vpop.xlane.xlu0 %2593
        %v2595 = vadd.f32 %v2534, %v2536
        %2596 = vadd.xlane.f32.xlu0 %v2595
        %v2597 = vpop.xlane.xlu0 %2596
        %v2598 = vadd.f32 %v2538, %v2540
        %2599 = vadd.xlane.f32.xlu0 %v2598
        %v2600 = vpop.xlane.xlu0 %2599
        %v2601 = vadd.f32 %v2542, %v2544
        %2602 = vadd.xlane.f32.xlu0 %v2601
        %v2603 = vpop.xlane.xlu0 %2602
        %v2604 = vadd.f32 %v2546, %v2548
        %2605 = vadd.xlane.f32.xlu0 %v2604
        %v2606 = vpop.xlane.xlu0 %2605
        %v2607 = vadd.f32 %v2550, %v2552
        %2608 = vadd.xlane.f32.xlu0 %v2607
        %v2609 = vpop.xlane.xlu0 %2608
        %v2610 = vadd.f32 %v2554, %v2556
        %2611 = vadd.xlane.f32.xlu0 %v2610
        %v2612 = vpop.xlane.xlu0 %2611
        %v2613 = vadd.f32 %v2558, %v2560
        %2614 = vadd.xlane.f32.xlu0 %v2613
        %v2615 = vpop.xlane.xlu0 %2614
        %v2616 = vadd.f32 %v2562, %v2564
        %2617 = vadd.xlane.f32.xlu0 %v2616
        %v2618 = vpop.xlane.xlu0 %2617
        %v2619 = vadd.f32 %v2566, %v2568
        %2620 = vadd.xlane.f32.xlu0 %v2619
        %v2621 = vpop.xlane.xlu0 %2620
        %v2622 = vadd.f32 %v2570, %v2572
        %2623 = vadd.xlane.f32.xlu0 %v2622
        %v2624 = vpop.xlane.xlu0 %2623
        %v2625 = vadd.f32 %v2574, %v2576
        %2626 = vadd.xlane.f32.xlu0 %v2625
        %v2627 = vpop.xlane.xlu0 %2626
        %v2628 = vadd.f32 %v2578, %v2580
        %2629 = vadd.xlane.f32.xlu0 %v2628
        %v2630 = vpop.xlane.xlu0 %2629
        %v2631 = vadd.f32 %v2582, %v2584
        %2632 = vadd.xlane.f32.xlu0 %v2631
        %v2633 = vpop.xlane.xlu0 %2632
        %v2634 = vadd.f32 %v2586, %v2588
        %2635 = vadd.xlane.f32.xlu0 %v2634
        %v2636 = vpop.xlane.xlu0 %2635
        %v2637 = vrcp.pop %v2591
        %v2638 = vrcp.pop %v2594
        %v2639 = vrcp.pop %v2597
        %v2640 = vrcp.pop %v2600
        %v2641 = vrcp.pop %v2603
        %v2642 = vrcp.pop %v2606
        %v2643 = vrcp.pop %v2609
        %v2644 = vrcp.pop %v2612
        %v2645 = vrcp.pop %v2615
        %v2646 = vrcp.pop %v2618
        %v2647 = vrcp.pop %v2621
        %v2648 = vrcp.pop %v2624
        %v2649 = vrcp.pop %v2627
        %v2650 = vrcp.pop %v2630
        %v2651 = vrcp.pop %v2633
        %v2652 = vrcp.pop %v2636
        %v2653 = vmul.f32 %v2526, %v2637
        %v2654 = vmul.f32 %v2528, %v2637
        %v2655 = vmul.f32 %v2530, %v2638
        %v2656 = vmul.f32 %v2532, %v2638
        %v2657 = vmul.f32 %v2534, %v2639
        %v2658 = vmul.f32 %v2536, %v2639
        %v2659 = vmul.f32 %v2538, %v2640
        %v2660 = vmul.f32 %v2540, %v2640
        %v2661 = vmul.f32 %v2542, %v2641
        %v2662 = vmul.f32 %v2544, %v2641
        %v2663 = vmul.f32 %v2546, %v2642
        %v2664 = vmul.f32 %v2548, %v2642
        %v2665 = vmul.f32 %v2550, %v2643
        %v2666 = vmul.f32 %v2552, %v2643
        %v2667 = vmul.f32 %v2554, %v2644
        %v2668 = vmul.f32 %v2556, %v2644
        %v2669 = vmul.f32 %v2558, %v2645
        %v2670 = vmul.f32 %v2560, %v2645
        %v2671 = vmul.f32 %v2562, %v2646
        %v2672 = vmul.f32 %v2564, %v2646
        %v2673 = vmul.f32 %v2566, %v2647
        %v2674 = vmul.f32 %v2568, %v2647
        %v2675 = vmul.f32 %v2570, %v2648
        %v2676 = vmul.f32 %v2572, %v2648
        %v2677 = vmul.f32 %v2574, %v2649
        %v2678 = vmul.f32 %v2576, %v2649
        %v2679 = vmul.f32 %v2578, %v2650
        %v2680 = vmul.f32 %v2580, %v2650
        %v2681 = vmul.f32 %v2582, %v2651
        %v2682 = vmul.f32 %v2584, %v2651
        %v2683 = vmul.f32 %v2586, %v2652
        %v2684 = vmul.f32 %v2588, %v2652
        %v2685 = vpack.c.bf16 %v2655, %v2653
        %v2686 = vpack.c.bf16 %v2656, %v2654
        %v2687 = vpack.c.bf16 %v2659, %v2657
        %v2688 = vpack.c.bf16 %v2660, %v2658
        %v2689 = vpack.c.bf16 %v2663, %v2661
        %v2690 = vpack.c.bf16 %v2664, %v2662
        %v2691 = vpack.c.bf16 %v2667, %v2665
        %v2692 = vpack.c.bf16 %v2668, %v2666
        %v2693 = vpack.c.bf16 %v2671, %v2669
        %v2694 = vpack.c.bf16 %v2672, %v2670
        %v2695 = vpack.c.bf16 %v2675, %v2673
        %v2696 = vpack.c.bf16 %v2676, %v2674
        %v2697 = vpack.c.bf16 %v2679, %v2677
        %v2698 = vpack.c.bf16 %v2680, %v2678
        %v2699 = vpack.c.bf16 %v2683, %v2681
        %v2700 = vpack.c.bf16 %v2684, %v2682
        %v2717 = vunpack.c.l.b16 %v2685
        %v2718 = vunpack.c.l.b16 %v2686
        %v2719 = vunpack.c.h.b16 %v2685
        %v2720 = vunpack.c.h.b16 %v2686
        %v2721 = vunpack.c.l.b16 %v2687
        %v2722 = vunpack.c.l.b16 %v2688
        %v2723 = vunpack.c.h.b16 %v2687
        %v2724 = vunpack.c.h.b16 %v2688
        %v2725 = vunpack.c.l.b16 %v2689
        %v2726 = vunpack.c.l.b16 %v2690
        %v2727 = vunpack.c.h.b16 %v2689
        %v2728 = vunpack.c.h.b16 %v2690
        %v2729 = vunpack.c.l.b16 %v2691
        %v2730 = vunpack.c.l.b16 %v2692
        %v2731 = vunpack.c.h.b16 %v2691
        %v2732 = vunpack.c.h.b16 %v2692
        %v2733 = vunpack.c.l.b16 %v2693
        %v2734 = vunpack.c.l.b16 %v2694
        %v2735 = vunpack.c.h.b16 %v2693
        %v2736 = vunpack.c.h.b16 %v2694
        %v2737 = vunpack.c.l.b16 %v2695
        %v2738 = vunpack.c.l.b16 %v2696
        %v2739 = vunpack.c.h.b16 %v2695
        %v2740 = vunpack.c.h.b16 %v2696
        %v2741 = vunpack.c.l.b16 %v2697
        %v2742 = vunpack.c.l.b16 %v2698
        %v2743 = vunpack.c.h.b16 %v2697
        %v2744 = vunpack.c.h.b16 %v2698
        %v2745 = vunpack.c.l.b16 %v2699
        %v2746 = vunpack.c.l.b16 %v2700
        %v2747 = vunpack.c.h.b16 %v2699
        %v2748 = vunpack.c.h.b16 %v2700
        %v2749 = vpack.c.b16 %v2718, %v2717
        %v2750 = vpack.c.b16 %v2720, %v2719
        %v2751 = vpack.c.b16 %v2722, %v2721
        %v2752 = vpack.c.b16 %v2724, %v2723
        %v2753 = vpack.c.b16 %v2726, %v2725
        %v2754 = vpack.c.b16 %v2728, %v2727
        %v2755 = vpack.c.b16 %v2730, %v2729
        %v2756 = vpack.c.b16 %v2732, %v2731
        %v2757 = vpack.c.b16 %v2734, %v2733
        %v2758 = vpack.c.b16 %v2736, %v2735
        %v2759 = vpack.c.b16 %v2738, %v2737
        %v2760 = vpack.c.b16 %v2740, %v2739
        %v2761 = vpack.c.b16 %v2742, %v2741
        %v2762 = vpack.c.b16 %v2744, %v2743
        %v2763 = vpack.c.b16 %v2746, %v2745
        %v2764 = vpack.c.b16 %v2748, %v2747
        %s2781 = scalar_lea.vmem %s244, 256 [#allocation2]
        %2782 = vst [vmem:[%s2781] sm:$0xff] %v2749
        %2783 = vst [vmem:[%s2781 + $0x8] sm:$0xff] %v2750
        %2784 = vst [vmem:[%s2781 + $0x10] sm:$0xff] %v2751
        %2785 = vst [vmem:[%s2781 + $0x18] sm:$0xff] %v2752
        %2786 = vst [vmem:[%s2781 + $0x20] sm:$0xff] %v2753
        %2787 = vst [vmem:[%s2781 + $0x28] sm:$0xff] %v2754
        %2788 = vst [vmem:[%s2781 + $0x30] sm:$0xff] %v2755
        %2789 = vst [vmem:[%s2781 + $0x38] sm:$0xff] %v2756
        %2790 = vst [vmem:[%s2781 + $0x40] sm:$0xff] %v2757
        %2791 = vst [vmem:[%s2781 + $0x48] sm:$0xff] %v2758
        %2792 = vst [vmem:[%s2781 + $0x50] sm:$0xff] %v2759
        %2793 = vst [vmem:[%s2781 + $0x58] sm:$0xff] %v2760
        %2794 = vst [vmem:[%s2781 + $0x60] sm:$0xff] %v2761
        %2795 = vst [vmem:[%s2781 + $0x68] sm:$0xff] %v2762
        %2796 = vst [vmem:[%s2781 + $0x70] sm:$0xff] %v2763
        %2797 = vst [vmem:[%s2781 + $0x78] sm:$0xff] %v2764
        %v2798 = vld [vmem:[%s0] sm:$0xf]
        %v2799 = vld [vmem:[%s0 + $0x4] sm:$0xf]
        %v2800 = vld [vmem:[%s0 + $0x8] sm:$0xf]
        %v2801 = vld [vmem:[%s0 + $0xc] sm:$0xf]
        %v2802 = vld [vmem:[%s0 + $0x10] sm:$0xf]
        %v2803 = vld [vmem:[%s0 + $0x14] sm:$0xf]
        %v2804 = vld [vmem:[%s0 + $0x18] sm:$0xf]
        %v2805 = vld [vmem:[%s0 + $0x1c] sm:$0xf]
        %v2806 = vld [vmem:[%s0 + $0x20] sm:$0xf]
        %v2807 = vld [vmem:[%s0 + $0x24] sm:$0xf]
        %v2808 = vld [vmem:[%s0 + $0x28] sm:$0xf]
        %v2809 = vld [vmem:[%s0 + $0x2c] sm:$0xf]
        %v2810 = vld [vmem:[%s0 + $0x30] sm:$0xf]
        %v2811 = vld [vmem:[%s0 + $0x34] sm:$0xf]
        %v2812 = vld [vmem:[%s0 + $0x38] sm:$0xf]
        %v2813 = vld [vmem:[%s0 + $0x3c] sm:$0xf]
        %v2814 = vld [vmem:[%s0 + $0x40] sm:$0xf]
        %v2815 = vld [vmem:[%s0 + $0x44] sm:$0xf]
        %v2816 = vld [vmem:[%s0 + $0x48] sm:$0xf]
        %v2817 = vld [vmem:[%s0 + $0x4c] sm:$0xf]
        %v2818 = vld [vmem:[%s0 + $0x50] sm:$0xf]
        %v2819 = vld [vmem:[%s0 + $0x54] sm:$0xf]
        %v2820 = vld [vmem:[%s0 + $0x58] sm:$0xf]
        %v2821 = vld [vmem:[%s0 + $0x5c] sm:$0xf]
        %v2822 = vld [vmem:[%s0 + $0x60] sm:$0xf]
        %v2823 = vld [vmem:[%s0 + $0x64] sm:$0xf]
        %v2824 = vld [vmem:[%s0 + $0x68] sm:$0xf]
        %v2825 = vld [vmem:[%s0 + $0x6c] sm:$0xf]
        %v2826 = vld [vmem:[%s0 + $0x70] sm:$0xf]
        %v2827 = vld [vmem:[%s0 + $0x74] sm:$0xf]
        %v2828 = vld [vmem:[%s0 + $0x78] sm:$0xf]
        %v2829 = vld [vmem:[%s0 + $0x7c] sm:$0xf]
        %v2862 = vunpack.c.l.b16 %v2798
        %v2863 = vunpack.c.l.b16 %v2799
        %v2864 = vunpack.c.l.b16 %v2800
        %v2865 = vunpack.c.l.b16 %v2801
        %v2866 = vunpack.c.l.b16 %v2802
        %v2867 = vunpack.c.l.b16 %v2803
        %v2868 = vunpack.c.l.b16 %v2804
        %v2869 = vunpack.c.l.b16 %v2805
        %v2870 = vunpack.c.l.b16 %v2806
        %v2871 = vunpack.c.l.b16 %v2807
        %v2872 = vunpack.c.l.b16 %v2808
        %v2873 = vunpack.c.l.b16 %v2809
        %v2874 = vunpack.c.l.b16 %v2810
        %v2875 = vunpack.c.l.b16 %v2811
        %v2876 = vunpack.c.l.b16 %v2812
        %v2877 = vunpack.c.l.b16 %v2813
        %v2878 = vunpack.c.l.b16 %v2814
        %v2879 = vunpack.c.l.b16 %v2815
        %v2880 = vunpack.c.l.b16 %v2816
        %v2881 = vunpack.c.l.b16 %v2817
        %v2882 = vunpack.c.l.b16 %v2818
        %v2883 = vunpack.c.l.b16 %v2819
        %v2884 = vunpack.c.l.b16 %v2820
        %v2885 = vunpack.c.l.b16 %v2821
        %v2886 = vunpack.c.l.b16 %v2822
        %v2887 = vunpack.c.l.b16 %v2823
        %v2888 = vunpack.c.l.b16 %v2824
        %v2889 = vunpack.c.l.b16 %v2825
        %v2890 = vunpack.c.l.b16 %v2826
        %v2891 = vunpack.c.l.b16 %v2827
        %v2892 = vunpack.c.l.b16 %v2828
        %v2893 = vunpack.c.l.b16 %v2829
        %v2894 = vpack.c.b16 %v2863, %v2862
        %v2895 = vpack.c.b16 %v2865, %v2864
        %v2896 = vpack.c.b16 %v2867, %v2866
        %v2897 = vpack.c.b16 %v2869, %v2868
        %v2898 = vpack.c.b16 %v2871, %v2870
        %v2899 = vpack.c.b16 %v2873, %v2872
        %v2900 = vpack.c.b16 %v2875, %v2874
        %v2901 = vpack.c.b16 %v2877, %v2876
        %v2902 = vpack.c.b16 %v2879, %v2878
        %v2903 = vpack.c.b16 %v2881, %v2880
        %v2904 = vpack.c.b16 %v2883, %v2882
        %v2905 = vpack.c.b16 %v2885, %v2884
        %v2906 = vpack.c.b16 %v2887, %v2886
        %v2907 = vpack.c.b16 %v2889, %v2888
        %v2908 = vpack.c.b16 %v2891, %v2890
        %v2909 = vpack.c.b16 %v2893, %v2892
        %2910 = vrot.lane.b32.xlu0 %v2894, 96
        %v2911 = vpop.permute.xlu0 %2910
        %2912 = vrot.lane.b32.xlu0 %v2895, 96
        %v2913 = vpop.permute.xlu0 %2912
        %2914 = vrot.lane.b32.xlu0 %v2896, 96
        %v2915 = vpop.permute.xlu0 %2914
        %2916 = vrot.lane.b32.xlu0 %v2897, 96
        %v2917 = vpop.permute.xlu0 %2916
        %2918 = vrot.lane.b32.xlu0 %v2898, 96
        %v2919 = vpop.permute.xlu0 %2918
        %2920 = vrot.lane.b32.xlu0 %v2899, 96
        %v2921 = vpop.permute.xlu0 %2920
        %2922 = vrot.lane.b32.xlu0 %v2900, 96
        %v2923 = vpop.permute.xlu0 %2922
        %2924 = vrot.lane.b32.xlu0 %v2901, 96
        %v2925 = vpop.permute.xlu0 %2924
        %2926 = vrot.lane.b32.xlu0 %v2902, 96
        %v2927 = vpop.permute.xlu0 %2926
        %2928 = vrot.lane.b32.xlu0 %v2903, 96
        %v2929 = vpop.permute.xlu0 %2928
        %2930 = vrot.lane.b32.xlu0 %v2904, 96
        %v2931 = vpop.permute.xlu0 %2930
        %2932 = vrot.lane.b32.xlu0 %v2905, 96
        %v2933 = vpop.permute.xlu0 %2932
        %2934 = vrot.lane.b32.xlu0 %v2906, 96
        %v2935 = vpop.permute.xlu0 %2934
        %2936 = vrot.lane.b32.xlu0 %v2907, 96
        %v2937 = vpop.permute.xlu0 %2936
        %2938 = vrot.lane.b32.xlu0 %v2908, 96
        %v2939 = vpop.permute.xlu0 %2938
        %2940 = vrot.lane.b32.xlu0 %v2909, 96
        %v2941 = vpop.permute.xlu0 %2940
        %2958 = vmatprep.subr.bf16.mxu0 0
        %2959 = vmatpush1.bf16.msra.mxu0 %v2911
        %2960 = vmatprep.subr.bf16.mxu0 0
        %2961 = vmatpush1.bf16.msra.mxu0 %v2913
        %2962 = vmatprep.subr.bf16.mxu0 0
        %2963 = vmatpush1.bf16.msra.mxu0 %v2915
        %2964 = vmatprep.subr.bf16.mxu0 0
        %2965 = vmatpush1.bf16.msra.mxu0 %v2917
        %2966 = vmatprep.subr.bf16.mxu0 0
        %2967 = vmatpush1.bf16.msra.mxu0 %v2919
        %2968 = vmatprep.subr.bf16.mxu0 0
        %2969 = vmatpush1.bf16.msra.mxu0 %v2921
        %2970 = vmatprep.subr.bf16.mxu0 0
        %2971 = vmatpush1.bf16.msra.mxu0 %v2923
        %2972 = vmatprep.subr.bf16.mxu0 0
        %2973 = vmatpush1.bf16.msra.mxu0 %v2925
        %2974 = vmatprep.subr.bf16.mxu0 0
        %2975 = vmatpush1.bf16.msra.mxu0 %v2927
        %2976 = vmatprep.subr.bf16.mxu0 0
        %2977 = vmatpush1.bf16.msra.mxu0 %v2929
        %2978 = vmatprep.subr.bf16.mxu0 0
        %2979 = vmatpush1.bf16.msra.mxu0 %v2931
        %2980 = vmatprep.subr.bf16.mxu0 0
        %2981 = vmatpush1.bf16.msra.mxu0 %v2933
        %2982 = vmatprep.subr.bf16.mxu0 0
        %2983 = vmatpush1.bf16.msra.mxu0 %v2935
        %2984 = vmatprep.subr.bf16.mxu0 0
        %2985 = vmatpush1.bf16.msra.mxu0 %v2937
        %2986 = vmatprep.subr.bf16.mxu0 0
        %2987 = vmatpush1.bf16.msra.mxu0 %v2939
        %2988 = vmatprep.subr.bf16.mxu0 0
        %2989 = vmatpush1.bf16.msra.mxu0 %v2941
        %2990 = vmatprep.mubr.bf16.mxu0 %v2686
        %2991 = vmatmul.mubr.bf16.gmra.mrb[0].mxu0 %v2685
        %v2992 = vpop.f32.mrb[0].mxu0
        %v2993 = vadd.f32 0.0, %v2992
        %v2994 = vpop.f32.mrb[0].mxu0
        %v2995 = vpop.f32.mrb[0].mxu0
        %v2996 = vadd.f32 0.0, %v2995
        %v2997 = vpop.f32.mrb[0].mxu0
        %2998 = vmatprep.mubr.bf16.mxu0 %v2688
        %2999 = vmatmul.mubr.bf16.gmra.mrb[0].mxu0 %v2687
        %v3000 = vpop.f32.mrb[0].mxu0
        %v3001 = vadd.f32 0.0, %v3000
        %v3002 = vpop.f32.mrb[0].mxu0
        %v3003 = vpop.f32.mrb[0].mxu0
        %v3004 = vadd.f32 0.0, %v3003
        %v3005 = vpop.f32.mrb[0].mxu0
        %3006 = vmatprep.mubr.bf16.mxu0 %v2690
        %3007 = vmatmul.mubr.bf16.gmra.mrb[0].mxu0 %v2689
        %v3008 = vpop.f32.mrb[0].mxu0
        %v3009 = vadd.f32 0.0, %v3008
        %v3010 = vpop.f32.mrb[0].mxu0
        %v3011 = vpop.f32.mrb[0].mxu0
        %v3012 = vadd.f32 0.0, %v3011
        %v3013 = vpop.f32.mrb[0].mxu0
        %3014 = vmatprep.mubr.bf16.mxu0 %v2692
        %3015 = vmatmul.mubr.bf16.gmra.mrb[0].mxu0 %v2691
        %v3016 = vpop.f32.mrb[0].mxu0
        %v3017 = vadd.f32 0.0, %v3016
        %v3018 = vpop.f32.mrb[0].mxu0
        %v3019 = vpop.f32.mrb[0].mxu0
        %v3020 = vadd.f32 0.0, %v3019
        %v3021 = vpop.f32.mrb[0].mxu0
        %3022 = vmatprep.mubr.bf16.mxu0 %v2694
        %3023 = vmatmul.mubr.bf16.gmra.mrb[0].mxu0 %v2693
        %v3024 = vpop.f32.mrb[0].mxu0
        %v3025 = vadd.f32 0.0, %v3024
        %v3026 = vpop.f32.mrb[0].mxu0
        %v3027 = vpop.f32.mrb[0].mxu0
        %v3028 = vadd.f32 0.0, %v3027
        %v3029 = vpop.f32.mrb[0].mxu0
        %3030 = vmatprep.mubr.bf16.mxu0 %v2696
        %3031 = vmatmul.mubr.bf16.gmra.mrb[0].mxu0 %v2695
        %v3032 = vpop.f32.mrb[0].mxu0
        %v3033 = vadd.f32 0.0, %v3032
        %v3034 = vpop.f32.mrb[0].mxu0
        %v3035 = vpop.f32.mrb[0].mxu0
        %v3036 = vadd.f32 0.0, %v3035
        %v3037 = vpop.f32.mrb[0].mxu0
        %3038 = vmatprep.mubr.bf16.mxu0 %v2698
        %3039 = vmatmul.mubr.bf16.gmra.mrb[0].mxu0 %v2697
        %v3040 = vpop.f32.mrb[0].mxu0
        %v3041 = vadd.f32 0.0, %v3040
        %v3042 = vpop.f32.mrb[0].mxu0
        %v3043 = vpop.f32.mrb[0].mxu0
        %v3044 = vadd.f32 0.0, %v3043
        %v3045 = vpop.f32.mrb[0].mxu0
        %3046 = vmatprep.mubr.bf16.mxu0 %v2700
        %3047 = vmatmul.mubr.bf16.gmra.mrb[0].mxu0 %v2699
        %v3048 = vpop.f32.mrb[0].mxu0
        %v3049 = vadd.f32 0.0, %v3048
        %v3050 = vpop.f32.mrb[0].mxu0
        %v3051 = vpop.f32.mrb[0].mxu0
        %v3052 = vadd.f32 0.0, %v3051
        %v3053 = vpop.f32.mrb[0].mxu0
        %3054 = vdwg.mxu0
        %s3055 = scalar_lea.vmem %s1, 3
        %v3056 = vld [vmem:[%s3055] ss:$4 sm:$0x3]
        %v3057 = vld [vmem:[%s249] sm:$0xff]
        %v3058 = vld [vmem:[%s249 + $0x8] sm:$0xff]
        %v3059 = vld [vmem:[%s249 + $0x10] sm:$0xff]
        %v3060 = vld [vmem:[%s249 + $0x18] sm:$0xff]
        %v3061 = vld [vmem:[%s249 + $0x20] sm:$0xff]
        %v3062 = vld [vmem:[%s249 + $0x28] sm:$0xff]
        %v3063 = vld [vmem:[%s249 + $0x30] sm:$0xff]
        %v3064 = vld [vmem:[%s249 + $0x38] sm:$0xff]
        %v3065 = vld [vmem:[%s249 + $0x40] sm:$0xff]
        %v3066 = vld [vmem:[%s249 + $0x48] sm:$0xff]
        %v3067 = vld [vmem:[%s249 + $0x50] sm:$0xff]
        %v3068 = vld [vmem:[%s249 + $0x58] sm:$0xff]
        %v3069 = vld [vmem:[%s249 + $0x60] sm:$0xff]
        %v3070 = vld [vmem:[%s249 + $0x68] sm:$0xff]
        %v3071 = vld [vmem:[%s249 + $0x70] sm:$0xff]
        %v3072 = vld [vmem:[%s249 + $0x78] sm:$0xff]
        %v3074 = vlaneseq
        %v3075 = vshrl.u32 %v3074, 7
        %v3076 = vsub.s32 0, %v3075
        %v3077 = vrot.slane %v3056, %v3076
        %v3078 = vlaneseq
        %v3079 = vshrl.u32 %v3078, 7
        %v3080 = vsub.s32 1, %v3079
        %v3081 = vrot.slane %v3056, %v3080
        %3085 = vset.pattern.permute.xlu0 3
        %3086 = vperm.xlu0 %3085, %v3057
        %v3087 = vpop.permute.xlu0 %3086
        %3090 = vset.pattern.permute.xlu0 3
        %3091 = vperm.xlu0 %3090, %v3058
        %v3092 = vpop.permute.xlu0 %3091
        %3095 = vset.pattern.permute.xlu0 3
        %3096 = vperm.xlu0 %3095, %v3059
        %v3097 = vpop.permute.xlu0 %3096
        %3100 = vset.pattern.permute.xlu0 3
        %3101 = vperm.xlu0 %3100, %v3060
        %v3102 = vpop.permute.xlu0 %3101
        %3105 = vset.pattern.permute.xlu0 3
        %3106 = vperm.xlu0 %3105, %v3061
        %v3107 = vpop.permute.xlu0 %3106
        %3110 = vset.pattern.permute.xlu0 3
        %3111 = vperm.xlu0 %3110, %v3062
        %v3112 = vpop.permute.xlu0 %3111
        %3115 = vset.pattern.permute.xlu0 3
        %3116 = vperm.xlu0 %3115, %v3063
        %v3117 = vpop.permute.xlu0 %3116
        %3120 = vset.pattern.permute.xlu0 3
        %3121 = vperm.xlu0 %3120, %v3064
        %v3122 = vpop.permute.xlu0 %3121
        %3125 = vset.pattern.permute.xlu0 3
        %3126 = vperm.xlu0 %3125, %v3065
        %v3127 = vpop.permute.xlu0 %3126
        %3130 = vset.pattern.permute.xlu0 3
        %3131 = vperm.xlu0 %3130, %v3066
        %v3132 = vpop.permute.xlu0 %3131
        %3135 = vset.pattern.permute.xlu0 3
        %3136 = vperm.xlu0 %3135, %v3067
        %v3137 = vpop.permute.xlu0 %3136
        %3140 = vset.pattern.permute.xlu0 3
        %3141 = vperm.xlu0 %3140, %v3068
        %v3142 = vpop.permute.xlu0 %3141
        %3145 = vset.pattern.permute.xlu0 3
        %3146 = vperm.xlu0 %3145, %v3069
        %v3147 = vpop.permute.xlu0 %3146
        %3150 = vset.pattern.permute.xlu0 3
        %3151 = vperm.xlu0 %3150, %v3070
        %v3152 = vpop.permute.xlu0 %3151
        %3155 = vset.pattern.permute.xlu0 3
        %3156 = vperm.xlu0 %3155, %v3071
        %v3157 = vpop.permute.xlu0 %3156
        %3160 = vset.pattern.permute.xlu0 3
        %3161 = vperm.xlu0 %3160, %v3072
        %v3162 = vpop.permute.xlu0 %3161
        %v3164 = vadd.f32 %v3077, %v3087
        %v3165 = vadd.f32 %v3081, %v3087
        %v3166 = vadd.f32 %v3077, %v3092
        %v3167 = vadd.f32 %v3081, %v3092
        %v3168 = vadd.f32 %v3077, %v3097
        %v3169 = vadd.f32 %v3081, %v3097
        %v3170 = vadd.f32 %v3077, %v3102
        %v3171 = vadd.f32 %v3081, %v3102
        %v3172 = vadd.f32 %v3077, %v3107
        %v3173 = vadd.f32 %v3081, %v3107
        %v3174 = vadd.f32 %v3077, %v3112
        %v3175 = vadd.f32 %v3081, %v3112
        %v3176 = vadd.f32 %v3077, %v3117
        %v3177 = vadd.f32 %v3081, %v3117
        %v3178 = vadd.f32 %v3077, %v3122
        %v3179 = vadd.f32 %v3081, %v3122
        %v3180 = vadd.f32 %v3077, %v3127
        %v3181 = vadd.f32 %v3081, %v3127
        %v3182 = vadd.f32 %v3077, %v3132
        %v3183 = vadd.f32 %v3081, %v3132
        %v3184 = vadd.f32 %v3077, %v3137
        %v3185 = vadd.f32 %v3081, %v3137
        %v3186 = vadd.f32 %v3077, %v3142
        %v3187 = vadd.f32 %v3081, %v3142
        %v3188 = vadd.f32 %v3077, %v3147
        %v3189 = vadd.f32 %v3081, %v3147
        %v3190 = vadd.f32 %v3077, %v3152
        %v3191 = vadd.f32 %v3081, %v3152
        %v3192 = vadd.f32 %v3077, %v3157
        %v3193 = vadd.f32 %v3081, %v3157
        %v3194 = vadd.f32 %v3077, %v3162
        %v3195 = vadd.f32 %v3081, %v3162
        %vm3196 = vcmp.ge.f32.partialorder %v3164, 0.0
        %vm3197 = vcmp.ge.f32.partialorder %v3165, 0.0
        %vm3198 = vcmp.ge.f32.partialorder %v3166, 0.0
        %vm3199 = vcmp.ge.f32.partialorder %v3167, 0.0
        %vm3200 = vcmp.ge.f32.partialorder %v3168, 0.0
        %vm3201 = vcmp.ge.f32.partialorder %v3169, 0.0
        %vm3202 = vcmp.ge.f32.partialorder %v3170, 0.0
        %vm3203 = vcmp.ge.f32.partialorder %v3171, 0.0
        %vm3204 = vcmp.ge.f32.partialorder %v3172, 0.0
        %vm3205 = vcmp.ge.f32.partialorder %v3173, 0.0
        %vm3206 = vcmp.ge.f32.partialorder %v3174, 0.0
        %vm3207 = vcmp.ge.f32.partialorder %v3175, 0.0
        %vm3208 = vcmp.ge.f32.partialorder %v3176, 0.0
        %vm3209 = vcmp.ge.f32.partialorder %v3177, 0.0
        %vm3210 = vcmp.ge.f32.partialorder %v3178, 0.0
        %vm3211 = vcmp.ge.f32.partialorder %v3179, 0.0
        %vm3212 = vcmp.ge.f32.partialorder %v3180, 0.0
        %vm3213 = vcmp.ge.f32.partialorder %v3181, 0.0
        %vm3214 = vcmp.ge.f32.partialorder %v3182, 0.0
        %vm3215 = vcmp.ge.f32.partialorder %v3183, 0.0
        %vm3216 = vcmp.ge.f32.partialorder %v3184, 0.0
        %vm3217 = vcmp.ge.f32.partialorder %v3185, 0.0
        %vm3218 = vcmp.ge.f32.partialorder %v3186, 0.0
        %vm3219 = vcmp.ge.f32.partialorder %v3187, 0.0
        %vm3220 = vcmp.ge.f32.partialorder %v3188, 0.0
        %vm3221 = vcmp.ge.f32.partialorder %v3189, 0.0
        %vm3222 = vcmp.ge.f32.partialorder %v3190, 0.0
        %vm3223 = vcmp.ge.f32.partialorder %v3191, 0.0
        %vm3224 = vcmp.ge.f32.partialorder %v3192, 0.0
        %vm3225 = vcmp.ge.f32.partialorder %v3193, 0.0
        %vm3226 = vcmp.ge.f32.partialorder %v3194, 0.0
        %vm3227 = vcmp.ge.f32.partialorder %v3195, 0.0
        %v3228 = vmul.f32 %v3164, 0.2
        %v3229 = vmul.f32 %v3165, 0.2
        %v3230 = vmul.f32 %v3166, 0.2
        %v3231 = vmul.f32 %v3167, 0.2
        %v3232 = vmul.f32 %v3168, 0.2
        %v3233 = vmul.f32 %v3169, 0.2
        %v3234 = vmul.f32 %v3170, 0.2
        %v3235 = vmul.f32 %v3171, 0.2
        %v3236 = vmul.f32 %v3172, 0.2
        %v3237 = vmul.f32 %v3173, 0.2
        %v3238 = vmul.f32 %v3174, 0.2
        %v3239 = vmul.f32 %v3175, 0.2
        %v3240 = vmul.f32 %v3176, 0.2
        %v3241 = vmul.f32 %v3177, 0.2
        %v3242 = vmul.f32 %v3178, 0.2
        %v3243 = vmul.f32 %v3179, 0.2
        %v3244 = vmul.f32 %v3180, 0.2
        %v3245 = vmul.f32 %v3181, 0.2
        %v3246 = vmul.f32 %v3182, 0.2
        %v3247 = vmul.f32 %v3183, 0.2
        %v3248 = vmul.f32 %v3184, 0.2
        %v3249 = vmul.f32 %v3185, 0.2
        %v3250 = vmul.f32 %v3186, 0.2
        %v3251 = vmul.f32 %v3187, 0.2
        %v3252 = vmul.f32 %v3188, 0.2
        %v3253 = vmul.f32 %v3189, 0.2
        %v3254 = vmul.f32 %v3190, 0.2
        %v3255 = vmul.f32 %v3191, 0.2
        %v3256 = vmul.f32 %v3192, 0.2
        %v3257 = vmul.f32 %v3193, 0.2
        %v3258 = vmul.f32 %v3194, 0.2
        %v3259 = vmul.f32 %v3195, 0.2
        %v3260 = vsel %vm3196, %v3164, %v3228
        %v3261 = vsel %vm3197, %v3165, %v3229
        %v3262 = vsel %vm3198, %v3166, %v3230
        %v3263 = vsel %vm3199, %v3167, %v3231
        %v3264 = vsel %vm3200, %v3168, %v3232
        %v3265 = vsel %vm3201, %v3169, %v3233
        %v3266 = vsel %vm3202, %v3170, %v3234
        %v3267 = vsel %vm3203, %v3171, %v3235
        %v3268 = vsel %vm3204, %v3172, %v3236
        %v3269 = vsel %vm3205, %v3173, %v3237
        %v3270 = vsel %vm3206, %v3174, %v3238
        %v3271 = vsel %vm3207, %v3175, %v3239
        %v3272 = vsel %vm3208, %v3176, %v3240
        %v3273 = vsel %vm3209, %v3177, %v3241
        %v3274 = vsel %vm3210, %v3178, %v3242
        %v3275 = vsel %vm3211, %v3179, %v3243
        %v3276 = vsel %vm3212, %v3180, %v3244
        %v3277 = vsel %vm3213, %v3181, %v3245
        %v3278 = vsel %vm3214, %v3182, %v3246
        %v3279 = vsel %vm3215, %v3183, %v3247
        %v3280 = vsel %vm3216, %v3184, %v3248
        %v3281 = vsel %vm3217, %v3185, %v3249
        %v3282 = vsel %vm3218, %v3186, %v3250
        %v3283 = vsel %vm3219, %v3187, %v3251
        %v3284 = vsel %vm3220, %v3188, %v3252
        %v3285 = vsel %vm3221, %v3189, %v3253
        %v3286 = vsel %vm3222, %v3190, %v3254
        %v3287 = vsel %vm3223, %v3191, %v3255
        %v3288 = vsel %vm3224, %v3192, %v3256
        %v3289 = vsel %vm3225, %v3193, %v3257
        %v3290 = vsel %vm3226, %v3194, %v3258
        %v3291 = vsel %vm3227, %v3195, %v3259
        %v3292 = vsel %vm656, %v3260, -1e+30
        %v3293 = vsel %vm657, %v3261, -1e+30
        %v3294 = vsel %vm658, %v3262, -1e+30
        %v3295 = vsel %vm659, %v3263, -1e+30
        %v3296 = vsel %vm660, %v3264, -1e+30
        %v3297 = vsel %vm661, %v3265, -1e+30
        %v3298 = vsel %vm662, %v3266, -1e+30
        %v3299 = vsel %vm663, %v3267, -1e+30
        %v3300 = vsel %vm664, %v3268, -1e+30
        %v3301 = vsel %vm665, %v3269, -1e+30
        %v3302 = vsel %vm666, %v3270, -1e+30
        %v3303 = vsel %vm667, %v3271, -1e+30
        %v3304 = vsel %vm668, %v3272, -1e+30
        %v3305 = vsel %vm669, %v3273, -1e+30
        %v3306 = vsel %vm670, %v3274, -1e+30
        %v3307 = vsel %vm671, %v3275, -1e+30
        %v3308 = vsel %vm672, %v3276, -1e+30
        %v3309 = vsel %vm673, %v3277, -1e+30
        %v3310 = vsel %vm674, %v3278, -1e+30
        %v3311 = vsel %vm675, %v3279, -1e+30
        %v3312 = vsel %vm676, %v3280, -1e+30
        %v3313 = vsel %vm677, %v3281, -1e+30
        %v3314 = vsel %vm678, %v3282, -1e+30
        %v3315 = vsel %vm679, %v3283, -1e+30
        %v3316 = vsel %vm680, %v3284, -1e+30
        %v3317 = vsel %vm681, %v3285, -1e+30
        %v3318 = vsel %vm682, %v3286, -1e+30
        %v3319 = vsel %vm683, %v3287, -1e+30
        %v3320 = vsel %vm684, %v3288, -1e+30
        %v3321 = vsel %vm685, %v3289, -1e+30
        %v3322 = vsel %vm686, %v3290, -1e+30
        %v3323 = vsel %vm687, %v3291, -1e+30
        %v3324 = vmax.f32 %v3292, %v3293
        %3325 = vmax.xlane.f32.xlu0 %v3324
        %v3326 = vpop.xlane.xlu0 %3325
        %v3327 = vmax.f32 %v3294, %v3295
        %3328 = vmax.xlane.f32.xlu0 %v3327
        %v3329 = vpop.xlane.xlu0 %3328
        %v3330 = vmax.f32 %v3296, %v3297
        %3331 = vmax.xlane.f32.xlu0 %v3330
        %v3332 = vpop.xlane.xlu0 %3331
        %v3333 = vmax.f32 %v3298, %v3299
        %3334 = vmax.xlane.f32.xlu0 %v3333
        %v3335 = vpop.xlane.xlu0 %3334
        %v3336 = vmax.f32 %v3300, %v3301
        %3337 = vmax.xlane.f32.xlu0 %v3336
        %v3338 = vpop.xlane.xlu0 %3337
        %v3339 = vmax.f32 %v3302, %v3303
        %3340 = vmax.xlane.f32.xlu0 %v3339
        %v3341 = vpop.xlane.xlu0 %3340
        %v3342 = vmax.f32 %v3304, %v3305
        %3343 = vmax.xlane.f32.xlu0 %v3342
        %v3344 = vpop.xlane.xlu0 %3343
        %v3345 = vmax.f32 %v3306, %v3307
        %3346 = vmax.xlane.f32.xlu0 %v3345
        %v3347 = vpop.xlane.xlu0 %3346
        %v3348 = vmax.f32 %v3308, %v3309
        %3349 = vmax.xlane.f32.xlu0 %v3348
        %v3350 = vpop.xlane.xlu0 %3349
        %v3351 = vmax.f32 %v3310, %v3311
        %3352 = vmax.xlane.f32.xlu0 %v3351
        %v3353 = vpop.xlane.xlu0 %3352
        %v3354 = vmax.f32 %v3312, %v3313
        %3355 = vmax.xlane.f32.xlu0 %v3354
        %v3356 = vpop.xlane.xlu0 %3355
        %v3357 = vmax.f32 %v3314, %v3315
        %3358 = vmax.xlane.f32.xlu0 %v3357
        %v3359 = vpop.xlane.xlu0 %3358
        %v3360 = vmax.f32 %v3316, %v3317
        %3361 = vmax.xlane.f32.xlu0 %v3360
        %v3362 = vpop.xlane.xlu0 %3361
        %v3363 = vmax.f32 %v3318, %v3319
        %3364 = vmax.xlane.f32.xlu0 %v3363
        %v3365 = vpop.xlane.xlu0 %3364
        %v3366 = vmax.f32 %v3320, %v3321
        %3367 = vmax.xlane.f32.xlu0 %v3366
        %v3368 = vpop.xlane.xlu0 %3367
        %v3369 = vmax.f32 %v3322, %v3323
        %3370 = vmax.xlane.f32.xlu0 %v3369
        %v3371 = vpop.xlane.xlu0 %3370
        %v3372 = vsub.f32 %v3292, %v3326
        %v3373 = vsub.f32 %v3293, %v3326
        %v3374 = vsub.f32 %v3294, %v3329
        %v3375 = vsub.f32 %v3295, %v3329
        %v3376 = vsub.f32 %v3296, %v3332
        %v3377 = vsub.f32 %v3297, %v3332
        %v3378 = vsub.f32 %v3298, %v3335
        %v3379 = vsub.f32 %v3299, %v3335
        %v3380 = vsub.f32 %v3300, %v3338
        %v3381 = vsub.f32 %v3301, %v3338
        %v3382 = vsub.f32 %v3302, %v3341
        %v3383 = vsub.f32 %v3303, %v3341
        %v3384 = vsub.f32 %v3304, %v3344
        %v3385 = vsub.f32 %v3305, %v3344
        %v3386 = vsub.f32 %v3306, %v3347
        %v3387 = vsub.f32 %v3307, %v3347
        %v3388 = vsub.f32 %v3308, %v3350
        %v3389 = vsub.f32 %v3309, %v3350
        %v3390 = vsub.f32 %v3310, %v3353
        %v3391 = vsub.f32 %v3311, %v3353
        %v3392 = vsub.f32 %v3312, %v3356
        %v3393 = vsub.f32 %v3313, %v3356
        %v3394 = vsub.f32 %v3314, %v3359
        %v3395 = vsub.f32 %v3315, %v3359
        %v3396 = vsub.f32 %v3316, %v3362
        %v3397 = vsub.f32 %v3317, %v3362
        %v3398 = vsub.f32 %v3318, %v3365
        %v3399 = vsub.f32 %v3319, %v3365
        %v3400 = vsub.f32 %v3320, %v3368
        %v3401 = vsub.f32 %v3321, %v3368
        %v3402 = vsub.f32 %v3322, %v3371
        %v3403 = vsub.f32 %v3323, %v3371
        %v3404 = vmul.f32 %v3372, 1.442695
        %v3405 = vpow.pop %v3404
        %v3406 = vmul.f32 %v3373, 1.442695
        %v3407 = vpow.pop %v3406
        %v3408 = vmul.f32 %v3374, 1.442695
        %v3409 = vpow.pop %v3408
        %v3410 = vmul.f32 %v3375, 1.442695
        %v3411 = vpow.pop %v3410
        %v3412 = vmul.f32 %v3376, 1.442695
        %v3413 = vpow.pop %v3412
        %v3414 = vmul.f32 %v3377, 1.442695
        %v3415 = vpow.pop %v3414
        %v3416 = vmul.f32 %v3378, 1.442695
        %v3417 = vpow.pop %v3416
        %v3418 = vmul.f32 %v3379, 1.442695
        %v3419 = vpow.pop %v3418
        %v3420 = vmul.f32 %v3380, 1.442695
        %v3421 = vpow.pop %v3420
        %v3422 = vmul.f32 %v3381, 1.442695
        %v3423 = vpow.pop %v3422
        %v3424 = vmul.f32 %v3382, 1.442695
        %v3425 = vpow.pop %v3424
        %v3426 = vmul.f32 %v3383, 1.442695
        %v3427 = vpow.pop %v3426
        %v3428 = vmul.f32 %v3384, 1.442695
        %v3429 = vpow.pop %v3428
        %v3430 = vmul.f32 %v3385, 1.442695
        %v3431 = vpow.pop %v3430
        %v3432 = vmul.f32 %v3386, 1.442695
        %v3433 = vpow.pop %v3432
        %v3434 = vmul.f32 %v3387, 1.442695
        %v3435 = vpow.pop %v3434
        %v3436 = vmul.f32 %v3388, 1.442695
        %v3437 = vpow.pop %v3436
        %v3438 = vmul.f32 %v3389, 1.442695
        %v3439 = vpow.pop %v3438
        %v3440 = vmul.f32 %v3390, 1.442695
        %v3441 = vpow.pop %v3440
        %v3442 = vmul.f32 %v3391, 1.442695
        %v3443 = vpow.pop %v3442
        %v3444 = vmul.f32 %v3392, 1.442695
        %v3445 = vpow.pop %v3444
        %v3446 = vmul.f32 %v3393, 1.442695
        %v3447 = vpow.pop %v3446
        %v3448 = vmul.f32 %v3394, 1.442695
        %v3449 = vpow.pop %v3448
        %v3450 = vmul.f32 %v3395, 1.442695
        %v3451 = vpow.pop %v3450
        %v3452 = vmul.f32 %v3396, 1.442695
        %v3453 = vpow.pop %v3452
        %v3454 = vmul.f32 %v3397, 1.442695
        %v3455 = vpow.pop %v3454
        %v3456 = vmul.f32 %v3398, 1.442695
        %v3457 = vpow.pop %v3456
        %v3458 = vmul.f32 %v3399, 1.442695
        %v3459 = vpow.pop %v3458
        %v3460 = vmul.f32 %v3400, 1.442695
        %v3461 = vpow.pop %v3460
        %v3462 = vmul.f32 %v3401, 1.442695
        %v3463 = vpow.pop %v3462
        %v3464 = vmul.f32 %v3402, 1.442695
        %v3465 = vpow.pop %v3464
        %v3466 = vmul.f32 %v3403, 1.442695
        %v3467 = vpow.pop %v3466
        %v3468 = vadd.f32 %v3405, %v3407
        %3469 = vadd.xlane.f32.xlu0 %v3468
        %v3470 = vpop.xlane.xlu0 %3469
        %v3471 = vadd.f32 %v3409, %v3411
        %3472 = vadd.xlane.f32.xlu0 %v3471
        %v3473 = vpop.xlane.xlu0 %3472
        %v3474 = vadd.f32 %v3413, %v3415
        %3475 = vadd.xlane.f32.xlu0 %v3474
        %v3476 = vpop.xlane.xlu0 %3475
        %v3477 = vadd.f32 %v3417, %v3419
        %3478 = vadd.xlane.f32.xlu0 %v3477
        %v3479 = vpop.xlane.xlu0 %3478
        %v3480 = vadd.f32 %v3421, %v3423
        %3481 = vadd.xlane.f32.xlu0 %v3480
        %v3482 = vpop.xlane.xlu0 %3481
        %v3483 = vadd.f32 %v3425, %v3427
        %3484 = vadd.xlane.f32.xlu0 %v3483
        %v3485 = vpop.xlane.xlu0 %3484
        %v3486 = vadd.f32 %v3429, %v3431
        %3487 = vadd.xlane.f32.xlu0 %v3486
        %v3488 = vpop.xlane.xlu0 %3487
        %v3489 = vadd.f32 %v3433, %v3435
        %3490 = vadd.xlane.f32.xlu0 %v3489
        %v3491 = vpop.xlane.xlu0 %3490
        %v3492 = vadd.f32 %v3437, %v3439
        %3493 = vadd.xlane.f32.xlu0 %v3492
        %v3494 = vpop.xlane.xlu0 %3493
        %v3495 = vadd.f32 %v3441, %v3443
        %3496 = vadd.xlane.f32.xlu0 %v3495
        %v3497 = vpop.xlane.xlu0 %3496
        %v3498 = vadd.f32 %v3445, %v3447
        %3499 = vadd.xlane.f32.xlu0 %v3498
        %v3500 = vpop.xlane.xlu0 %3499
        %v3501 = vadd.f32 %v3449, %v3451
        %3502 = vadd.xlane.f32.xlu0 %v3501
        %v3503 = vpop.xlane.xlu0 %3502
        %v3504 = vadd.f32 %v3453, %v3455
        %3505 = vadd.xlane.f32.xlu0 %v3504
        %v3506 = vpop.xlane.xlu0 %3505
        %v3507 = vadd.f32 %v3457, %v3459
        %3508 = vadd.xlane.f32.xlu0 %v3507
        %v3509 = vpop.xlane.xlu0 %3508
        %v3510 = vadd.f32 %v3461, %v3463
        %3511 = vadd.xlane.f32.xlu0 %v3510
        %v3512 = vpop.xlane.xlu0 %3511
        %v3513 = vadd.f32 %v3465, %v3467
        %3514 = vadd.xlane.f32.xlu0 %v3513
        %v3515 = vpop.xlane.xlu0 %3514
        %v3516 = vrcp.pop %v3470
        %v3517 = vrcp.pop %v3473
        %v3518 = vrcp.pop %v3476
        %v3519 = vrcp.pop %v3479
        %v3520 = vrcp.pop %v3482
        %v3521 = vrcp.pop %v3485
        %v3522 = vrcp.pop %v3488
        %v3523 = vrcp.pop %v3491
        %v3524 = vrcp.pop %v3494
        %v3525 = vrcp.pop %v3497
        %v3526 = vrcp.pop %v3500
        %v3527 = vrcp.pop %v3503
        %v3528 = vrcp.pop %v3506
        %v3529 = vrcp.pop %v3509
        %v3530 = vrcp.pop %v3512
        %v3531 = vrcp.pop %v3515
        %v3532 = vmul.f32 %v3405, %v3516
        %v3533 = vmul.f32 %v3407, %v3516
        %v3534 = vmul.f32 %v3409, %v3517
        %v3535 = vmul.f32 %v3411, %v3517
        %v3536 = vmul.f32 %v3413, %v3518
        %v3537 = vmul.f32 %v3415, %v3518
        %v3538 = vmul.f32 %v3417, %v3519
        %v3539 = vmul.f32 %v3419, %v3519
        %v3540 = vmul.f32 %v3421, %v3520
        %v3541 = vmul.f32 %v3423, %v3520
        %v3542 = vmul.f32 %v3425, %v3521
        %v3543 = vmul.f32 %v3427, %v3521
        %v3544 = vmul.f32 %v3429, %v3522
        %v3545 = vmul.f32 %v3431, %v3522
        %v3546 = vmul.f32 %v3433, %v3523
        %v3547 = vmul.f32 %v3435, %v3523
        %v3548 = vmul.f32 %v3437, %v3524
        %v3549 = vmul.f32 %v3439, %v3524
        %v3550 = vmul.f32 %v3441, %v3525
        %v3551 = vmul.f32 %v3443, %v3525
        %v3552 = vmul.f32 %v3445, %v3526
        %v3553 = vmul.f32 %v3447, %v3526
        %v3554 = vmul.f32 %v3449, %v3527
        %v3555 = vmul.f32 %v3451, %v3527
        %v3556 = vmul.f32 %v3453, %v3528
        %v3557 = vmul.f32 %v3455, %v3528
        %v3558 = vmul.f32 %v3457, %v3529
        %v3559 = vmul.f32 %v3459, %v3529
        %v3560 = vmul.f32 %v3461, %v3530
        %v3561 = vmul.f32 %v3463, %v3530
        %v3562 = vmul.f32 %v3465, %v3531
        %v3563 = vmul.f32 %v3467, %v3531
        %v3564 = vpack.c.bf16 %v3534, %v3532
        %v3565 = vpack.c.bf16 %v3535, %v3533
        %v3566 = vpack.c.bf16 %v3538, %v3536
        %v3567 = vpack.c.bf16 %v3539, %v3537
        %v3568 = vpack.c.bf16 %v3542, %v3540
        %v3569 = vpack.c.bf16 %v3543, %v3541
        %v3570 = vpack.c.bf16 %v3546, %v3544
        %v3571 = vpack.c.bf16 %v3547, %v3545
        %v3572 = vpack.c.bf16 %v3550, %v3548
        %v3573 = vpack.c.bf16 %v3551, %v3549
        %v3574 = vpack.c.bf16 %v3554, %v3552
        %v3575 = vpack.c.bf16 %v3555, %v3553
        %v3576 = vpack.c.bf16 %v3558, %v3556
        %v3577 = vpack.c.bf16 %v3559, %v3557
        %v3578 = vpack.c.bf16 %v3562, %v3560
        %v3579 = vpack.c.bf16 %v3563, %v3561
        %v3596 = vunpack.c.l.b16 %v3564
        %v3597 = vunpack.c.l.b16 %v3565
        %v3598 = vunpack.c.h.b16 %v3564
        %v3599 = vunpack.c.h.b16 %v3565
        %v3600 = vunpack.c.l.b16 %v3566
        %v3601 = vunpack.c.l.b16 %v3567
        %v3602 = vunpack.c.h.b16 %v3566
        %v3603 = vunpack.c.h.b16 %v3567
        %v3604 = vunpack.c.l.b16 %v3568
        %v3605 = vunpack.c.l.b16 %v3569
        %v3606 = vunpack.c.h.b16 %v3568
        %v3607 = vunpack.c.h.b16 %v3569
        %v3608 = vunpack.c.l.b16 %v3570
        %v3609 = vunpack.c.l.b16 %v3571
        %v3610 = vunpack.c.h.b16 %v3570
        %v3611 = vunpack.c.h.b16 %v3571
        %v3612 = vunpack.c.l.b16 %v3572
        %v3613 = vunpack.c.l.b16 %v3573
        %v3614 = vunpack.c.h.b16 %v3572
        %v3615 = vunpack.c.h.b16 %v3573
        %v3616 = vunpack.c.l.b16 %v3574
        %v3617 = vunpack.c.l.b16 %v3575
        %v3618 = vunpack.c.h.b16 %v3574
        %v3619 = vunpack.c.h.b16 %v3575
        %v3620 = vunpack.c.l.b16 %v3576
        %v3621 = vunpack.c.l.b16 %v3577
        %v3622 = vunpack.c.h.b16 %v3576
        %v3623 = vunpack.c.h.b16 %v3577
        %v3624 = vunpack.c.l.b16 %v3578
        %v3625 = vunpack.c.l.b16 %v3579
        %v3626 = vunpack.c.h.b16 %v3578
        %v3627 = vunpack.c.h.b16 %v3579
        %v3628 = vpack.c.b16 %v3597, %v3596
        %v3629 = vpack.c.b16 %v3599, %v3598
        %v3630 = vpack.c.b16 %v3601, %v3600
        %v3631 = vpack.c.b16 %v3603, %v3602
        %v3632 = vpack.c.b16 %v3605, %v3604
        %v3633 = vpack.c.b16 %v3607, %v3606
        %v3634 = vpack.c.b16 %v3609, %v3608
        %v3635 = vpack.c.b16 %v3611, %v3610
        %v3636 = vpack.c.b16 %v3613, %v3612
        %v3637 = vpack.c.b16 %v3615, %v3614
        %v3638 = vpack.c.b16 %v3617, %v3616
        %v3639 = vpack.c.b16 %v3619, %v3618
        %v3640 = vpack.c.b16 %v3621, %v3620
        %v3641 = vpack.c.b16 %v3623, %v3622
        %v3642 = vpack.c.b16 %v3625, %v3624
        %v3643 = vpack.c.b16 %v3627, %v3626
        %s3660 = scalar_lea.vmem %s244, 384 [#allocation2]
        %3661 = vst [vmem:[%s3660] sm:$0xff] %v3628
        %3662 = vst [vmem:[%s3660 + $0x8] sm:$0xff] %v3629
        %3663 = vst [vmem:[%s3660 + $0x10] sm:$0xff] %v3630
        %3664 = vst [vmem:[%s3660 + $0x18] sm:$0xff] %v3631
        %3665 = vst [vmem:[%s3660 + $0x20] sm:$0xff] %v3632
        %3666 = vst [vmem:[%s3660 + $0x28] sm:$0xff] %v3633
        %3667 = vst [vmem:[%s3660 + $0x30] sm:$0xff] %v3634
        %3668 = vst [vmem:[%s3660 + $0x38] sm:$0xff] %v3635
        %3669 = vst [vmem:[%s3660 + $0x40] sm:$0xff] %v3636
        %3670 = vst [vmem:[%s3660 + $0x48] sm:$0xff] %v3637
        %3671 = vst [vmem:[%s3660 + $0x50] sm:$0xff] %v3638
        %3672 = vst [vmem:[%s3660 + $0x58] sm:$0xff] %v3639
        %3673 = vst [vmem:[%s3660 + $0x60] sm:$0xff] %v3640
        %3674 = vst [vmem:[%s3660 + $0x68] sm:$0xff] %v3641
        %3675 = vst [vmem:[%s3660 + $0x70] sm:$0xff] %v3642
        %3676 = vst [vmem:[%s3660 + $0x78] sm:$0xff] %v3643
        %v3677 = vld [vmem:[%s0] sm:$0xf]
        %v3678 = vld [vmem:[%s0 + $0x4] sm:$0xf]
        %v3679 = vld [vmem:[%s0 + $0x8] sm:$0xf]
        %v3680 = vld [vmem:[%s0 + $0xc] sm:$0xf]
        %v3681 = vld [vmem:[%s0 + $0x10] sm:$0xf]
        %v3682 = vld [vmem:[%s0 + $0x14] sm:$0xf]
        %v3683 = vld [vmem:[%s0 + $0x18] sm:$0xf]
        %v3684 = vld [vmem:[%s0 + $0x1c] sm:$0xf]
        %v3685 = vld [vmem:[%s0 + $0x20] sm:$0xf]
        %v3686 = vld [vmem:[%s0 + $0x24] sm:$0xf]
        %v3687 = vld [vmem:[%s0 + $0x28] sm:$0xf]
        %v3688 = vld [vmem:[%s0 + $0x2c] sm:$0xf]
        %v3689 = vld [vmem:[%s0 + $0x30] sm:$0xf]
        %v3690 = vld [vmem:[%s0 + $0x34] sm:$0xf]
        %v3691 = vld [vmem:[%s0 + $0x38] sm:$0xf]
        %v3692 = vld [vmem:[%s0 + $0x3c] sm:$0xf]
        %v3693 = vld [vmem:[%s0 + $0x40] sm:$0xf]
        %v3694 = vld [vmem:[%s0 + $0x44] sm:$0xf]
        %v3695 = vld [vmem:[%s0 + $0x48] sm:$0xf]
        %v3696 = vld [vmem:[%s0 + $0x4c] sm:$0xf]
        %v3697 = vld [vmem:[%s0 + $0x50] sm:$0xf]
        %v3698 = vld [vmem:[%s0 + $0x54] sm:$0xf]
        %v3699 = vld [vmem:[%s0 + $0x58] sm:$0xf]
        %v3700 = vld [vmem:[%s0 + $0x5c] sm:$0xf]
        %v3701 = vld [vmem:[%s0 + $0x60] sm:$0xf]
        %v3702 = vld [vmem:[%s0 + $0x64] sm:$0xf]
        %v3703 = vld [vmem:[%s0 + $0x68] sm:$0xf]
        %v3704 = vld [vmem:[%s0 + $0x6c] sm:$0xf]
        %v3705 = vld [vmem:[%s0 + $0x70] sm:$0xf]
        %v3706 = vld [vmem:[%s0 + $0x74] sm:$0xf]
        %v3707 = vld [vmem:[%s0 + $0x78] sm:$0xf]
        %v3708 = vld [vmem:[%s0 + $0x7c] sm:$0xf]
        %v3741 = vunpack.c.l.b16 %v3677
        %v3742 = vunpack.c.l.b16 %v3678
        %v3743 = vunpack.c.l.b16 %v3679
        %v3744 = vunpack.c.l.b16 %v3680
        %v3745 = vunpack.c.l.b16 %v3681
        %v3746 = vunpack.c.l.b16 %v3682
        %v3747 = vunpack.c.l.b16 %v3683
        %v3748 = vunpack.c.l.b16 %v3684
        %v3749 = vunpack.c.l.b16 %v3685
        %v3750 = vunpack.c.l.b16 %v3686
        %v3751 = vunpack.c.l.b16 %v3687
        %v3752 = vunpack.c.l.b16 %v3688
        %v3753 = vunpack.c.l.b16 %v3689
        %v3754 = vunpack.c.l.b16 %v3690
        %v3755 = vunpack.c.l.b16 %v3691
        %v3756 = vunpack.c.l.b16 %v3692
        %v3757 = vunpack.c.l.b16 %v3693
        %v3758 = vunpack.c.l.b16 %v3694
        %v3759 = vunpack.c.l.b16 %v3695
        %v3760 = vunpack.c.l.b16 %v3696
        %v3761 = vunpack.c.l.b16 %v3697
        %v3762 = vunpack.c.l.b16 %v3698
        %v3763 = vunpack.c.l.b16 %v3699
        %v3764 = vunpack.c.l.b16 %v3700
        %v3765 = vunpack.c.l.b16 %v3701
        %v3766 = vunpack.c.l.b16 %v3702
        %v3767 = vunpack.c.l.b16 %v3703
        %v3768 = vunpack.c.l.b16 %v3704
        %v3769 = vunpack.c.l.b16 %v3705
        %v3770 = vunpack.c.l.b16 %v3706
        %v3771 = vunpack.c.l.b16 %v3707
        %v3772 = vunpack.c.l.b16 %v3708
        %v3773 = vpack.c.b16 %v3742, %v3741
        %v3774 = vpack.c.b16 %v3744, %v3743
        %v3775 = vpack.c.b16 %v3746, %v3745
        %v3776 = vpack.c.b16 %v3748, %v3747
        %v3777 = vpack.c.b16 %v3750, %v3749
        %v3778 = vpack.c.b16 %v3752, %v3751
        %v3779 = vpack.c.b16 %v3754, %v3753
        %v3780 = vpack.c.b16 %v3756, %v3755
        %v3781 = vpack.c.b16 %v3758, %v3757
        %v3782 = vpack.c.b16 %v3760, %v3759
        %v3783 = vpack.c.b16 %v3762, %v3761
        %v3784 = vpack.c.b16 %v3764, %v3763
        %v3785 = vpack.c.b16 %v3766, %v3765
        %v3786 = vpack.c.b16 %v3768, %v3767
        %v3787 = vpack.c.b16 %v3770, %v3769
        %v3788 = vpack.c.b16 %v3772, %v3771
        %3789 = vrot.lane.b32.xlu0 %v3773, 80
        %v3790 = vpop.permute.xlu0 %3789
        %3791 = vrot.lane.b32.xlu0 %v3774, 80
        %v3792 = vpop.permute.xlu0 %3791
        %3793 = vrot.lane.b32.xlu0 %v3775, 80
        %v3794 = vpop.permute.xlu0 %3793
        %3795 = vrot.lane.b32.xlu0 %v3776, 80
        %v3796 = vpop.permute.xlu0 %3795
        %3797 = vrot.lane.b32.xlu0 %v3777, 80
        %v3798 = vpop.permute.xlu0 %3797
        %3799 = vrot.lane.b32.xlu0 %v3778, 80
        %v3800 = vpop.permute.xlu0 %3799
        %3801 = vrot.lane.b32.xlu0 %v3779, 80
        %v3802 = vpop.permute.xlu0 %3801
        %3803 = vrot.lane.b32.xlu0 %v3780, 80
        %v3804 = vpop.permute.xlu0 %3803
        %3805 = vrot.lane.b32.xlu0 %v3781, 80
        %v3806 = vpop.permute.xlu0 %3805
        %3807 = vrot.lane.b32.xlu0 %v3782, 80
        %v3808 = vpop.permute.xlu0 %3807
        %3809 = vrot.lane.b32.xlu0 %v3783, 80
        %v3810 = vpop.permute.xlu0 %3809
        %3811 = vrot.lane.b32.xlu0 %v3784, 80
        %v3812 = vpop.permute.xlu0 %3811
        %3813 = vrot.lane.b32.xlu0 %v3785, 80
        %v3814 = vpop.permute.xlu0 %3813
        %3815 = vrot.lane.b32.xlu0 %v3786, 80
        %v3816 = vpop.permute.xlu0 %3815
        %3817 = vrot.lane.b32.xlu0 %v3787, 80
        %v3818 = vpop.permute.xlu0 %3817
        %3819 = vrot.lane.b32.xlu0 %v3788, 80
        %v3820 = vpop.permute.xlu0 %3819
        %3837 = vmatprep.subr.bf16.mxu0 0
        %3838 = vmatpush1.bf16.msra.mxu0 %v3790
        %3839 = vmatprep.subr.bf16.mxu0 0
        %3840 = vmatpush1.bf16.msra.mxu0 %v3792
        %3841 = vmatprep.subr.bf16.mxu0 0
        %3842 = vmatpush1.bf16.msra.mxu0 %v3794
        %3843 = vmatprep.subr.bf16.mxu0 0
        %3844 = vmatpush1.bf16.msra.mxu0 %v3796
        %3845 = vmatprep.subr.bf16.mxu0 0
        %3846 = vmatpush1.bf16.msra.mxu0 %v3798
        %3847 = vmatprep.subr.bf16.mxu0 0
        %3848 = vmatpush1.bf16.msra.mxu0 %v3800
        %3849 = vmatprep.subr.bf16.mxu0 0
        %3850 = vmatpush1.bf16.msra.mxu0 %v3802
        %3851 = vmatprep.subr.bf16.mxu0 0
        %3852 = vmatpush1.bf16.msra.mxu0 %v3804
        %3853 = vmatprep.subr.bf16.mxu0 0
        %3854 = vmatpush1.bf16.msra.mxu0 %v3806
        %3855 = vmatprep.subr.bf16.mxu0 0
        %3856 = vmatpush1.bf16.msra.mxu0 %v3808
        %3857 = vmatprep.subr.bf16.mxu0 0
        %3858 = vmatpush1.bf16.msra.mxu0 %v3810
        %3859 = vmatprep.subr.bf16.mxu0 0
        %3860 = vmatpush1.bf16.msra.mxu0 %v3812
        %3861 = vmatprep.subr.bf16.mxu0 0
        %3862 = vmatpush1.bf16.msra.mxu0 %v3814
        %3863 = vmatprep.subr.bf16.mxu0 0
        %3864 = vmatpush1.bf16.msra.mxu0 %v3816
        %3865 = vmatprep.subr.bf16.mxu0 0
        %3866 = vmatpush1.bf16.msra.mxu0 %v3818
        %3867 = vmatprep.subr.bf16.mxu0 0
        %3868 = vmatpush1.bf16.msra.mxu0 %v3820
        %3869 = vmatprep.mubr.bf16.mxu0 %v3565
        %3870 = vmatmul.mubr.bf16.gmra.mrb[0].mxu0 %v3564
        %v3871 = vpop.f32.mrb[0].mxu0
        %v3872 = vadd.f32 0.0, %v3871
        %v3873 = vpop.f32.mrb[0].mxu0
        %v3874 = vpop.f32.mrb[0].mxu0
        %v3875 = vadd.f32 0.0, %v3874
        %v3876 = vpop.f32.mrb[0].mxu0
        %3877 = vmatprep.mubr.bf16.mxu0 %v3567
        %3878 = vmatmul.mubr.bf16.gmra.mrb[0].mxu0 %v3566
        %v3879 = vpop.f32.mrb[0].mxu0
        %v3880 = vadd.f32 0.0, %v3879
        %v3881 = vpop.f32.mrb[0].mxu0
        %v3882 = vpop.f32.mrb[0].mxu0
        %v3883 = vadd.f32 0.0, %v3882
        %v3884 = vpop.f32.mrb[0].mxu0
        %3885 = vmatprep.mubr.bf16.mxu0 %v3569
        %3886 = vmatmul.mubr.bf16.gmra.mrb[0].mxu0 %v3568
        %v3887 = vpop.f32.mrb[0].mxu0
        %v3888 = vadd.f32 0.0, %v3887
        %v3889 = vpop.f32.mrb[0].mxu0
        %v3890 = vpop.f32.mrb[0].mxu0
        %v3891 = vadd.f32 0.0, %v3890
        %v3892 = vpop.f32.mrb[0].mxu0
        %3893 = vmatprep.mubr.bf16.mxu0 %v3571
        %3894 = vmatmul.mubr.bf16.gmra.mrb[0].mxu0 %v3570
        %v3895 = vpop.f32.mrb[0].mxu0
        %v3896 = vadd.f32 0.0, %v3895
        %v3897 = vpop.f32.mrb[0].mxu0
        %v3898 = vpop.f32.mrb[0].mxu0
        %v3899 = vadd.f32 0.0, %v3898
        %v3900 = vpop.f32.mrb[0].mxu0
        %3901 = vmatprep.mubr.bf16.mxu0 %v3573
        %3902 = vmatmul.mubr.bf16.gmra.mrb[0].mxu0 %v3572
        %v3903 = vpop.f32.mrb[0].mxu0
        %v3904 = vadd.f32 0.0, %v3903
        %v3905 = vpop.f32.mrb[0].mxu0
        %v3906 = vpop.f32.mrb[0].mxu0
        %v3907 = vadd.f32 0.0, %v3906
        %v3908 = vpop.f32.mrb[0].mxu0
        %3909 = vmatprep.mubr.bf16.mxu0 %v3575
        %3910 = vmatmul.mubr.bf16.gmra.mrb[0].mxu0 %v3574
        %v3911 = vpop.f32.mrb[0].mxu0
        %v3912 = vadd.f32 0.0, %v3911
        %v3913 = vpop.f32.mrb[0].mxu0
        %v3914 = vpop.f32.mrb[0].mxu0
        %v3915 = vadd.f32 0.0, %v3914
        %v3916 = vpop.f32.mrb[0].mxu0
        %3917 = vmatprep.mubr.bf16.mxu0 %v3577
        %3918 = vmatmul.mubr.bf16.gmra.mrb[0].mxu0 %v3576
        %v3919 = vpop.f32.mrb[0].mxu0
        %v3920 = vadd.f32 0.0, %v3919
        %v3921 = vpop.f32.mrb[0].mxu0
        %v3922 = vpop.f32.mrb[0].mxu0
        %v3923 = vadd.f32 0.0, %v3922
        %v3924 = vpop.f32.mrb[0].mxu0
        %3925 = vmatprep.mubr.bf16.mxu0 %v3579
        %3926 = vmatmul.mubr.bf16.gmra.mrb[0].mxu0 %v3578
        %v3927 = vpop.f32.mrb[0].mxu0
        %v3928 = vadd.f32 0.0, %v3927
        %v3929 = vpop.f32.mrb[0].mxu0
        %v3930 = vpop.f32.mrb[0].mxu0
        %v3931 = vadd.f32 0.0, %v3930
        %v3932 = vpop.f32.mrb[0].mxu0
        %3933 = vdwg.mxu0
        %3950 = vrot.lane.b32.xlu0 %v2114, 16
        %v3951 = vpop.permute.xlu0 %3950
        %3952 = vrot.lane.b32.xlu0 %v2117, 16
        %v3953 = vpop.permute.xlu0 %3952
        %3954 = vrot.lane.b32.xlu0 %v2122, 16
        %v3955 = vpop.permute.xlu0 %3954
        %3956 = vrot.lane.b32.xlu0 %v2125, 16
        %v3957 = vpop.permute.xlu0 %3956
        %3958 = vrot.lane.b32.xlu0 %v2130, 16
        %v3959 = vpop.permute.xlu0 %3958
        %3960 = vrot.lane.b32.xlu0 %v2133, 16
        %v3961 = vpop.permute.xlu0 %3960
        %3962 = vrot.lane.b32.xlu0 %v2138, 16
        %v3963 = vpop.permute.xlu0 %3962
        %3964 = vrot.lane.b32.xlu0 %v2141, 16
        %v3965 = vpop.permute.xlu0 %3964
        %3966 = vrot.lane.b32.xlu0 %v2146, 16
        %v3967 = vpop.permute.xlu0 %3966
        %3968 = vrot.lane.b32.xlu0 %v2149, 16
        %v3969 = vpop.permute.xlu0 %3968
        %3970 = vrot.lane.b32.xlu0 %v2154, 16
        %v3971 = vpop.permute.xlu0 %3970
        %3972 = vrot.lane.b32.xlu0 %v2157, 16
        %v3973 = vpop.permute.xlu0 %3972
        %3974 = vrot.lane.b32.xlu0 %v2162, 16
        %v3975 = vpop.permute.xlu0 %3974
        %3976 = vrot.lane.b32.xlu0 %v2165, 16
        %v3977 = vpop.permute.xlu0 %3976
        %3978 = vrot.lane.b32.xlu0 %v2170, 16
        %v3979 = vpop.permute.xlu0 %3978
        %3980 = vrot.lane.b32.xlu0 %v2173, 16
        %v3981 = vpop.permute.xlu0 %3980
        %4014 = vrot.lane.b32.xlu0 %v2993, 32
        %v4015 = vpop.permute.xlu0 %4014
        %4016 = vrot.lane.b32.xlu0 %v2996, 32
        %v4017 = vpop.permute.xlu0 %4016
        %4018 = vrot.lane.b32.xlu0 %v3001, 32
        %v4019 = vpop.permute.xlu0 %4018
        %4020 = vrot.lane.b32.xlu0 %v3004, 32
        %v4021 = vpop.permute.xlu0 %4020
        %4022 = vrot.lane.b32.xlu0 %v3009, 32
        %v4023 = vpop.permute.xlu0 %4022
        %4024 = vrot.lane.b32.xlu0 %v3012, 32
        %v4025 = vpop.permute.xlu0 %4024
        %4026 = vrot.lane.b32.xlu0 %v3017, 32
        %v4027 = vpop.permute.xlu0 %4026
        %4028 = vrot.lane.b32.xlu0 %v3020, 32
        %v4029 = vpop.permute.xlu0 %4028
        %4030 = vrot.lane.b32.xlu0 %v3025, 32
        %v4031 = vpop.permute.xlu0 %4030
        %4032 = vrot.lane.b32.xlu0 %v3028, 32
        %v4033 = vpop.permute.xlu0 %4032
        %4034 = vrot.lane.b32.xlu0 %v3033, 32
        %v4035 = vpop.permute.xlu0 %4034
        %4036 = vrot.lane.b32.xlu0 %v3036, 32
        %v4037 = vpop.permute.xlu0 %4036
        %4038 = vrot.lane.b32.xlu0 %v3041, 32
        %v4039 = vpop.permute.xlu0 %4038
        %4040 = vrot.lane.b32.xlu0 %v3044, 32
        %v4041 = vpop.permute.xlu0 %4040
        %4042 = vrot.lane.b32.xlu0 %v3049, 32
        %v4043 = vpop.permute.xlu0 %4042
        %4044 = vrot.lane.b32.xlu0 %v3052, 32
        %v4045 = vpop.permute.xlu0 %4044
        %4078 = vrot.lane.b32.xlu0 %v3872, 48
        %v4079 = vpop.permute.xlu0 %4078
        %4080 = vrot.lane.b32.xlu0 %v3875, 48
        %v4081 = vpop.permute.xlu0 %4080
        %4082 = vrot.lane.b32.xlu0 %v3880, 48
        %v4083 = vpop.permute.xlu0 %4082
        %4084 = vrot.lane.b32.xlu0 %v3883, 48
        %v4085 = vpop.permute.xlu0 %4084
        %4086 = vrot.lane.b32.xlu0 %v3888, 48
        %v4087 = vpop.permute.xlu0 %4086
        %4088 = vrot.lane.b32.xlu0 %v3891, 48
        %v4089 = vpop.permute.xlu0 %4088
        %4090 = vrot.lane.b32.xlu0 %v3896, 48
        %v4091 = vpop.permute.xlu0 %4090
        %4092 = vrot.lane.b32.xlu0 %v3899, 48
        %v4093 = vpop.permute.xlu0 %4092
        %4094 = vrot.lane.b32.xlu0 %v3904, 48
        %v4095 = vpop.permute.xlu0 %4094
        %4096 = vrot.lane.b32.xlu0 %v3907, 48
        %v4097 = vpop.permute.xlu0 %4096
        %4098 = vrot.lane.b32.xlu0 %v3912, 48
        %v4099 = vpop.permute.xlu0 %4098
        %4100 = vrot.lane.b32.xlu0 %v3915, 48
        %v4101 = vpop.permute.xlu0 %4100
        %4102 = vrot.lane.b32.xlu0 %v3920, 48
        %v4103 = vpop.permute.xlu0 %4102
        %4104 = vrot.lane.b32.xlu0 %v3923, 48
        %v4105 = vpop.permute.xlu0 %4104
        %4106 = vrot.lane.b32.xlu0 %v3928, 48
        %v4107 = vpop.permute.xlu0 %4106
        %4108 = vrot.lane.b32.xlu0 %v3931, 48
        %v4109 = vpop.permute.xlu0 %4108
        %vm4126 = vcmask 130048
        %v4127 = vsel %vm4126, %v1235, %v3951
        %v4128 = vsel %vm4126, %v1238, %v3953
        %v4129 = vsel %vm4126, %v1243, %v3955
        %v4130 = vsel %vm4126, %v1246, %v3957
        %v4131 = vsel %vm4126, %v1251, %v3959
        %v4132 = vsel %vm4126, %v1254, %v3961
        %v4133 = vsel %vm4126, %v1259, %v3963
        %v4134 = vsel %vm4126, %v1262, %v3965
        %v4135 = vsel %vm4126, %v1267, %v3967
        %v4136 = vsel %vm4126, %v1270, %v3969
        %v4137 = vsel %vm4126, %v1275, %v3971
        %v4138 = vsel %vm4126, %v1278, %v3973
        %v4139 = vsel %vm4126, %v1283, %v3975
        %v4140 = vsel %vm4126, %v1286, %v3977
        %v4141 = vsel %vm4126, %v1291, %v3979
        %v4142 = vsel %vm4126, %v1294, %v3981
        %vm4143 = vcmask 261120
        %v4144 = vsel %vm4143, %v4127, %v4015
        %v4145 = vsel %vm4143, %v4128, %v4017
        %v4146 = vsel %vm4143, %v4129, %v4019
        %v4147 = vsel %vm4143, %v4130, %v4021
        %v4148 = vsel %vm4143, %v4131, %v4023
        %v4149 = vsel %vm4143, %v4132, %v4025
        %v4150 = vsel %vm4143, %v4133, %v4027
        %v4151 = vsel %vm4143, %v4134, %v4029
        %v4152 = vsel %vm4143, %v4135, %v4031
        %v4153 = vsel %vm4143, %v4136, %v4033
        %v4154 = vsel %vm4143, %v4137, %v4035
        %v4155 = vsel %vm4143, %v4138, %v4037
        %v4156 = vsel %vm4143, %v4139, %v4039
        %v4157 = vsel %vm4143, %v4140, %v4041
        %v4158 = vsel %vm4143, %v4141, %v4043
        %v4159 = vsel %vm4143, %v4142, %v4045
        %vm4160 = vcmask 392192
        %v4161 = vsel %vm4160, %v4144, %v4079
        %v4162 = vsel %vm4160, %v4145, %v4081
        %v4163 = vsel %vm4160, %v4146, %v4083
        %v4164 = vsel %vm4160, %v4147, %v4085
        %v4165 = vsel %vm4160, %v4148, %v4087
        %v4166 = vsel %vm4160, %v4149, %v4089
        %v4167 = vsel %vm4160, %v4150, %v4091
        %v4168 = vsel %vm4160, %v4151, %v4093
        %v4169 = vsel %vm4160, %v4152, %v4095
        %v4170 = vsel %vm4160, %v4153, %v4097
        %v4171 = vsel %vm4160, %v4154, %v4099
        %v4172 = vsel %vm4160, %v4155, %v4101
        %v4173 = vsel %vm4160, %v4156, %v4103
        %v4174 = vsel %vm4160, %v4157, %v4105
        %v4175 = vsel %vm4160, %v4158, %v4107
        %v4176 = vsel %vm4160, %v4159, %v4109
        %vm4177 = vcmask 523264
        %4178 = vst.msk [vmem:[%s262] sm:$0xff] %vm4177, %v4161
        %4179 = vst.msk [vmem:[%s262 + $0x8] sm:$0xff] %vm4177, %v4162
        %4180 = vst.msk [vmem:[%s262 + $0x10] sm:$0xff] %vm4177, %v4163
        %4181 = vst.msk [vmem:[%s262 + $0x18] sm:$0xff] %vm4177, %v4164
        %4182 = vst.msk [vmem:[%s262 + $0x20] sm:$0xff] %vm4177, %v4165
        %4183 = vst.msk [vmem:[%s262 + $0x28] sm:$0xff] %vm4177, %v4166
        %4184 = vst.msk [vmem:[%s262 + $0x30] sm:$0xff] %vm4177, %v4167
        %4185 = vst.msk [vmem:[%s262 + $0x38] sm:$0xff] %vm4177, %v4168
        %4186 = vst.msk [vmem:[%s262 + $0x40] sm:$0xff] %vm4177, %v4169
        %4187 = vst.msk [vmem:[%s262 + $0x48] sm:$0xff] %vm4177, %v4170
        %4188 = vst.msk [vmem:[%s262 + $0x50] sm:$0xff] %vm4177, %v4171
        %4189 = vst.msk [vmem:[%s262 + $0x58] sm:$0xff] %vm4177, %v4172
        %4190 = vst.msk [vmem:[%s262 + $0x60] sm:$0xff] %vm4177, %v4173
        %4191 = vst.msk [vmem:[%s262 + $0x68] sm:$0xff] %vm4177, %v4174
        %4192 = vst.msk [vmem:[%s262 + $0x70] sm:$0xff] %vm4177, %v4175
        %4193 = vst.msk [vmem:[%s262 + $0x78] sm:$0xff] %vm4177, %v4176
        %s4194 = smul.u32 16, %s20
        %p4195 = scmp.lt.s32.totalorder %s4194, 31
        %s4196 = scalar_select %p4195, %s4194, 31
        %s4197 = smul.addr %s4196, 8
        %s4198 = scalar_lea.vmem %s4, %s4197
        %s4199 = sand.u32 %s148, 1
        %s4200 = scalar_lea.sflag [#allocation3], %s4199
        %s4201 = sand.u32 %s148, 1
        %s4202 = smul.addr %s4201, 512
        %s4203 = scalar_lea.vmem [#allocation2], %s4202
        // Predicated region
        $region37: #{tpu_custom_call.1} parent=35 // pred_check
          %p4204 = pneg %p132
        $region38: #{tpu_custom_call.1} parent=35 // pred_check_branch
          %4206 = sbr.rel (%p4204) target = $region40
        $region39: #{tpu_custom_call.1} parent=35 // pred_region
          %s4207 = smul.u32 16, %s20
        $region40: #{tpu_custom_call.1} parent=35 // pred_fallthru
          _
        // Predicated region
        $region41: #{tpu_custom_call.1} parent=35 // pred_check
          %p4208 = pneg %p158
        $region42: #{tpu_custom_call.1} parent=35 // pred_check_branch
          %4210 = sbr.rel (%p4208) target = $region44
        $region43: #{tpu_custom_call.1} parent=35 // pred_region
          #allocation5 [shape = 'u32[6]{0}', space=smem, size = 0x18, scoped, tag = 'DMA stride descriptor']
          %s4211 = smul.u32 16, %s20
          %s4213 = ssub.s32 8192, 8192
          %4214 = vsyncadd %s4200, %s4213
          %s4215 = smul.addr %s4211, 2
          %s4216 = smul.addr %s4215, 64
          %s4217 = scalar_lea.hbm %s5, %s4216
          %s4219 = sshll.u32 1, 14
          %s4220 = sxor.u32 4294967295, %s4219
          %s4223 = sshll.u32 7, 18
          %s4224 = sxor.u32 4294967295, %s4223
          %s4225 = sand.u32 0, %s4224
          %s4227 = sor.u32 %s4225, 0
          %s4229 = sshll.u32 3, 24
          %s4230 = sxor.u32 4294967295, %s4229
          %s4231 = sand.u32 %s4227, %s4230
          %s4233 = sor.u32 %s4231, 0
          %s4234 = sshll.u32 %s4203, 4
          %s4235 = int_to_ptr.vmem [resolvable:$true] %s4234
          %4241 = sst [smem:[#allocation5]] 2048
          %s4242 = scalar_lea.smem [#allocation5], 1
          %4243 = sst [smem:[%s4242]] 4096
          %s4244 = scalar_lea.smem [#allocation5], 2
          %4245 = sst [smem:[%s4244]] 16
          %s4246 = scalar_lea.smem [#allocation5], 3
          %4247 = sst [smem:[%s4246]] 128
          %s4248 = scalar_lea.smem [#allocation5], 4
          %4249 = sst [smem:[%s4248]] 128
          %s4250 = scalar_lea.smem [#allocation5], 5
          %4251 = sst [smem:[%s4250]] 8
          %4253 = dma.general %s4235, 8192, %s4217, %s4200, [#allocation4], [#allocation5], %s4233, 0
        $region44: #{tpu_custom_call.1} parent=35 // pred_fallthru
          _
      $region36: #{tpu_custom_call.1} parent=5 // pred_fallthru
        _
      %p4254 = scmp.le.s32.totalorder 2, %s15
      // Predicated region
      $region45: #{tpu_custom_call.1} parent=5 // pred_check
        %p4255 = pneg %p4254
      $region46: #{tpu_custom_call.1} parent=5 // pred_check_branch
        %4257 = sbr.rel (%p4255) target = $region48
      $region47: #{tpu_custom_call.1} parent=5 // pred_region
        %s4258 = ssub.s32 %s15, 2
        // Predicated region
        $region49: #{tpu_custom_call.1} parent=47 // pred_check
          %p4259 = pneg %p138
        $region50: #{tpu_custom_call.1} parent=47 // pred_check_branch
          %4261 = sbr.rel (%p4259) target = $region52
        $region51: #{tpu_custom_call.1} parent=47 // pred_region
          %s4262 = smul.u32 16, %s21
          %p4263 = scmp.lt.s32.totalorder %s4262, 31
          %s4264 = scalar_select %p4263, %s4262, 31
          %s4265 = smul.addr %s4264, 8
          %s4266 = scalar_lea.vmem %s4, %s4265
        $region52: #{tpu_custom_call.1} parent=47 // pred_fallthru
          _
        // Predicated region
        $region53: #{tpu_custom_call.1} parent=47 // pred_check
          %p4267 = pneg %p164
        $region54: #{tpu_custom_call.1} parent=47 // pred_check_branch
          %4269 = sbr.rel (%p4267) target = $region56
        $region55: #{tpu_custom_call.1} parent=47 // pred_region
          %s4270 = sand.u32 %s149, 1
          %s4271 = scalar_lea.sflag [#allocation3], %s4270
          %s4272 = sand.u32 %s149, 1
          %s4273 = smul.addr %s4272, 512
          %s4274 = scalar_lea.vmem [#allocation2], %s4273
          %4275 = dma.done %s4271, 8192
        $region56: #{tpu_custom_call.1} parent=47 // pred_fallthru
          _
      $region48: #{tpu_custom_call.1} parent=5 // pred_fallthru
        _
    $region6: #{tpu_custom_call.1} parent=1 // loop_footer
      %s19 = sadd.s32 1, %s15
    $region7: #{tpu_custom_call.1} parent=1 // loop_footer_branch
      %14 = sbr.rel target = $region3
    $region8: #{tpu_custom_call.1} parent=1 // loop_exit
      _
    %4276 = vsyncpa [#allocation3], 1
    %s4277 = scalar_lea.sflag [#allocation3], 1
    %4278 = vsyncpa %s4277, 1

</llo_original>
